<compile_context>
chip_gen: v7x
topology: tpu7x:2x2x1
jax: 0.10.0
libtpu: 0.0.40
codegen_flags: <defaults>
</compile_context>

<pallas_src>
import math

import jax
import jax.numpy as jnp
from jax.experimental import pallas as pl
from jax.experimental.pallas import tpu as pltpu

# ---- scaled-down hyperparameters (module uses embed_dim=768; we use 128) ----
B = 2                                   # batch
IMG = 16                                # image H = W
PATCH = 8                               # patch size
N_PATCH = (IMG // PATCH) ** 2           # 4 patches
SV = N_PATCH + 1                        # 5 vision tokens (CLS + patches)
ST = 11                                 # text tokens
S = SV + ST                             # 16 fused tokens
BS = B * S                              # 32 tokens with batch folded in
D = 128                                 # embed_dim
H = 8                                   # num_heads
HD = D // H                             # head dim = 16
FFN = 4 * D                             # feed-forward dim = 512
LAYERS = 2
OUT = 101                               # output_dim
OUT_PAD = 128                           # lane-padded head output width
VOCAB = 64
EPS = 1e-5

# ---- packed-bias slab layout (all offsets are multiples of 128 lanes) ----
OFF_BQKV = 0                            # width 3*D = 384
OFF_BO = OFF_BQKV + 3 * D               # 384, width D
OFF_B1 = OFF_BO + D                     # 512, width FFN
OFF_B2 = OFF_B1 + FFN                   # 1024, width D
LAYER_BW = OFF_B2 + D                   # 1152 per layer
OFF_PB = LAYERS * LAYER_BW              # 2304, width D
OFF_OB = OFF_PB + D                     # 2432, width OUT_PAD
BIAS_TOTAL = OFF_OB + OUT_PAD           # 2560

# ---- packed per-layer D-row weight slab column layout ----
WD_QKV0 = 0                             # Wqkv: cols [0, 384)
WD_WO0 = 3 * D                          # Wo:   cols [384, 512)
WD_W10 = 4 * D                          # W1:   cols [512, 1024)
WD_COLS = 4 * D + FFN                   # 1024


# ----------------------------------------------------------------------------
# Fused Pallas kernel: 2 transformer encoder layers + classification head.
# ----------------------------------------------------------------------------
def _norm(h):
    """LayerNorm without affine (gamma/beta folded into downstream weights)."""
    mu = jnp.mean(h, axis=-1, keepdims=True)
    var = jnp.mean((h - mu) ** 2, axis=-1, keepdims=True)
    return (h - mu) * jax.lax.rsqrt(var + EPS)


def fused_forward_kernel(x_ref, mask_ref, wd_ref, w2_ref, wh_ref, b_ref, out_ref):
    f32 = jnp.float32
    bf16 = jnp.bfloat16

    x = x_ref[...]                        # (BS, D) f32 residual stream
    mask = mask_ref[...]                  # (BS, BS) f32 block-diagonal batch mask

    for l in range(LAYERS):               # static 2-iteration loop
        boff = l * LAYER_BW

        # ---- multi-head self-attention (pre-LN; LN affine folded into Wqkv) ----
        xn = _norm(x).astype(bf16)                                       # (BS, D)
        # single fused, lane-dense QKV matmul; 1/sqrt(HD) folded into Q cols
        qkv = (jnp.dot(xn, wd_ref[l, :, WD_QKV0:WD_QKV0 + 3 * D],
                       preferred_element_type=f32)
               + b_ref[:, boff + OFF_BQKV:boff + OFF_BQKV + 3 * D]
               ).astype(bf16)                                            # (BS, 3D) bf16

        o_heads = []
        for h in range(H):                 # static 8-head loop (K=HD matmuls)
            q_h = qkv[:, h * HD:(h + 1) * HD]                            # (BS, HD)
            k_h = qkv[:, D + h * HD:D + (h + 1) * HD]
            v_h = qkv[:, 2 * D + h * HD:2 * D + (h + 1) * HD]
            s = jax.lax.dot_general(q_h, k_h, (((1,), (1,)), ((), ())),
                                    preferred_element_type=f32) + mask   # (BS, BS)
            m = jnp.max(s, axis=-1, keepdims=True)
            e = jnp.exp(s - m)
            p = e * pl.reciprocal(jnp.sum(e, axis=-1, keepdims=True), approx=True)
            o_heads.append(jnp.dot(p.astype(bf16), v_h,
                                   preferred_element_type=f32))          # (BS, HD)

        # concat heads -> one full-depth Wo matmul (== per-head proj + sum)
        o_cat = jnp.concatenate(o_heads, axis=-1).astype(bf16)           # (BS, D)
        attn = (jnp.dot(o_cat, wd_ref[l, :, WD_WO0:WD_WO0 + D],
                        preferred_element_type=f32)
                + b_ref[:, boff + OFF_BO:boff + OFF_BO + D])
        x = x + attn

        # ---- feed-forward (pre-LN; LN affine folded into W1/b1), ReLU ----
        xn2 = _norm(x).astype(bf16)
        hid = (jnp.dot(xn2, wd_ref[l, :, WD_W10:WD_W10 + FFN],
                       preferred_element_type=f32)
               + b_ref[:, boff + OFF_B1:boff + OFF_B1 + FFN])            # (BS, FFN)
        hid = jnp.maximum(hid, 0.0).astype(bf16)
        x = x + (jnp.dot(hid, w2_ref[l], preferred_element_type=f32)
                 + b_ref[:, boff + OFF_B2:boff + OFF_B2 + D])

    # ---- classification head: proj1 -> GELU -> (dropout = identity) -> out ----
    # Computed for every token (32 rows are cheaper than a gather); the wrapper
    # picks out the CLS rows and slices the lane padding off.
    hproj = (jnp.dot(x.astype(bf16), wh_ref[:, 0:D], preferred_element_type=f32)
             + b_ref[:, OFF_PB:OFF_PB + D])
    hproj = jax.nn.gelu(hproj)             # TODO(synk): tanh-approx vs. exact erf
    out_ref[...] = (jnp.dot(hproj.astype(bf16), wh_ref[:, D:D + OUT_PAD],
                            preferred_element_type=f32)
                    + b_ref[:, OFF_OB:OFF_OB + OUT_PAD])                 # (BS, OUT_PAD)


def fused_foodmodel(x_flat, mask, pk):
    """x_flat: (BS, D) f32 -> (BS, OUT_PAD) f32 logits (lane padded)."""
    args = (x_flat, mask, pk["wd"], pk["w2"], pk["wh"], pk["biases"])
    vmem = pl.BlockSpec(memory_space=pltpu.MemorySpace.VMEM)
    return pl.pallas_call(
        fused_forward_kernel,
        out_shape=jax.ShapeDtypeStruct((BS, OUT_PAD), jnp.float32),
        in_specs=[vmem] * len(args),
        out_specs=vmem,
    )(*args)


# ----------------------------------------------------------------------------
# Deterministic parameter init (synthetic, no checkpoint loading).
# ----------------------------------------------------------------------------
def init_params(key):
    ks = iter(jax.random.split(key, 64))
    n = lambda shape, s=0.02: (s * jax.random.normal(next(ks), shape)).astype(jnp.float32)

    params = {
        # frozen stand-in "vision encoder" (patch embed + CLS + pos)
        "patch_w": n((3 * PATCH * PATCH, D)),
        "patch_b": n((D,)),
        "cls_tok": n((1, 1, D)),
        "v_pos":   n((SV, D)),
        # frozen stand-in "text encoder" (token/type/pos embeddings)
        "tok_emb": n((VOCAB, D)),
        "typ_emb": n((2, D)),
        "t_pos":   n((ST, D)),
        # head
        "proj_w": n((D, D)),   "proj_b": n((1, D)),
        "out_w":  n((D, OUT)), "out_b":  n((1, OUT)),
    }
    layers = []
    for _ in range(LAYERS):
        layers.append({
            "wq": n((D, D)), "bq": n((1, D)),
            "wk": n((D, D)), "bk": n((1, D)),
            "wv": n((D, D)), "bv": n((1, D)),
            "wo": n((D, D)), "bo": n((1, D)),
            "ln1_g": jnp.ones((1, D), jnp.float32), "ln1_b": jnp.zeros((1, D), jnp.float32),
            "ln2_g": jnp.ones((1, D), jnp.float32), "ln2_b": jnp.zeros((1, D), jnp.float32),
            "w1": n((D, FFN)), "b1": n((1, FFN)),
            "w2": n((FFN, D)), "b2": n((1, D)),
        })
    params["fusion"] = layers
    return params


def pack_params(p):
    """Rearrange logical weights into the fused-kernel layout (plain JAX, once).

    - Q/K/V fused into one (D, 3D) matrix per layer, head-major columns,
      1/sqrt(HD) folded into the Q slice.
    - LayerNorm affine folded into the downstream weights:
        ln1 (g,b) -> Wqkv/bqkv, ln2 (g,b) -> W1/b1.
    - Per-layer D-row weights concatenated into one (L, D, 1024) bf16 slab
      [Wqkv | Wo | W1]; W2 kept as its own (L, FFN, D) slab.
    - Head weights concatenated into one (D, 256) slab [Wproj | Wout(padded)].
    - All f32 biases concatenated into one (1, 2560) slab (128-aligned offsets).
    """
    bf16 = jnp.bfloat16
    scale = 1.0 / math.sqrt(HD)

    wd_layers, w2_layers, bias_parts = [], [], []
    for lyr in p["fusion"]:
        wqkv = jnp.concatenate([lyr["wq"] * scale, lyr["wk"], lyr["wv"]], axis=1)   # (D, 3D)
        bqkv = jnp.concatenate([lyr["bq"] * scale, lyr["bk"], lyr["bv"]], axis=1)   # (1, 3D)
        # fold LN1 affine: (x̂·g + b)·W = x̂·(diag(g)W) + b·W
        wqkv_f = wqkv * lyr["ln1_g"].reshape(D, 1)
        bqkv_f = bqkv + lyr["ln1_b"] @ wqkv
        # fold LN2 affine into W1/b1
        w1_f = lyr["w1"] * lyr["ln2_g"].reshape(D, 1)
        b1_f = lyr["b1"] + lyr["ln2_b"] @ lyr["w1"]

        wd_layers.append(jnp.concatenate([wqkv_f, lyr["wo"], w1_f], axis=1))        # (D, 1024)
        w2_layers.append(lyr["w2"])
        bias_parts += [bqkv_f, lyr["bo"], b1_f, lyr["b2"]]

    bias_parts += [p["proj_b"], jnp.pad(p["out_b"], ((0, 0), (0, OUT_PAD - OUT)))]
    biases = jnp.concatenate(bias_parts, axis=1)                                    # (1, 2560)
    assert biases.shape == (1, BIAS_TOTAL)

    w_head = jnp.concatenate(
        [p["proj_w"], jnp.pad(p["out_w"], ((0, 0), (0, OUT_PAD - OUT)))], axis=1)   # (D, 256)

    return {
        "wd": jnp.stack(wd_layers, axis=0).astype(bf16),     # (L, D, 1024) bf16
        "w2": jnp.stack(w2_layers, axis=0).astype(bf16),     # (L, FFN, D)  bf16
        "wh": w_head.astype(bf16),                           # (D, 2*D)     bf16
        "biases": biases.astype(jnp.float32),                # (1, 2560)    f32
    }


# ----------------------------------------------------------------------------
# Full forward (frozen stand-in encoders in JAX glue, hot path in one kernel).
# ----------------------------------------------------------------------------
def forward(v, t, params, packed):
    ti, ta, tt = t
    bsz = v.shape[0]

    # --- frozen stand-in vision encoder: patchify + linear embed + CLS + pos ---
    patches = v.reshape(bsz, 3, IMG // PATCH, PATCH, IMG // PATCH, PATCH)
    patches = patches.transpose(0, 2, 4, 1, 3, 5).reshape(bsz, N_PATCH, 3 * PATCH * PATCH)
    v_tok = patches @ params["patch_w"] + params["patch_b"]                   # (B, 4, D)
    cls = jnp.broadcast_to(params["cls_tok"], (bsz, 1, D))
    v_tok = jnp.concatenate([cls, v_tok], axis=1) + params["v_pos"][None]     # (B, SV, D)

    # --- frozen stand-in text encoder: token + type + pos embeddings, masked ---
    t_tok = (jnp.take(params["tok_emb"], ti, axis=0)
             + jnp.take(params["typ_emb"], tt, axis=0)
             + params["t_pos"][None])
    t_tok = t_tok * ta[..., None].astype(jnp.float32)                         # (B, ST, D)

    # --- feature = cat([v, t], dim=1), batch folded into the token axis ---
    feature = jnp.concatenate([v_tok, t_tok], axis=1).astype(jnp.float32)     # (B, S, D)
    x_flat = feature.reshape(BS, D)

    # block-diagonal additive mask: token i (batch i//S) attends only within its batch
    row = jnp.arange(BS, dtype=jnp.int32) // S
    mask = jnp.where(row[:, None] == row[None, :], 0.0, -1e9).astype(jnp.float32)

    # --- fused Pallas kernel: 2 fusion layers + head (lane-padded logits) ---
    logits_full = fused_foodmodel(x_flat, mask, packed)                       # (BS, OUT_PAD)

    # pick CLS rows (token 0 of each batch element) and drop lane padding
    return logits_full.reshape(B, S, OUT_PAD)[:, 0, :OUT]                     # (B, OUT)


if __name__ == "__main__":
    key = jax.random.PRNGKey(0)
    k_param, k_img, k_txt = jax.random.split(key, 3)

    params = init_params(k_param)
    packed = pack_params(params)

    v = jax.random.normal(k_img, (B, 3, IMG, IMG), dtype=jnp.float32)         # NCHW
    ti = jax.random.randint(k_txt, (B, ST), 0, VOCAB, dtype=jnp.int32)        # token ids
    ta = jnp.ones((B, ST), dtype=jnp.int32)                                   # attention mask
    tt = jnp.zeros((B, ST), dtype=jnp.int32)                                  # token types

    out = forward(v, (ti, ta, tt), params, packed)
    out = jax.block_until_ready(out)
    assert out.shape == (B, OUT) and out.dtype == jnp.float32
    print("KERNEL_OK")
</pallas_src>

<mosaic_0001>
module attributes {stable_mosaic.version = 11 : i64} {
  func.func @fused_forward_kernel(%arg0: memref<32x128xf32, #tpu.memory_space<vmem>>, %arg1: memref<32x32xf32, #tpu.memory_space<vmem>>, %arg2: memref<2x128x1024xbf16, #tpu.memory_space<vmem>>, %arg3: memref<2x512x128xbf16, #tpu.memory_space<vmem>>, %arg4: memref<128x256xbf16, #tpu.memory_space<vmem>>, %arg5: memref<1x2560xf32, #tpu.memory_space<vmem>>, %arg6: memref<32x128xf32, #tpu.memory_space<vmem>>) attributes {dimension_semantics = [], scalar_prefetch = 0 : i64, scratch_operands = 0 : i64, tpu.core_type = #tpu.core_type<tc>} {
    %c0 = arith.constant 0 : index
    %c0_0 = arith.constant 0 : index
    %0 = vector.load %arg0[%c0, %c0_0] : memref<32x128xf32, #tpu.memory_space<vmem>>, vector<32x128xf32>
    %c0_1 = arith.constant 0 : index
    %c0_2 = arith.constant 0 : index
    %1 = vector.load %arg1[%c0_1, %c0_2] : memref<32x32xf32, #tpu.memory_space<vmem>>, vector<32x32xf32>
    %cst = arith.constant dense<0.000000e+00> : vector<32xf32>
    %2 = vector.multi_reduction <add>, %0, %cst [1] : vector<32x128xf32> to vector<32xf32>
    %3 = vector.shape_cast %2 : vector<32xf32> to vector<32x1xf32>
    %cst_3 = arith.constant 1.280000e+02 : f32
    %4 = vector.broadcast %cst_3 : f32 to vector<32x1xf32>
    %5 = arith.divf %3, %4 : vector<32x1xf32>
    %6 = vector.broadcast %5 : vector<32x1xf32> to vector<32x128xf32>
    %7 = arith.subf %0, %6 : vector<32x128xf32>
    %8 = arith.mulf %7, %7 : vector<32x128xf32>
    %cst_4 = arith.constant dense<0.000000e+00> : vector<32xf32>
    %9 = vector.multi_reduction <add>, %8, %cst_4 [1] : vector<32x128xf32> to vector<32xf32>
    %10 = vector.shape_cast %9 : vector<32xf32> to vector<32x1xf32>
    %cst_5 = arith.constant 1.280000e+02 : f32
    %11 = vector.broadcast %cst_5 : f32 to vector<32x1xf32>
    %12 = arith.divf %10, %11 : vector<32x1xf32>
    %13 = vector.broadcast %5 : vector<32x1xf32> to vector<32x128xf32>
    %14 = arith.subf %0, %13 : vector<32x128xf32>
    %cst_6 = arith.constant 9.99999974E-6 : f32
    %15 = vector.broadcast %cst_6 : f32 to vector<32x1xf32>
    %16 = arith.addf %12, %15 : vector<32x1xf32>
    %17 = math.rsqrt %16 : vector<32x1xf32>
    %18 = vector.broadcast %17 : vector<32x1xf32> to vector<32x128xf32>
    %19 = arith.mulf %14, %18 : vector<32x128xf32>
    %20 = arith.truncf %19 : vector<32x128xf32> to vector<32x128xbf16>
    %c0_7 = arith.constant 0 : index
    %c0_8 = arith.constant 0 : index
    %c0_9 = arith.constant 0 : index
    %21 = vector.load %arg2[%c0_7, %c0_8, %c0_9] : memref<2x128x1024xbf16, #tpu.memory_space<vmem>>, vector<1x128x384xbf16>
    %22 = vector.shape_cast %21 : vector<1x128x384xbf16> to vector<128x384xbf16>
    %cst_10 = arith.constant dense<0.000000e+00> : vector<32x384xf32>
    %23 = tpu.matmul %20, %22, %cst_10 {dimension_numbers = #tpu.dot_dimension_numbers<[1], [0], [0], [1], [0, 0, 1, 1], [], []>} : vector<32x128xbf16>, vector<128x384xbf16>, vector<32x384xf32> -> vector<32x384xf32>
    %c0_11 = arith.constant 0 : index
    %c0_12 = arith.constant 0 : index
    %24 = vector.load %arg5[%c0_11, %c0_12] : memref<1x2560xf32, #tpu.memory_space<vmem>>, vector<1x384xf32>
    %25 = vector.broadcast %24 : vector<1x384xf32> to vector<32x384xf32>
    %26 = arith.addf %23, %25 : vector<32x384xf32>
    %27 = arith.truncf %26 : vector<32x384xf32> to vector<32x384xbf16>
    %28 = vector.extract_strided_slice %27 {offsets = [0, 0], sizes = [32, 16], strides = [1, 1]} : vector<32x384xbf16> to vector<32x16xbf16>
    %29 = vector.extract_strided_slice %27 {offsets = [0, 128], sizes = [32, 16], strides = [1, 1]} : vector<32x384xbf16> to vector<32x16xbf16>
    %30 = vector.extract_strided_slice %27 {offsets = [0, 256], sizes = [32, 16], strides = [1, 1]} : vector<32x384xbf16> to vector<32x16xbf16>
    %cst_13 = arith.constant dense<0.000000e+00> : vector<32x32xf32>
    %31 = tpu.matmul %28, %29, %cst_13 {dimension_numbers = #tpu.dot_dimension_numbers<[1], [1], [0], [0], [0, 0, 1, 0], [], []>} : vector<32x16xbf16>, vector<32x16xbf16>, vector<32x32xf32> -> vector<32x32xf32>
    %32 = arith.addf %31, %1 : vector<32x32xf32>
    %cst_14 = arith.constant dense<0xFF800000> : vector<32xf32>
    %33 = vector.multi_reduction <maximumf>, %32, %cst_14 [1] : vector<32x32xf32> to vector<32xf32>
    %34 = vector.shape_cast %33 : vector<32xf32> to vector<32x1xf32>
    %35 = vector.broadcast %34 : vector<32x1xf32> to vector<32x32xf32>
    %36 = arith.subf %32, %35 : vector<32x32xf32>
    %37 = math.exp %36 : vector<32x32xf32>
    %cst_15 = arith.constant dense<0.000000e+00> : vector<32xf32>
    %38 = vector.multi_reduction <add>, %37, %cst_15 [1] : vector<32x32xf32> to vector<32xf32>
    %39 = vector.shape_cast %38 : vector<32xf32> to vector<32x1xf32>
    %40 = tpu.reciprocal %39 {approx = true} : vector<32x1xf32> -> vector<32x1xf32>
    %41 = vector.broadcast %40 : vector<32x1xf32> to vector<32x32xf32>
    %42 = arith.mulf %37, %41 : vector<32x32xf32>
    %43 = arith.truncf %42 : vector<32x32xf32> to vector<32x32xbf16>
    %cst_16 = arith.constant dense<0.000000e+00> : vector<32x16xf32>
    %44 = tpu.matmul %43, %30, %cst_16 {dimension_numbers = #tpu.dot_dimension_numbers<[1], [0], [0], [1], [0, 0, 1, 1], [], []>} : vector<32x32xbf16>, vector<32x16xbf16>, vector<32x16xf32> -> vector<32x16xf32>
    %45 = vector.extract_strided_slice %27 {offsets = [0, 16], sizes = [32, 16], strides = [1, 1]} : vector<32x384xbf16> to vector<32x16xbf16>
    %46 = vector.extract_strided_slice %27 {offsets = [0, 144], sizes = [32, 16], strides = [1, 1]} : vector<32x384xbf16> to vector<32x16xbf16>
    %47 = vector.extract_strided_slice %27 {offsets = [0, 272], sizes = [32, 16], strides = [1, 1]} : vector<32x384xbf16> to vector<32x16xbf16>
    %cst_17 = arith.constant dense<0.000000e+00> : vector<32x32xf32>
    %48 = tpu.matmul %45, %46, %cst_17 {dimension_numbers = #tpu.dot_dimension_numbers<[1], [1], [0], [0], [0, 0, 1, 0], [], []>} : vector<32x16xbf16>, vector<32x16xbf16>, vector<32x32xf32> -> vector<32x32xf32>
    %49 = arith.addf %48, %1 : vector<32x32xf32>
    %cst_18 = arith.constant dense<0xFF800000> : vector<32xf32>
    %50 = vector.multi_reduction <maximumf>, %49, %cst_18 [1] : vector<32x32xf32> to vector<32xf32>
    %51 = vector.shape_cast %50 : vector<32xf32> to vector<32x1xf32>
    %52 = vector.broadcast %51 : vector<32x1xf32> to vector<32x32xf32>
    %53 = arith.subf %49, %52 : vector<32x32xf32>
    %54 = math.exp %53 : vector<32x32xf32>
    %cst_19 = arith.constant dense<0.000000e+00> : vector<32xf32>
    %55 = vector.multi_reduction <add>, %54, %cst_19 [1] : vector<32x32xf32> to vector<32xf32>
    %56 = vector.shape_cast %55 : vector<32xf32> to vector<32x1xf32>
    %57 = tpu.reciprocal %56 {approx = true} : vector<32x1xf32> -> vector<32x1xf32>
    %58 = vector.broadcast %57 : vector<32x1xf32> to vector<32x32xf32>
    %59 = arith.mulf %54, %58 : vector<32x32xf32>
    %60 = arith.truncf %59 : vector<32x32xf32> to vector<32x32xbf16>
    %cst_20 = arith.constant dense<0.000000e+00> : vector<32x16xf32>
    %61 = tpu.matmul %60, %47, %cst_20 {dimension_numbers = #tpu.dot_dimension_numbers<[1], [0], [0], [1], [0, 0, 1, 1], [], []>} : vector<32x32xbf16>, vector<32x16xbf16>, vector<32x16xf32> -> vector<32x16xf32>
    %62 = vector.extract_strided_slice %27 {offsets = [0, 32], sizes = [32, 16], strides = [1, 1]} : vector<32x384xbf16> to vector<32x16xbf16>
    %63 = vector.extract_strided_slice %27 {offsets = [0, 160], sizes = [32, 16], strides = [1, 1]} : vector<32x384xbf16> to vector<32x16xbf16>
    %64 = vector.extract_strided_slice %27 {offsets = [0, 288], sizes = [32, 16], strides = [1, 1]} : vector<32x384xbf16> to vector<32x16xbf16>
    %cst_21 = arith.constant dense<0.000000e+00> : vector<32x32xf32>
    %65 = tpu.matmul %62, %63, %cst_21 {dimension_numbers = #tpu.dot_dimension_numbers<[1], [1], [0], [0], [0, 0, 1, 0], [], []>} : vector<32x16xbf16>, vector<32x16xbf16>, vector<32x32xf32> -> vector<32x32xf32>
    %66 = arith.addf %65, %1 : vector<32x32xf32>
    %cst_22 = arith.constant dense<0xFF800000> : vector<32xf32>
    %67 = vector.multi_reduction <maximumf>, %66, %cst_22 [1] : vector<32x32xf32> to vector<32xf32>
    %68 = vector.shape_cast %67 : vector<32xf32> to vector<32x1xf32>
    %69 = vector.broadcast %68 : vector<32x1xf32> to vector<32x32xf32>
    %70 = arith.subf %66, %69 : vector<32x32xf32>
    %71 = math.exp %70 : vector<32x32xf32>
    %cst_23 = arith.constant dense<0.000000e+00> : vector<32xf32>
    %72 = vector.multi_reduction <add>, %71, %cst_23 [1] : vector<32x32xf32> to vector<32xf32>
    %73 = vector.shape_cast %72 : vector<32xf32> to vector<32x1xf32>
    %74 = tpu.reciprocal %73 {approx = true} : vector<32x1xf32> -> vector<32x1xf32>
    %75 = vector.broadcast %74 : vector<32x1xf32> to vector<32x32xf32>
    %76 = arith.mulf %71, %75 : vector<32x32xf32>
    %77 = arith.truncf %76 : vector<32x32xf32> to vector<32x32xbf16>
    %cst_24 = arith.constant dense<0.000000e+00> : vector<32x16xf32>
    %78 = tpu.matmul %77, %64, %cst_24 {dimension_numbers = #tpu.dot_dimension_numbers<[1], [0], [0], [1], [0, 0, 1, 1], [], []>} : vector<32x32xbf16>, vector<32x16xbf16>, vector<32x16xf32> -> vector<32x16xf32>
    %79 = vector.extract_strided_slice %27 {offsets = [0, 48], sizes = [32, 16], strides = [1, 1]} : vector<32x384xbf16> to vector<32x16xbf16>
    %80 = vector.extract_strided_slice %27 {offsets = [0, 176], sizes = [32, 16], strides = [1, 1]} : vector<32x384xbf16> to vector<32x16xbf16>
    %81 = vector.extract_strided_slice %27 {offsets = [0, 304], sizes = [32, 16], strides = [1, 1]} : vector<32x384xbf16> to vector<32x16xbf16>
    %cst_25 = arith.constant dense<0.000000e+00> : vector<32x32xf32>
    %82 = tpu.matmul %79, %80, %cst_25 {dimension_numbers = #tpu.dot_dimension_numbers<[1], [1], [0], [0], [0, 0, 1, 0], [], []>} : vector<32x16xbf16>, vector<32x16xbf16>, vector<32x32xf32> -> vector<32x32xf32>
    %83 = arith.addf %82, %1 : vector<32x32xf32>
    %cst_26 = arith.constant dense<0xFF800000> : vector<32xf32>
    %84 = vector.multi_reduction <maximumf>, %83, %cst_26 [1] : vector<32x32xf32> to vector<32xf32>
    %85 = vector.shape_cast %84 : vector<32xf32> to vector<32x1xf32>
    %86 = vector.broadcast %85 : vector<32x1xf32> to vector<32x32xf32>
    %87 = arith.subf %83, %86 : vector<32x32xf32>
    %88 = math.exp %87 : vector<32x32xf32>
    %cst_27 = arith.constant dense<0.000000e+00> : vector<32xf32>
    %89 = vector.multi_reduction <add>, %88, %cst_27 [1] : vector<32x32xf32> to vector<32xf32>
    %90 = vector.shape_cast %89 : vector<32xf32> to vector<32x1xf32>
    %91 = tpu.reciprocal %90 {approx = true} : vector<32x1xf32> -> vector<32x1xf32>
    %92 = vector.broadcast %91 : vector<32x1xf32> to vector<32x32xf32>
    %93 = arith.mulf %88, %92 : vector<32x32xf32>
    %94 = arith.truncf %93 : vector<32x32xf32> to vector<32x32xbf16>
    %cst_28 = arith.constant dense<0.000000e+00> : vector<32x16xf32>
    %95 = tpu.matmul %94, %81, %cst_28 {dimension_numbers = #tpu.dot_dimension_numbers<[1], [0], [0], [1], [0, 0, 1, 1], [], []>} : vector<32x32xbf16>, vector<32x16xbf16>, vector<32x16xf32> -> vector<32x16xf32>
    %96 = vector.extract_strided_slice %27 {offsets = [0, 64], sizes = [32, 16], strides = [1, 1]} : vector<32x384xbf16> to vector<32x16xbf16>
    %97 = vector.extract_strided_slice %27 {offsets = [0, 192], sizes = [32, 16], strides = [1, 1]} : vector<32x384xbf16> to vector<32x16xbf16>
    %98 = vector.extract_strided_slice %27 {offsets = [0, 320], sizes = [32, 16], strides = [1, 1]} : vector<32x384xbf16> to vector<32x16xbf16>
    %cst_29 = arith.constant dense<0.000000e+00> : vector<32x32xf32>
    %99 = tpu.matmul %96, %97, %cst_29 {dimension_numbers = #tpu.dot_dimension_numbers<[1], [1], [0], [0], [0, 0, 1, 0], [], []>} : vector<32x16xbf16>, vector<32x16xbf16>, vector<32x32xf32> -> vector<32x32xf32>
    %100 = arith.addf %99, %1 : vector<32x32xf32>
    %cst_30 = arith.constant dense<0xFF800000> : vector<32xf32>
    %101 = vector.multi_reduction <maximumf>, %100, %cst_30 [1] : vector<32x32xf32> to vector<32xf32>
    %102 = vector.shape_cast %101 : vector<32xf32> to vector<32x1xf32>
    %103 = vector.broadcast %102 : vector<32x1xf32> to vector<32x32xf32>
    %104 = arith.subf %100, %103 : vector<32x32xf32>
    %105 = math.exp %104 : vector<32x32xf32>
    %cst_31 = arith.constant dense<0.000000e+00> : vector<32xf32>
    %106 = vector.multi_reduction <add>, %105, %cst_31 [1] : vector<32x32xf32> to vector<32xf32>
    %107 = vector.shape_cast %106 : vector<32xf32> to vector<32x1xf32>
    %108 = tpu.reciprocal %107 {approx = true} : vector<32x1xf32> -> vector<32x1xf32>
    %109 = vector.broadcast %108 : vector<32x1xf32> to vector<32x32xf32>
    %110 = arith.mulf %105, %109 : vector<32x32xf32>
    %111 = arith.truncf %110 : vector<32x32xf32> to vector<32x32xbf16>
    %cst_32 = arith.constant dense<0.000000e+00> : vector<32x16xf32>
    %112 = tpu.matmul %111, %98, %cst_32 {dimension_numbers = #tpu.dot_dimension_numbers<[1], [0], [0], [1], [0, 0, 1, 1], [], []>} : vector<32x32xbf16>, vector<32x16xbf16>, vector<32x16xf32> -> vector<32x16xf32>
    %113 = vector.extract_strided_slice %27 {offsets = [0, 80], sizes = [32, 16], strides = [1, 1]} : vector<32x384xbf16> to vector<32x16xbf16>
    %114 = vector.extract_strided_slice %27 {offsets = [0, 208], sizes = [32, 16], strides = [1, 1]} : vector<32x384xbf16> to vector<32x16xbf16>
    %115 = vector.extract_strided_slice %27 {offsets = [0, 336], sizes = [32, 16], strides = [1, 1]} : vector<32x384xbf16> to vector<32x16xbf16>
    %cst_33 = arith.constant dense<0.000000e+00> : vector<32x32xf32>
    %116 = tpu.matmul %113, %114, %cst_33 {dimension_numbers = #tpu.dot_dimension_numbers<[1], [1], [0], [0], [0, 0, 1, 0], [], []>} : vector<32x16xbf16>, vector<32x16xbf16>, vector<32x32xf32> -> vector<32x32xf32>
    %117 = arith.addf %116, %1 : vector<32x32xf32>
    %cst_34 = arith.constant dense<0xFF800000> : vector<32xf32>
    %118 = vector.multi_reduction <maximumf>, %117, %cst_34 [1] : vector<32x32xf32> to vector<32xf32>
    %119 = vector.shape_cast %118 : vector<32xf32> to vector<32x1xf32>
    %120 = vector.broadcast %119 : vector<32x1xf32> to vector<32x32xf32>
    %121 = arith.subf %117, %120 : vector<32x32xf32>
    %122 = math.exp %121 : vector<32x32xf32>
    %cst_35 = arith.constant dense<0.000000e+00> : vector<32xf32>
    %123 = vector.multi_reduction <add>, %122, %cst_35 [1] : vector<32x32xf32> to vector<32xf32>
    %124 = vector.shape_cast %123 : vector<32xf32> to vector<32x1xf32>
    %125 = tpu.reciprocal %124 {approx = true} : vector<32x1xf32> -> vector<32x1xf32>
    %126 = vector.broadcast %125 : vector<32x1xf32> to vector<32x32xf32>
    %127 = arith.mulf %122, %126 : vector<32x32xf32>
    %128 = arith.truncf %127 : vector<32x32xf32> to vector<32x32xbf16>
    %cst_36 = arith.constant dense<0.000000e+00> : vector<32x16xf32>
    %129 = tpu.matmul %128, %115, %cst_36 {dimension_numbers = #tpu.dot_dimension_numbers<[1], [0], [0], [1], [0, 0, 1, 1], [], []>} : vector<32x32xbf16>, vector<32x16xbf16>, vector<32x16xf32> -> vector<32x16xf32>
    %130 = vector.extract_strided_slice %27 {offsets = [0, 96], sizes = [32, 16], strides = [1, 1]} : vector<32x384xbf16> to vector<32x16xbf16>
    %131 = vector.extract_strided_slice %27 {offsets = [0, 224], sizes = [32, 16], strides = [1, 1]} : vector<32x384xbf16> to vector<32x16xbf16>
    %132 = vector.extract_strided_slice %27 {offsets = [0, 352], sizes = [32, 16], strides = [1, 1]} : vector<32x384xbf16> to vector<32x16xbf16>
    %cst_37 = arith.constant dense<0.000000e+00> : vector<32x32xf32>
    %133 = tpu.matmul %130, %131, %cst_37 {dimension_numbers = #tpu.dot_dimension_numbers<[1], [1], [0], [0], [0, 0, 1, 0], [], []>} : vector<32x16xbf16>, vector<32x16xbf16>, vector<32x32xf32> -> vector<32x32xf32>
    %134 = arith.addf %133, %1 : vector<32x32xf32>
    %cst_38 = arith.constant dense<0xFF800000> : vector<32xf32>
    %135 = vector.multi_reduction <maximumf>, %134, %cst_38 [1] : vector<32x32xf32> to vector<32xf32>
    %136 = vector.shape_cast %135 : vector<32xf32> to vector<32x1xf32>
    %137 = vector.broadcast %136 : vector<32x1xf32> to vector<32x32xf32>
    %138 = arith.subf %134, %137 : vector<32x32xf32>
    %139 = math.exp %138 : vector<32x32xf32>
    %cst_39 = arith.constant dense<0.000000e+00> : vector<32xf32>
    %140 = vector.multi_reduction <add>, %139, %cst_39 [1] : vector<32x32xf32> to vector<32xf32>
    %141 = vector.shape_cast %140 : vector<32xf32> to vector<32x1xf32>
    %142 = tpu.reciprocal %141 {approx = true} : vector<32x1xf32> -> vector<32x1xf32>
    %143 = vector.broadcast %142 : vector<32x1xf32> to vector<32x32xf32>
    %144 = arith.mulf %139, %143 : vector<32x32xf32>
    %145 = arith.truncf %144 : vector<32x32xf32> to vector<32x32xbf16>
    %cst_40 = arith.constant dense<0.000000e+00> : vector<32x16xf32>
    %146 = tpu.matmul %145, %132, %cst_40 {dimension_numbers = #tpu.dot_dimension_numbers<[1], [0], [0], [1], [0, 0, 1, 1], [], []>} : vector<32x32xbf16>, vector<32x16xbf16>, vector<32x16xf32> -> vector<32x16xf32>
    %147 = vector.extract_strided_slice %27 {offsets = [0, 112], sizes = [32, 16], strides = [1, 1]} : vector<32x384xbf16> to vector<32x16xbf16>
    %148 = vector.extract_strided_slice %27 {offsets = [0, 240], sizes = [32, 16], strides = [1, 1]} : vector<32x384xbf16> to vector<32x16xbf16>
    %149 = vector.extract_strided_slice %27 {offsets = [0, 368], sizes = [32, 16], strides = [1, 1]} : vector<32x384xbf16> to vector<32x16xbf16>
    %cst_41 = arith.constant dense<0.000000e+00> : vector<32x32xf32>
    %150 = tpu.matmul %147, %148, %cst_41 {dimension_numbers = #tpu.dot_dimension_numbers<[1], [1], [0], [0], [0, 0, 1, 0], [], []>} : vector<32x16xbf16>, vector<32x16xbf16>, vector<32x32xf32> -> vector<32x32xf32>
    %151 = arith.addf %150, %1 : vector<32x32xf32>
    %cst_42 = arith.constant dense<0xFF800000> : vector<32xf32>
    %152 = vector.multi_reduction <maximumf>, %151, %cst_42 [1] : vector<32x32xf32> to vector<32xf32>
    %153 = vector.shape_cast %152 : vector<32xf32> to vector<32x1xf32>
    %154 = vector.broadcast %153 : vector<32x1xf32> to vector<32x32xf32>
    %155 = arith.subf %151, %154 : vector<32x32xf32>
    %156 = math.exp %155 : vector<32x32xf32>
    %cst_43 = arith.constant dense<0.000000e+00> : vector<32xf32>
    %157 = vector.multi_reduction <add>, %156, %cst_43 [1] : vector<32x32xf32> to vector<32xf32>
    %158 = vector.shape_cast %157 : vector<32xf32> to vector<32x1xf32>
    %159 = tpu.reciprocal %158 {approx = true} : vector<32x1xf32> -> vector<32x1xf32>
    %160 = vector.broadcast %159 : vector<32x1xf32> to vector<32x32xf32>
    %161 = arith.mulf %156, %160 : vector<32x32xf32>
    %162 = arith.truncf %161 : vector<32x32xf32> to vector<32x32xbf16>
    %cst_44 = arith.constant dense<0.000000e+00> : vector<32x16xf32>
    %163 = tpu.matmul %162, %149, %cst_44 {dimension_numbers = #tpu.dot_dimension_numbers<[1], [0], [0], [1], [0, 0, 1, 1], [], []>} : vector<32x32xbf16>, vector<32x16xbf16>, vector<32x16xf32> -> vector<32x16xf32>
    %164 = tpu.concatenate %44, %61, %78, %95, %112, %129, %146, %163 in 1 : vector<32x16xf32>, vector<32x16xf32>, vector<32x16xf32>, vector<32x16xf32>, vector<32x16xf32>, vector<32x16xf32>, vector<32x16xf32>, vector<32x16xf32> -> vector<32x128xf32>
    %165 = arith.truncf %164 : vector<32x128xf32> to vector<32x128xbf16>
    %c0_45 = arith.constant 0 : index
    %c0_46 = arith.constant 0 : index
    %c384 = arith.constant 384 : index
    %166 = vector.load %arg2[%c0_45, %c0_46, %c384] : memref<2x128x1024xbf16, #tpu.memory_space<vmem>>, vector<1x128x128xbf16>
    %167 = vector.shape_cast %166 : vector<1x128x128xbf16> to vector<128x128xbf16>
    %cst_47 = arith.constant dense<0.000000e+00> : vector<32x128xf32>
    %168 = tpu.matmul %165, %167, %cst_47 {dimension_numbers = #tpu.dot_dimension_numbers<[1], [0], [0], [1], [0, 0, 1, 1], [], []>} : vector<32x128xbf16>, vector<128x128xbf16>, vector<32x128xf32> -> vector<32x128xf32>
    %c0_48 = arith.constant 0 : index
    %c384_49 = arith.constant 384 : index
    %169 = vector.load %arg5[%c0_48, %c384_49] : memref<1x2560xf32, #tpu.memory_space<vmem>>, vector<1x128xf32>
    %170 = vector.broadcast %169 : vector<1x128xf32> to vector<32x128xf32>
    %171 = arith.addf %168, %170 : vector<32x128xf32>
    %172 = arith.addf %0, %171 : vector<32x128xf32>
    %cst_50 = arith.constant dense<0.000000e+00> : vector<32xf32>
    %173 = vector.multi_reduction <add>, %172, %cst_50 [1] : vector<32x128xf32> to vector<32xf32>
    %174 = vector.shape_cast %173 : vector<32xf32> to vector<32x1xf32>
    %cst_51 = arith.constant 1.280000e+02 : f32
    %175 = vector.broadcast %cst_51 : f32 to vector<32x1xf32>
    %176 = arith.divf %174, %175 : vector<32x1xf32>
    %177 = vector.broadcast %176 : vector<32x1xf32> to vector<32x128xf32>
    %178 = arith.subf %172, %177 : vector<32x128xf32>
    %179 = arith.mulf %178, %178 : vector<32x128xf32>
    %cst_52 = arith.constant dense<0.000000e+00> : vector<32xf32>
    %180 = vector.multi_reduction <add>, %179, %cst_52 [1] : vector<32x128xf32> to vector<32xf32>
    %181 = vector.shape_cast %180 : vector<32xf32> to vector<32x1xf32>
    %cst_53 = arith.constant 1.280000e+02 : f32
    %182 = vector.broadcast %cst_53 : f32 to vector<32x1xf32>
    %183 = arith.divf %181, %182 : vector<32x1xf32>
    %184 = vector.broadcast %176 : vector<32x1xf32> to vector<32x128xf32>
    %185 = arith.subf %172, %184 : vector<32x128xf32>
    %cst_54 = arith.constant 9.99999974E-6 : f32
    %186 = vector.broadcast %cst_54 : f32 to vector<32x1xf32>
    %187 = arith.addf %183, %186 : vector<32x1xf32>
    %188 = math.rsqrt %187 : vector<32x1xf32>
    %189 = vector.broadcast %188 : vector<32x1xf32> to vector<32x128xf32>
    %190 = arith.mulf %185, %189 : vector<32x128xf32>
    %191 = arith.truncf %190 : vector<32x128xf32> to vector<32x128xbf16>
    %c0_55 = arith.constant 0 : index
    %c0_56 = arith.constant 0 : index
    %c512 = arith.constant 512 : index
    %192 = vector.load %arg2[%c0_55, %c0_56, %c512] : memref<2x128x1024xbf16, #tpu.memory_space<vmem>>, vector<1x128x512xbf16>
    %193 = vector.shape_cast %192 : vector<1x128x512xbf16> to vector<128x512xbf16>
    %cst_57 = arith.constant dense<0.000000e+00> : vector<32x512xf32>
    %194 = tpu.matmul %191, %193, %cst_57 {dimension_numbers = #tpu.dot_dimension_numbers<[1], [0], [0], [1], [0, 0, 1, 1], [], []>} : vector<32x128xbf16>, vector<128x512xbf16>, vector<32x512xf32> -> vector<32x512xf32>
    %c0_58 = arith.constant 0 : index
    %c512_59 = arith.constant 512 : index
    %195 = vector.load %arg5[%c0_58, %c512_59] : memref<1x2560xf32, #tpu.memory_space<vmem>>, vector<1x512xf32>
    %196 = vector.broadcast %195 : vector<1x512xf32> to vector<32x512xf32>
    %197 = arith.addf %194, %196 : vector<32x512xf32>
    %cst_60 = arith.constant 0.000000e+00 : f32
    %198 = vector.broadcast %cst_60 : f32 to vector<32x512xf32>
    %199 = arith.maximumf %197, %198 : vector<32x512xf32>
    %200 = arith.truncf %199 : vector<32x512xf32> to vector<32x512xbf16>
    %c0_61 = arith.constant 0 : index
    %c0_62 = arith.constant 0 : index
    %c0_63 = arith.constant 0 : index
    %201 = vector.load %arg3[%c0_61, %c0_62, %c0_63] : memref<2x512x128xbf16, #tpu.memory_space<vmem>>, vector<1x512x128xbf16>
    %202 = vector.shape_cast %201 : vector<1x512x128xbf16> to vector<512x128xbf16>
    %cst_64 = arith.constant dense<0.000000e+00> : vector<32x128xf32>
    %203 = tpu.matmul %200, %202, %cst_64 {dimension_numbers = #tpu.dot_dimension_numbers<[1], [0], [0], [1], [0, 0, 1, 1], [], []>} : vector<32x512xbf16>, vector<512x128xbf16>, vector<32x128xf32> -> vector<32x128xf32>
    %c0_65 = arith.constant 0 : index
    %c1024 = arith.constant 1024 : index
    %204 = vector.load %arg5[%c0_65, %c1024] : memref<1x2560xf32, #tpu.memory_space<vmem>>, vector<1x128xf32>
    %205 = vector.broadcast %204 : vector<1x128xf32> to vector<32x128xf32>
    %206 = arith.addf %203, %205 : vector<32x128xf32>
    %207 = arith.addf %172, %206 : vector<32x128xf32>
    %cst_66 = arith.constant dense<0.000000e+00> : vector<32xf32>
    %208 = vector.multi_reduction <add>, %207, %cst_66 [1] : vector<32x128xf32> to vector<32xf32>
    %209 = vector.shape_cast %208 : vector<32xf32> to vector<32x1xf32>
    %cst_67 = arith.constant 1.280000e+02 : f32
    %210 = vector.broadcast %cst_67 : f32 to vector<32x1xf32>
    %211 = arith.divf %209, %210 : vector<32x1xf32>
    %212 = vector.broadcast %211 : vector<32x1xf32> to vector<32x128xf32>
    %213 = arith.subf %207, %212 : vector<32x128xf32>
    %214 = arith.mulf %213, %213 : vector<32x128xf32>
    %cst_68 = arith.constant dense<0.000000e+00> : vector<32xf32>
    %215 = vector.multi_reduction <add>, %214, %cst_68 [1] : vector<32x128xf32> to vector<32xf32>
    %216 = vector.shape_cast %215 : vector<32xf32> to vector<32x1xf32>
    %cst_69 = arith.constant 1.280000e+02 : f32
    %217 = vector.broadcast %cst_69 : f32 to vector<32x1xf32>
    %218 = arith.divf %216, %217 : vector<32x1xf32>
    %219 = vector.broadcast %211 : vector<32x1xf32> to vector<32x128xf32>
    %220 = arith.subf %207, %219 : vector<32x128xf32>
    %cst_70 = arith.constant 9.99999974E-6 : f32
    %221 = vector.broadcast %cst_70 : f32 to vector<32x1xf32>
    %222 = arith.addf %218, %221 : vector<32x1xf32>
    %223 = math.rsqrt %222 : vector<32x1xf32>
    %224 = vector.broadcast %223 : vector<32x1xf32> to vector<32x128xf32>
    %225 = arith.mulf %220, %224 : vector<32x128xf32>
    %226 = arith.truncf %225 : vector<32x128xf32> to vector<32x128xbf16>
    %c1 = arith.constant 1 : index
    %c0_71 = arith.constant 0 : index
    %c0_72 = arith.constant 0 : index
    %227 = vector.load %arg2[%c1, %c0_71, %c0_72] : memref<2x128x1024xbf16, #tpu.memory_space<vmem>>, vector<1x128x384xbf16>
    %228 = vector.shape_cast %227 : vector<1x128x384xbf16> to vector<128x384xbf16>
    %cst_73 = arith.constant dense<0.000000e+00> : vector<32x384xf32>
    %229 = tpu.matmul %226, %228, %cst_73 {dimension_numbers = #tpu.dot_dimension_numbers<[1], [0], [0], [1], [0, 0, 1, 1], [], []>} : vector<32x128xbf16>, vector<128x384xbf16>, vector<32x384xf32> -> vector<32x384xf32>
    %c0_74 = arith.constant 0 : index
    %c1152 = arith.constant 1152 : index
    %230 = vector.load %arg5[%c0_74, %c1152] : memref<1x2560xf32, #tpu.memory_space<vmem>>, vector<1x384xf32>
    %231 = vector.broadcast %230 : vector<1x384xf32> to vector<32x384xf32>
    %232 = arith.addf %229, %231 : vector<32x384xf32>
    %233 = arith.truncf %232 : vector<32x384xf32> to vector<32x384xbf16>
    %234 = vector.extract_strided_slice %233 {offsets = [0, 0], sizes = [32, 16], strides = [1, 1]} : vector<32x384xbf16> to vector<32x16xbf16>
    %235 = vector.extract_strided_slice %233 {offsets = [0, 128], sizes = [32, 16], strides = [1, 1]} : vector<32x384xbf16> to vector<32x16xbf16>
    %236 = vector.extract_strided_slice %233 {offsets = [0, 256], sizes = [32, 16], strides = [1, 1]} : vector<32x384xbf16> to vector<32x16xbf16>
    %cst_75 = arith.constant dense<0.000000e+00> : vector<32x32xf32>
    %237 = tpu.matmul %234, %235, %cst_75 {dimension_numbers = #tpu.dot_dimension_numbers<[1], [1], [0], [0], [0, 0, 1, 0], [], []>} : vector<32x16xbf16>, vector<32x16xbf16>, vector<32x32xf32> -> vector<32x32xf32>
    %238 = arith.addf %237, %1 : vector<32x32xf32>
    %cst_76 = arith.constant dense<0xFF800000> : vector<32xf32>
    %239 = vector.multi_reduction <maximumf>, %238, %cst_76 [1] : vector<32x32xf32> to vector<32xf32>
    %240 = vector.shape_cast %239 : vector<32xf32> to vector<32x1xf32>
    %241 = vector.broadcast %240 : vector<32x1xf32> to vector<32x32xf32>
    %242 = arith.subf %238, %241 : vector<32x32xf32>
    %243 = math.exp %242 : vector<32x32xf32>
    %cst_77 = arith.constant dense<0.000000e+00> : vector<32xf32>
    %244 = vector.multi_reduction <add>, %243, %cst_77 [1] : vector<32x32xf32> to vector<32xf32>
    %245 = vector.shape_cast %244 : vector<32xf32> to vector<32x1xf32>
    %246 = tpu.reciprocal %245 {approx = true} : vector<32x1xf32> -> vector<32x1xf32>
    %247 = vector.broadcast %246 : vector<32x1xf32> to vector<32x32xf32>
    %248 = arith.mulf %243, %247 : vector<32x32xf32>
    %249 = arith.truncf %248 : vector<32x32xf32> to vector<32x32xbf16>
    %cst_78 = arith.constant dense<0.000000e+00> : vector<32x16xf32>
    %250 = tpu.matmul %249, %236, %cst_78 {dimension_numbers = #tpu.dot_dimension_numbers<[1], [0], [0], [1], [0, 0, 1, 1], [], []>} : vector<32x32xbf16>, vector<32x16xbf16>, vector<32x16xf32> -> vector<32x16xf32>
    %251 = vector.extract_strided_slice %233 {offsets = [0, 16], sizes = [32, 16], strides = [1, 1]} : vector<32x384xbf16> to vector<32x16xbf16>
    %252 = vector.extract_strided_slice %233 {offsets = [0, 144], sizes = [32, 16], strides = [1, 1]} : vector<32x384xbf16> to vector<32x16xbf16>
    %253 = vector.extract_strided_slice %233 {offsets = [0, 272], sizes = [32, 16], strides = [1, 1]} : vector<32x384xbf16> to vector<32x16xbf16>
    %cst_79 = arith.constant dense<0.000000e+00> : vector<32x32xf32>
    %254 = tpu.matmul %251, %252, %cst_79 {dimension_numbers = #tpu.dot_dimension_numbers<[1], [1], [0], [0], [0, 0, 1, 0], [], []>} : vector<32x16xbf16>, vector<32x16xbf16>, vector<32x32xf32> -> vector<32x32xf32>
    %255 = arith.addf %254, %1 : vector<32x32xf32>
    %cst_80 = arith.constant dense<0xFF800000> : vector<32xf32>
    %256 = vector.multi_reduction <maximumf>, %255, %cst_80 [1] : vector<32x32xf32> to vector<32xf32>
    %257 = vector.shape_cast %256 : vector<32xf32> to vector<32x1xf32>
    %258 = vector.broadcast %257 : vector<32x1xf32> to vector<32x32xf32>
    %259 = arith.subf %255, %258 : vector<32x32xf32>
    %260 = math.exp %259 : vector<32x32xf32>
    %cst_81 = arith.constant dense<0.000000e+00> : vector<32xf32>
    %261 = vector.multi_reduction <add>, %260, %cst_81 [1] : vector<32x32xf32> to vector<32xf32>
    %262 = vector.shape_cast %261 : vector<32xf32> to vector<32x1xf32>
    %263 = tpu.reciprocal %262 {approx = true} : vector<32x1xf32> -> vector<32x1xf32>
    %264 = vector.broadcast %263 : vector<32x1xf32> to vector<32x32xf32>
    %265 = arith.mulf %260, %264 : vector<32x32xf32>
    %266 = arith.truncf %265 : vector<32x32xf32> to vector<32x32xbf16>
    %cst_82 = arith.constant dense<0.000000e+00> : vector<32x16xf32>
    %267 = tpu.matmul %266, %253, %cst_82 {dimension_numbers = #tpu.dot_dimension_numbers<[1], [0], [0], [1], [0, 0, 1, 1], [], []>} : vector<32x32xbf16>, vector<32x16xbf16>, vector<32x16xf32> -> vector<32x16xf32>
    %268 = vector.extract_strided_slice %233 {offsets = [0, 32], sizes = [32, 16], strides = [1, 1]} : vector<32x384xbf16> to vector<32x16xbf16>
    %269 = vector.extract_strided_slice %233 {offsets = [0, 160], sizes = [32, 16], strides = [1, 1]} : vector<32x384xbf16> to vector<32x16xbf16>
    %270 = vector.extract_strided_slice %233 {offsets = [0, 288], sizes = [32, 16], strides = [1, 1]} : vector<32x384xbf16> to vector<32x16xbf16>
    %cst_83 = arith.constant dense<0.000000e+00> : vector<32x32xf32>
    %271 = tpu.matmul %268, %269, %cst_83 {dimension_numbers = #tpu.dot_dimension_numbers<[1], [1], [0], [0], [0, 0, 1, 0], [], []>} : vector<32x16xbf16>, vector<32x16xbf16>, vector<32x32xf32> -> vector<32x32xf32>
    %272 = arith.addf %271, %1 : vector<32x32xf32>
    %cst_84 = arith.constant dense<0xFF800000> : vector<32xf32>
    %273 = vector.multi_reduction <maximumf>, %272, %cst_84 [1] : vector<32x32xf32> to vector<32xf32>
    %274 = vector.shape_cast %273 : vector<32xf32> to vector<32x1xf32>
    %275 = vector.broadcast %274 : vector<32x1xf32> to vector<32x32xf32>
    %276 = arith.subf %272, %275 : vector<32x32xf32>
    %277 = math.exp %276 : vector<32x32xf32>
    %cst_85 = arith.constant dense<0.000000e+00> : vector<32xf32>
    %278 = vector.multi_reduction <add>, %277, %cst_85 [1] : vector<32x32xf32> to vector<32xf32>
    %279 = vector.shape_cast %278 : vector<32xf32> to vector<32x1xf32>
    %280 = tpu.reciprocal %279 {approx = true} : vector<32x1xf32> -> vector<32x1xf32>
    %281 = vector.broadcast %280 : vector<32x1xf32> to vector<32x32xf32>
    %282 = arith.mulf %277, %281 : vector<32x32xf32>
    %283 = arith.truncf %282 : vector<32x32xf32> to vector<32x32xbf16>
    %cst_86 = arith.constant dense<0.000000e+00> : vector<32x16xf32>
    %284 = tpu.matmul %283, %270, %cst_86 {dimension_numbers = #tpu.dot_dimension_numbers<[1], [0], [0], [1], [0, 0, 1, 1], [], []>} : vector<32x32xbf16>, vector<32x16xbf16>, vector<32x16xf32> -> vector<32x16xf32>
    %285 = vector.extract_strided_slice %233 {offsets = [0, 48], sizes = [32, 16], strides = [1, 1]} : vector<32x384xbf16> to vector<32x16xbf16>
    %286 = vector.extract_strided_slice %233 {offsets = [0, 176], sizes = [32, 16], strides = [1, 1]} : vector<32x384xbf16> to vector<32x16xbf16>
    %287 = vector.extract_strided_slice %233 {offsets = [0, 304], sizes = [32, 16], strides = [1, 1]} : vector<32x384xbf16> to vector<32x16xbf16>
    %cst_87 = arith.constant dense<0.000000e+00> : vector<32x32xf32>
    %288 = tpu.matmul %285, %286, %cst_87 {dimension_numbers = #tpu.dot_dimension_numbers<[1], [1], [0], [0], [0, 0, 1, 0], [], []>} : vector<32x16xbf16>, vector<32x16xbf16>, vector<32x32xf32> -> vector<32x32xf32>
    %289 = arith.addf %288, %1 : vector<32x32xf32>
    %cst_88 = arith.constant dense<0xFF800000> : vector<32xf32>
    %290 = vector.multi_reduction <maximumf>, %289, %cst_88 [1] : vector<32x32xf32> to vector<32xf32>
    %291 = vector.shape_cast %290 : vector<32xf32> to vector<32x1xf32>
    %292 = vector.broadcast %291 : vector<32x1xf32> to vector<32x32xf32>
    %293 = arith.subf %289, %292 : vector<32x32xf32>
    %294 = math.exp %293 : vector<32x32xf32>
    %cst_89 = arith.constant dense<0.000000e+00> : vector<32xf32>
    %295 = vector.multi_reduction <add>, %294, %cst_89 [1] : vector<32x32xf32> to vector<32xf32>
    %296 = vector.shape_cast %295 : vector<32xf32> to vector<32x1xf32>
    %297 = tpu.reciprocal %296 {approx = true} : vector<32x1xf32> -> vector<32x1xf32>
    %298 = vector.broadcast %297 : vector<32x1xf32> to vector<32x32xf32>
    %299 = arith.mulf %294, %298 : vector<32x32xf32>
    %300 = arith.truncf %299 : vector<32x32xf32> to vector<32x32xbf16>
    %cst_90 = arith.constant dense<0.000000e+00> : vector<32x16xf32>
    %301 = tpu.matmul %300, %287, %cst_90 {dimension_numbers = #tpu.dot_dimension_numbers<[1], [0], [0], [1], [0, 0, 1, 1], [], []>} : vector<32x32xbf16>, vector<32x16xbf16>, vector<32x16xf32> -> vector<32x16xf32>
    %302 = vector.extract_strided_slice %233 {offsets = [0, 64], sizes = [32, 16], strides = [1, 1]} : vector<32x384xbf16> to vector<32x16xbf16>
    %303 = vector.extract_strided_slice %233 {offsets = [0, 192], sizes = [32, 16], strides = [1, 1]} : vector<32x384xbf16> to vector<32x16xbf16>
    %304 = vector.extract_strided_slice %233 {offsets = [0, 320], sizes = [32, 16], strides = [1, 1]} : vector<32x384xbf16> to vector<32x16xbf16>
    %cst_91 = arith.constant dense<0.000000e+00> : vector<32x32xf32>
    %305 = tpu.matmul %302, %303, %cst_91 {dimension_numbers = #tpu.dot_dimension_numbers<[1], [1], [0], [0], [0, 0, 1, 0], [], []>} : vector<32x16xbf16>, vector<32x16xbf16>, vector<32x32xf32> -> vector<32x32xf32>
    %306 = arith.addf %305, %1 : vector<32x32xf32>
    %cst_92 = arith.constant dense<0xFF800000> : vector<32xf32>
    %307 = vector.multi_reduction <maximumf>, %306, %cst_92 [1] : vector<32x32xf32> to vector<32xf32>
    %308 = vector.shape_cast %307 : vector<32xf32> to vector<32x1xf32>
    %309 = vector.broadcast %308 : vector<32x1xf32> to vector<32x32xf32>
    %310 = arith.subf %306, %309 : vector<32x32xf32>
    %311 = math.exp %310 : vector<32x32xf32>
    %cst_93 = arith.constant dense<0.000000e+00> : vector<32xf32>
    %312 = vector.multi_reduction <add>, %311, %cst_93 [1] : vector<32x32xf32> to vector<32xf32>
    %313 = vector.shape_cast %312 : vector<32xf32> to vector<32x1xf32>
    %314 = tpu.reciprocal %313 {approx = true} : vector<32x1xf32> -> vector<32x1xf32>
    %315 = vector.broadcast %314 : vector<32x1xf32> to vector<32x32xf32>
    %316 = arith.mulf %311, %315 : vector<32x32xf32>
    %317 = arith.truncf %316 : vector<32x32xf32> to vector<32x32xbf16>
    %cst_94 = arith.constant dense<0.000000e+00> : vector<32x16xf32>
    %318 = tpu.matmul %317, %304, %cst_94 {dimension_numbers = #tpu.dot_dimension_numbers<[1], [0], [0], [1], [0, 0, 1, 1], [], []>} : vector<32x32xbf16>, vector<32x16xbf16>, vector<32x16xf32> -> vector<32x16xf32>
    %319 = vector.extract_strided_slice %233 {offsets = [0, 80], sizes = [32, 16], strides = [1, 1]} : vector<32x384xbf16> to vector<32x16xbf16>
    %320 = vector.extract_strided_slice %233 {offsets = [0, 208], sizes = [32, 16], strides = [1, 1]} : vector<32x384xbf16> to vector<32x16xbf16>
    %321 = vector.extract_strided_slice %233 {offsets = [0, 336], sizes = [32, 16], strides = [1, 1]} : vector<32x384xbf16> to vector<32x16xbf16>
    %cst_95 = arith.constant dense<0.000000e+00> : vector<32x32xf32>
    %322 = tpu.matmul %319, %320, %cst_95 {dimension_numbers = #tpu.dot_dimension_numbers<[1], [1], [0], [0], [0, 0, 1, 0], [], []>} : vector<32x16xbf16>, vector<32x16xbf16>, vector<32x32xf32> -> vector<32x32xf32>
    %323 = arith.addf %322, %1 : vector<32x32xf32>
    %cst_96 = arith.constant dense<0xFF800000> : vector<32xf32>
    %324 = vector.multi_reduction <maximumf>, %323, %cst_96 [1] : vector<32x32xf32> to vector<32xf32>
    %325 = vector.shape_cast %324 : vector<32xf32> to vector<32x1xf32>
    %326 = vector.broadcast %325 : vector<32x1xf32> to vector<32x32xf32>
    %327 = arith.subf %323, %326 : vector<32x32xf32>
    %328 = math.exp %327 : vector<32x32xf32>
    %cst_97 = arith.constant dense<0.000000e+00> : vector<32xf32>
    %329 = vector.multi_reduction <add>, %328, %cst_97 [1] : vector<32x32xf32> to vector<32xf32>
    %330 = vector.shape_cast %329 : vector<32xf32> to vector<32x1xf32>
    %331 = tpu.reciprocal %330 {approx = true} : vector<32x1xf32> -> vector<32x1xf32>
    %332 = vector.broadcast %331 : vector<32x1xf32> to vector<32x32xf32>
    %333 = arith.mulf %328, %332 : vector<32x32xf32>
    %334 = arith.truncf %333 : vector<32x32xf32> to vector<32x32xbf16>
    %cst_98 = arith.constant dense<0.000000e+00> : vector<32x16xf32>
    %335 = tpu.matmul %334, %321, %cst_98 {dimension_numbers = #tpu.dot_dimension_numbers<[1], [0], [0], [1], [0, 0, 1, 1], [], []>} : vector<32x32xbf16>, vector<32x16xbf16>, vector<32x16xf32> -> vector<32x16xf32>
    %336 = vector.extract_strided_slice %233 {offsets = [0, 96], sizes = [32, 16], strides = [1, 1]} : vector<32x384xbf16> to vector<32x16xbf16>
    %337 = vector.extract_strided_slice %233 {offsets = [0, 224], sizes = [32, 16], strides = [1, 1]} : vector<32x384xbf16> to vector<32x16xbf16>
    %338 = vector.extract_strided_slice %233 {offsets = [0, 352], sizes = [32, 16], strides = [1, 1]} : vector<32x384xbf16> to vector<32x16xbf16>
    %cst_99 = arith.constant dense<0.000000e+00> : vector<32x32xf32>
    %339 = tpu.matmul %336, %337, %cst_99 {dimension_numbers = #tpu.dot_dimension_numbers<[1], [1], [0], [0], [0, 0, 1, 0], [], []>} : vector<32x16xbf16>, vector<32x16xbf16>, vector<32x32xf32> -> vector<32x32xf32>
    %340 = arith.addf %339, %1 : vector<32x32xf32>
    %cst_100 = arith.constant dense<0xFF800000> : vector<32xf32>
    %341 = vector.multi_reduction <maximumf>, %340, %cst_100 [1] : vector<32x32xf32> to vector<32xf32>
    %342 = vector.shape_cast %341 : vector<32xf32> to vector<32x1xf32>
    %343 = vector.broadcast %342 : vector<32x1xf32> to vector<32x32xf32>
    %344 = arith.subf %340, %343 : vector<32x32xf32>
    %345 = math.exp %344 : vector<32x32xf32>
    %cst_101 = arith.constant dense<0.000000e+00> : vector<32xf32>
    %346 = vector.multi_reduction <add>, %345, %cst_101 [1] : vector<32x32xf32> to vector<32xf32>
    %347 = vector.shape_cast %346 : vector<32xf32> to vector<32x1xf32>
    %348 = tpu.reciprocal %347 {approx = true} : vector<32x1xf32> -> vector<32x1xf32>
    %349 = vector.broadcast %348 : vector<32x1xf32> to vector<32x32xf32>
    %350 = arith.mulf %345, %349 : vector<32x32xf32>
    %351 = arith.truncf %350 : vector<32x32xf32> to vector<32x32xbf16>
    %cst_102 = arith.constant dense<0.000000e+00> : vector<32x16xf32>
    %352 = tpu.matmul %351, %338, %cst_102 {dimension_numbers = #tpu.dot_dimension_numbers<[1], [0], [0], [1], [0, 0, 1, 1], [], []>} : vector<32x32xbf16>, vector<32x16xbf16>, vector<32x16xf32> -> vector<32x16xf32>
    %353 = vector.extract_strided_slice %233 {offsets = [0, 112], sizes = [32, 16], strides = [1, 1]} : vector<32x384xbf16> to vector<32x16xbf16>
    %354 = vector.extract_strided_slice %233 {offsets = [0, 240], sizes = [32, 16], strides = [1, 1]} : vector<32x384xbf16> to vector<32x16xbf16>
    %355 = vector.extract_strided_slice %233 {offsets = [0, 368], sizes = [32, 16], strides = [1, 1]} : vector<32x384xbf16> to vector<32x16xbf16>
    %cst_103 = arith.constant dense<0.000000e+00> : vector<32x32xf32>
    %356 = tpu.matmul %353, %354, %cst_103 {dimension_numbers = #tpu.dot_dimension_numbers<[1], [1], [0], [0], [0, 0, 1, 0], [], []>} : vector<32x16xbf16>, vector<32x16xbf16>, vector<32x32xf32> -> vector<32x32xf32>
    %357 = arith.addf %356, %1 : vector<32x32xf32>
    %cst_104 = arith.constant dense<0xFF800000> : vector<32xf32>
    %358 = vector.multi_reduction <maximumf>, %357, %cst_104 [1] : vector<32x32xf32> to vector<32xf32>
    %359 = vector.shape_cast %358 : vector<32xf32> to vector<32x1xf32>
    %360 = vector.broadcast %359 : vector<32x1xf32> to vector<32x32xf32>
    %361 = arith.subf %357, %360 : vector<32x32xf32>
    %362 = math.exp %361 : vector<32x32xf32>
    %cst_105 = arith.constant dense<0.000000e+00> : vector<32xf32>
    %363 = vector.multi_reduction <add>, %362, %cst_105 [1] : vector<32x32xf32> to vector<32xf32>
    %364 = vector.shape_cast %363 : vector<32xf32> to vector<32x1xf32>
    %365 = tpu.reciprocal %364 {approx = true} : vector<32x1xf32> -> vector<32x1xf32>
    %366 = vector.broadcast %365 : vector<32x1xf32> to vector<32x32xf32>
    %367 = arith.mulf %362, %366 : vector<32x32xf32>
    %368 = arith.truncf %367 : vector<32x32xf32> to vector<32x32xbf16>
    %cst_106 = arith.constant dense<0.000000e+00> : vector<32x16xf32>
    %369 = tpu.matmul %368, %355, %cst_106 {dimension_numbers = #tpu.dot_dimension_numbers<[1], [0], [0], [1], [0, 0, 1, 1], [], []>} : vector<32x32xbf16>, vector<32x16xbf16>, vector<32x16xf32> -> vector<32x16xf32>
    %370 = tpu.concatenate %250, %267, %284, %301, %318, %335, %352, %369 in 1 : vector<32x16xf32>, vector<32x16xf32>, vector<32x16xf32>, vector<32x16xf32>, vector<32x16xf32>, vector<32x16xf32>, vector<32x16xf32>, vector<32x16xf32> -> vector<32x128xf32>
    %371 = arith.truncf %370 : vector<32x128xf32> to vector<32x128xbf16>
    %c1_107 = arith.constant 1 : index
    %c0_108 = arith.constant 0 : index
    %c384_109 = arith.constant 384 : index
    %372 = vector.load %arg2[%c1_107, %c0_108, %c384_109] : memref<2x128x1024xbf16, #tpu.memory_space<vmem>>, vector<1x128x128xbf16>
    %373 = vector.shape_cast %372 : vector<1x128x128xbf16> to vector<128x128xbf16>
    %cst_110 = arith.constant dense<0.000000e+00> : vector<32x128xf32>
    %374 = tpu.matmul %371, %373, %cst_110 {dimension_numbers = #tpu.dot_dimension_numbers<[1], [0], [0], [1], [0, 0, 1, 1], [], []>} : vector<32x128xbf16>, vector<128x128xbf16>, vector<32x128xf32> -> vector<32x128xf32>
    %c0_111 = arith.constant 0 : index
    %c1536 = arith.constant 1536 : index
    %375 = vector.load %arg5[%c0_111, %c1536] : memref<1x2560xf32, #tpu.memory_space<vmem>>, vector<1x128xf32>
    %376 = vector.broadcast %375 : vector<1x128xf32> to vector<32x128xf32>
    %377 = arith.addf %374, %376 : vector<32x128xf32>
    %378 = arith.addf %207, %377 : vector<32x128xf32>
    %cst_112 = arith.constant dense<0.000000e+00> : vector<32xf32>
    %379 = vector.multi_reduction <add>, %378, %cst_112 [1] : vector<32x128xf32> to vector<32xf32>
    %380 = vector.shape_cast %379 : vector<32xf32> to vector<32x1xf32>
    %cst_113 = arith.constant 1.280000e+02 : f32
    %381 = vector.broadcast %cst_113 : f32 to vector<32x1xf32>
    %382 = arith.divf %380, %381 : vector<32x1xf32>
    %383 = vector.broadcast %382 : vector<32x1xf32> to vector<32x128xf32>
    %384 = arith.subf %378, %383 : vector<32x128xf32>
    %385 = arith.mulf %384, %384 : vector<32x128xf32>
    %cst_114 = arith.constant dense<0.000000e+00> : vector<32xf32>
    %386 = vector.multi_reduction <add>, %385, %cst_114 [1] : vector<32x128xf32> to vector<32xf32>
    %387 = vector.shape_cast %386 : vector<32xf32> to vector<32x1xf32>
    %cst_115 = arith.constant 1.280000e+02 : f32
    %388 = vector.broadcast %cst_115 : f32 to vector<32x1xf32>
    %389 = arith.divf %387, %388 : vector<32x1xf32>
    %390 = vector.broadcast %382 : vector<32x1xf32> to vector<32x128xf32>
    %391 = arith.subf %378, %390 : vector<32x128xf32>
    %cst_116 = arith.constant 9.99999974E-6 : f32
    %392 = vector.broadcast %cst_116 : f32 to vector<32x1xf32>
    %393 = arith.addf %389, %392 : vector<32x1xf32>
    %394 = math.rsqrt %393 : vector<32x1xf32>
    %395 = vector.broadcast %394 : vector<32x1xf32> to vector<32x128xf32>
    %396 = arith.mulf %391, %395 : vector<32x128xf32>
    %397 = arith.truncf %396 : vector<32x128xf32> to vector<32x128xbf16>
    %c1_117 = arith.constant 1 : index
    %c0_118 = arith.constant 0 : index
    %c512_119 = arith.constant 512 : index
    %398 = vector.load %arg2[%c1_117, %c0_118, %c512_119] : memref<2x128x1024xbf16, #tpu.memory_space<vmem>>, vector<1x128x512xbf16>
    %399 = vector.shape_cast %398 : vector<1x128x512xbf16> to vector<128x512xbf16>
    %cst_120 = arith.constant dense<0.000000e+00> : vector<32x512xf32>
    %400 = tpu.matmul %397, %399, %cst_120 {dimension_numbers = #tpu.dot_dimension_numbers<[1], [0], [0], [1], [0, 0, 1, 1], [], []>} : vector<32x128xbf16>, vector<128x512xbf16>, vector<32x512xf32> -> vector<32x512xf32>
    %c0_121 = arith.constant 0 : index
    %c1664 = arith.constant 1664 : index
    %401 = vector.load %arg5[%c0_121, %c1664] : memref<1x2560xf32, #tpu.memory_space<vmem>>, vector<1x512xf32>
    %402 = vector.broadcast %401 : vector<1x512xf32> to vector<32x512xf32>
    %403 = arith.addf %400, %402 : vector<32x512xf32>
    %cst_122 = arith.constant 0.000000e+00 : f32
    %404 = vector.broadcast %cst_122 : f32 to vector<32x512xf32>
    %405 = arith.maximumf %403, %404 : vector<32x512xf32>
    %406 = arith.truncf %405 : vector<32x512xf32> to vector<32x512xbf16>
    %c1_123 = arith.constant 1 : index
    %c0_124 = arith.constant 0 : index
    %c0_125 = arith.constant 0 : index
    %407 = vector.load %arg3[%c1_123, %c0_124, %c0_125] : memref<2x512x128xbf16, #tpu.memory_space<vmem>>, vector<1x512x128xbf16>
    %408 = vector.shape_cast %407 : vector<1x512x128xbf16> to vector<512x128xbf16>
    %cst_126 = arith.constant dense<0.000000e+00> : vector<32x128xf32>
    %409 = tpu.matmul %406, %408, %cst_126 {dimension_numbers = #tpu.dot_dimension_numbers<[1], [0], [0], [1], [0, 0, 1, 1], [], []>} : vector<32x512xbf16>, vector<512x128xbf16>, vector<32x128xf32> -> vector<32x128xf32>
    %c0_127 = arith.constant 0 : index
    %c2176 = arith.constant 2176 : index
    %410 = vector.load %arg5[%c0_127, %c2176] : memref<1x2560xf32, #tpu.memory_space<vmem>>, vector<1x128xf32>
    %411 = vector.broadcast %410 : vector<1x128xf32> to vector<32x128xf32>
    %412 = arith.addf %409, %411 : vector<32x128xf32>
    %413 = arith.addf %378, %412 : vector<32x128xf32>
    %414 = arith.truncf %413 : vector<32x128xf32> to vector<32x128xbf16>
    %c0_128 = arith.constant 0 : index
    %c0_129 = arith.constant 0 : index
    %415 = vector.load %arg4[%c0_128, %c0_129] : memref<128x256xbf16, #tpu.memory_space<vmem>>, vector<128x128xbf16>
    %cst_130 = arith.constant dense<0.000000e+00> : vector<32x128xf32>
    %416 = tpu.matmul %414, %415, %cst_130 {dimension_numbers = #tpu.dot_dimension_numbers<[1], [0], [0], [1], [0, 0, 1, 1], [], []>} : vector<32x128xbf16>, vector<128x128xbf16>, vector<32x128xf32> -> vector<32x128xf32>
    %c0_131 = arith.constant 0 : index
    %c2304 = arith.constant 2304 : index
    %417 = vector.load %arg5[%c0_131, %c2304] : memref<1x2560xf32, #tpu.memory_space<vmem>>, vector<1x128xf32>
    %418 = vector.broadcast %417 : vector<1x128xf32> to vector<32x128xf32>
    %419 = arith.addf %416, %418 : vector<32x128xf32>
    %420 = arith.mulf %419, %419 : vector<32x128xf32>
    %421 = arith.mulf %419, %420 : vector<32x128xf32>
    %cst_132 = arith.constant 4.471500e-02 : f32
    %422 = vector.broadcast %cst_132 : f32 to vector<32x128xf32>
    %423 = arith.mulf %422, %421 : vector<32x128xf32>
    %424 = arith.addf %419, %423 : vector<32x128xf32>
    %cst_133 = arith.constant 0.797884583 : f32
    %425 = vector.broadcast %cst_133 : f32 to vector<32x128xf32>
    %426 = arith.mulf %425, %424 : vector<32x128xf32>
    %427 = math.tanh %426 : vector<32x128xf32>
    %cst_134 = arith.constant 1.000000e+00 : f32
    %428 = vector.broadcast %cst_134 : f32 to vector<32x128xf32>
    %429 = arith.addf %428, %427 : vector<32x128xf32>
    %cst_135 = arith.constant 5.000000e-01 : f32
    %430 = vector.broadcast %cst_135 : f32 to vector<32x128xf32>
    %431 = arith.mulf %430, %429 : vector<32x128xf32>
    %432 = arith.mulf %419, %431 : vector<32x128xf32>
    %433 = arith.truncf %432 : vector<32x128xf32> to vector<32x128xbf16>
    %c0_136 = arith.constant 0 : index
    %c128 = arith.constant 128 : index
    %434 = vector.load %arg4[%c0_136, %c128] : memref<128x256xbf16, #tpu.memory_space<vmem>>, vector<128x128xbf16>
    %cst_137 = arith.constant dense<0.000000e+00> : vector<32x128xf32>
    %435 = tpu.matmul %433, %434, %cst_137 {dimension_numbers = #tpu.dot_dimension_numbers<[1], [0], [0], [1], [0, 0, 1, 1], [], []>} : vector<32x128xbf16>, vector<128x128xbf16>, vector<32x128xf32> -> vector<32x128xf32>
    %c0_138 = arith.constant 0 : index
    %c2432 = arith.constant 2432 : index
    %436 = vector.load %arg5[%c0_138, %c2432] : memref<1x2560xf32, #tpu.memory_space<vmem>>, vector<1x128xf32>
    %437 = vector.broadcast %436 : vector<1x128xf32> to vector<32x128xf32>
    %438 = arith.addf %435, %437 : vector<32x128xf32>
    %c0_139 = arith.constant 0 : index
    %c0_140 = arith.constant 0 : index
    %439 = vector.load %arg6[%c0_139, %c0_140] : memref<32x128xf32, #tpu.memory_space<vmem>>, vector<32x128xf32>
    tpu.vector_store %arg6[%c0_139, %c0_140], %438 {strides = array<i32>} : memref<32x128xf32, #tpu.memory_space<vmem>>, vector<32x128xf32>,
    return
  }
}

</mosaic_0001>

<llo_original>
// kernel: tpu_custom_call.1
$region0: #{tpu_custom_call.1}
  #allocation0 [shape = 'u32[]', space=smem, size = 0x4, offset = 0x4, fixed_abs, tag = 'smem constant byte address 0x4 - core index']
  #allocation1 [shape = 'u32[144,128]{1,0:T(1,128)}', space=vmem, size = 0x12000, scoped, tag = 'internal scratch']
  %s0 = inlined_call_operand.hbm [shape: f32[32,128], index: 0, kind: input, shape index: {}]
  %s1 = inlined_call_operand.hbm [shape: f32[32,32], index: 1, kind: input, shape index: {}]
  %s2 = inlined_call_operand.hbm [shape: bf16[2,128,1024], index: 2, kind: input, shape index: {}]
  %s3 = inlined_call_operand.hbm [shape: bf16[2,512,128], index: 3, kind: input, shape index: {}]
  %s4 = inlined_call_operand.hbm [shape: bf16[128,256], index: 4, kind: input, shape index: {}]
  %s5 = inlined_call_operand.hbm [shape: f32[1,2560], index: 5, kind: input, shape index: {}]
  %s6 = inlined_call_operand.hbm [shape: f32[32,128], index: 6, kind: output, shape index: {}]
  %s7 = sld [smem:[#allocation0]]
  $region58: #{tpu_custom_call.1} parent=0
    _
  %s9 = ssub.s32 1, %s7
  %s10 = scalar_select 0, %s9, %s7
  $region1: #{tpu_custom_call.1} parent=0
    #allocation2 [shape = 'u8[16384]{0}', space=vmem, size = 0x4000, scoped, tag = 'input window, operand 0, single buffered']
    #allocation3 [shape = 's32[1]{0}', space=sflag, size = 0x4, scoped, tag = 'scoped memory for tpu_custom_call.1']
    #allocation4 [shape = 's32[1]{0}', space=sflag, size = 0x4, scoped, tag = 'scoped memory for tpu_custom_call.1']
    #allocation5 [shape = 'u8[16384]{0}', space=vmem, size = 0x4000, scoped, tag = 'input window, operand 1, single buffered']
    #allocation6 [shape = 's32[1]{0}', space=sflag, size = 0x4, scoped, tag = 'scoped memory for tpu_custom_call.1']
    #allocation7 [shape = 'u8[524288]{0}', space=vmem, size = 0x80000, scoped, tag = 'input window, operand 2, single buffered']
    #allocation8 [shape = 'u8[262144]{0}', space=vmem, size = 0x40000, scoped, tag = 'input window, operand 3, single buffered']
    #allocation9 [shape = 's32[1]{0}', space=sflag, size = 0x4, scoped, tag = 'scoped memory for tpu_custom_call.1']
    #allocation10 [shape = 'u8[65536]{0}', space=vmem, size = 0x10000, scoped, tag = 'input window, operand 4, single buffered']
    #allocation11 [shape = 'u8[10240]{0}', space=vmem, size = 0x2800, scoped, tag = 'input window, operand 5, single buffered']
    #allocation12 [shape = 's32[1]{0}', space=sflag, size = 0x4, scoped, tag = 'scoped memory for tpu_custom_call.1']
    #allocation13 [shape = 'u8[16384]{0}', space=vmem, size = 0x4000, scoped, tag = 'output window, operand 0, single buffered']
    %11 = vsyncpa [#allocation3], 0
    %12 = vsyncpa [#allocation6], 0
    %13 = vsyncpa [#allocation9], 0
    %14 = vsyncpa [#allocation12], 0
    %15 = vsyncpa [#allocation4], 0
    // Predicated region
    $region2: #{tpu_custom_call.1} parent=1 // pred_check
      _
    $region3: #{tpu_custom_call.1} parent=1 // pred_check_branch
      %17 = sbr.rel (0) target = $region5
    $region4: #{tpu_custom_call.1} parent=1 // pred_region
      %s19 = ssub.s32 512, 512
      %20 = vsyncadd [#allocation3], %s19
      %s21 = sshll.u32 [#allocation2], 4
      %s22 = int_to_ptr.vmem [resolvable:$true] %s21
      %27 = dma.hbm_to_vmem [thread:$0]  %s0, 512, %s22, [#allocation3], 128, 128, 8
    $region5: #{tpu_custom_call.1} parent=1 // pred_fallthru
      _
    // Predicated region
    $region6: #{tpu_custom_call.1} parent=1 // pred_check
      _
    $region7: #{tpu_custom_call.1} parent=1 // pred_check_branch
      %29 = sbr.rel (0) target = $region9
    $region8: #{tpu_custom_call.1} parent=1 // pred_region
      %s31 = ssub.s32 512, 512
      %32 = vsyncadd [#allocation6], %s31
      %s33 = sshll.u32 [#allocation5], 4
      %s34 = int_to_ptr.vmem [resolvable:$true] %s33
      %39 = dma.hbm_to_vmem [thread:$0]  %s1, 512, %s34, [#allocation6], 128, 128, 8
    $region9: #{tpu_custom_call.1} parent=1 // pred_fallthru
      _
    // Predicated region
    $region10: #{tpu_custom_call.1} parent=1 // pred_check
      _
    $region11: #{tpu_custom_call.1} parent=1 // pred_check_branch
      %41 = sbr.rel (0) target = $region13
    $region12: #{tpu_custom_call.1} parent=1 // pred_region
      %s43 = ssub.s32 16384, 16384
      %44 = vsyncadd [#allocation6], %s43
      %s45 = sshll.u32 [#allocation7], 4
      %s46 = int_to_ptr.vmem [resolvable:$true] %s45
      %51 = dma.hbm_to_vmem [thread:$0]  %s2, 16384, %s46, [#allocation6], 512, 512, 32
    $region13: #{tpu_custom_call.1} parent=1 // pred_fallthru
      _
    // Predicated region
    $region14: #{tpu_custom_call.1} parent=1 // pred_check
      _
    $region15: #{tpu_custom_call.1} parent=1 // pred_check_branch
      %53 = sbr.rel (0) target = $region17
    $region16: #{tpu_custom_call.1} parent=1 // pred_region
      %s55 = ssub.s32 8192, 8192
      %56 = vsyncadd [#allocation9], %s55
      %s57 = sshll.u32 [#allocation8], 4
      %s58 = int_to_ptr.vmem [resolvable:$true] %s57
      %63 = dma.hbm_to_vmem [thread:$0]  %s3, 8192, %s58, [#allocation9], 64, 64, 4
    $region17: #{tpu_custom_call.1} parent=1 // pred_fallthru
      _
    // Predicated region
    $region18: #{tpu_custom_call.1} parent=1 // pred_check
      _
    $region19: #{tpu_custom_call.1} parent=1 // pred_check_branch
      %65 = sbr.rel (0) target = $region21
    $region20: #{tpu_custom_call.1} parent=1 // pred_region
      %s67 = ssub.s32 2048, 2048
      %68 = vsyncadd [#allocation9], %s67
      %s69 = sshll.u32 [#allocation10], 4
      %s70 = int_to_ptr.vmem [resolvable:$true] %s69
      %75 = dma.hbm_to_vmem [thread:$0]  %s4, 2048, %s70, [#allocation9], 128, 128, 8
    $region21: #{tpu_custom_call.1} parent=1 // pred_fallthru
      _
    // Predicated region
    $region22: #{tpu_custom_call.1} parent=1 // pred_check
      _
    $region23: #{tpu_custom_call.1} parent=1 // pred_check_branch
      %77 = sbr.rel (0) target = $region25
    $region24: #{tpu_custom_call.1} parent=1 // pred_region
      %s79 = ssub.s32 320, 320
      %80 = vsyncadd [#allocation12], %s79
      %s82 = sshll.u32 [#allocation11], 4
      %s83 = int_to_ptr.vmem [resolvable:$true] %s82
      %85 = dma.hbm_to_vmem [thread:$0]  %s5, 320, %s83, [#allocation12]
    $region25: #{tpu_custom_call.1} parent=1 // pred_fallthru
      _
    // Predicated region
    $region26: #{tpu_custom_call.1} parent=1 // pred_check
      _
    $region27: #{tpu_custom_call.1} parent=1 // pred_check_branch
      %87 = sbr.rel (0) target = $region29
    $region28: #{tpu_custom_call.1} parent=1 // pred_region
      %88 = dma.done [#allocation3], 512
    $region29: #{tpu_custom_call.1} parent=1 // pred_fallthru
      _
    // Predicated region
    $region30: #{tpu_custom_call.1} parent=1 // pred_check
      _
    $region31: #{tpu_custom_call.1} parent=1 // pred_check_branch
      %90 = sbr.rel (0) target = $region33
    $region32: #{tpu_custom_call.1} parent=1 // pred_region
      %91 = dma.done [#allocation6], 512
    $region33: #{tpu_custom_call.1} parent=1 // pred_fallthru
      _
    // Predicated region
    $region34: #{tpu_custom_call.1} parent=1 // pred_check
      _
    $region35: #{tpu_custom_call.1} parent=1 // pred_check_branch
      %93 = sbr.rel (0) target = $region37
    $region36: #{tpu_custom_call.1} parent=1 // pred_region
      %94 = dma.done [#allocation6], 16384
    $region37: #{tpu_custom_call.1} parent=1 // pred_fallthru
      _
    // Predicated region
    $region38: #{tpu_custom_call.1} parent=1 // pred_check
      _
    $region39: #{tpu_custom_call.1} parent=1 // pred_check_branch
      %96 = sbr.rel (0) target = $region41
    $region40: #{tpu_custom_call.1} parent=1 // pred_region
      %97 = dma.done [#allocation9], 8192
    $region41: #{tpu_custom_call.1} parent=1 // pred_fallthru
      _
    // Predicated region
    $region42: #{tpu_custom_call.1} parent=1 // pred_check
      _
    $region43: #{tpu_custom_call.1} parent=1 // pred_check_branch
      %99 = sbr.rel (0) target = $region45
    $region44: #{tpu_custom_call.1} parent=1 // pred_region
      %100 = dma.done [#allocation9], 2048
    $region45: #{tpu_custom_call.1} parent=1 // pred_fallthru
      _
    // Predicated region
    $region46: #{tpu_custom_call.1} parent=1 // pred_check
      _
    $region47: #{tpu_custom_call.1} parent=1 // pred_check_branch
      %102 = sbr.rel (0) target = $region49
    $region48: #{tpu_custom_call.1} parent=1 // pred_region
      %103 = dma.done [#allocation12], 320
    $region49: #{tpu_custom_call.1} parent=1 // pred_fallthru
      _
    %v105 = vld [vmem:[#allocation2] sm:$0xff]
    %v106 = vld [vmem:[#allocation2 + $0x8] sm:$0xff]
    %v107 = vld [vmem:[#allocation2 + $0x10] sm:$0xff]
    %v108 = vld [vmem:[#allocation2 + $0x18] sm:$0xff]
    %v109 = vld [vmem:[#allocation5] sm:$0xff]
    %v110 = vld [vmem:[#allocation5 + $0x8] sm:$0xff]
    %v111 = vld [vmem:[#allocation5 + $0x10] sm:$0xff]
    %v112 = vld [vmem:[#allocation5 + $0x18] sm:$0xff]
    %113 = vadd.xlane.f32.xlu0 %v105
    %v114 = vpop.xlane.xlu0 %113
    %115 = vadd.xlane.f32.xlu0 %v106
    %v116 = vpop.xlane.xlu0 %115
    %117 = vadd.xlane.f32.xlu0 %v107
    %v118 = vpop.xlane.xlu0 %117
    %119 = vadd.xlane.f32.xlu0 %v108
    %v120 = vpop.xlane.xlu0 %119
    %v121 = vrcp.pop 128.0
    %v122 = vmul.f32 %v114, %v121
    %v123 = vmul.f32 %v116, %v121
    %v124 = vmul.f32 %v118, %v121
    %v125 = vmul.f32 %v120, %v121
    %v126 = vsub.f32 %v105, %v122
    %v127 = vsub.f32 %v106, %v123
    %v128 = vsub.f32 %v107, %v124
    %v129 = vsub.f32 %v108, %v125
    %v130 = vmul.f32 %v126, %v126
    %v131 = vmul.f32 %v127, %v127
    %v132 = vmul.f32 %v128, %v128
    %v133 = vmul.f32 %v129, %v129
    %134 = vadd.xlane.f32.xlu0 %v130
    %v135 = vpop.xlane.xlu0 %134
    %136 = vadd.xlane.f32.xlu0 %v131
    %v137 = vpop.xlane.xlu0 %136
    %138 = vadd.xlane.f32.xlu0 %v132
    %v139 = vpop.xlane.xlu0 %138
    %140 = vadd.xlane.f32.xlu0 %v133
    %v141 = vpop.xlane.xlu0 %140
    %v142 = vmul.f32 %v135, %v121
    %v143 = vmul.f32 %v137, %v121
    %v144 = vmul.f32 %v139, %v121
    %v145 = vmul.f32 %v141, %v121
    %v146 = vadd.f32 %v142, 1e-05
    %v147 = vadd.f32 %v143, 1e-05
    %v148 = vadd.f32 %v144, 1e-05
    %v149 = vadd.f32 %v145, 1e-05
    %v150 = vrsqrt.pop %v146
    %v151 = vrsqrt.pop %v147
    %v152 = vrsqrt.pop %v148
    %v153 = vrsqrt.pop %v149
    %v154 = vmul.f32 %v126, %v150
    %v155 = vmul.f32 %v127, %v151
    %v156 = vmul.f32 %v128, %v152
    %v157 = vmul.f32 %v129, %v153
    %v158 = vpack.c.bf16 %v155, %v154
    %v159 = vpack.c.bf16 %v157, %v156
    %v160 = vld [vmem:[#allocation7] sm:$0xff]
    %v161 = vld [vmem:[#allocation7 + $0x8] sm:$0xf]
    %v162 = vld [vmem:[#allocation7 + $0x20] sm:$0xff]
    %v163 = vld [vmem:[#allocation7 + $0x28] sm:$0xf]
    %v164 = vld [vmem:[#allocation7 + $0x40] sm:$0xff]
    %v165 = vld [vmem:[#allocation7 + $0x48] sm:$0xf]
    %v166 = vld [vmem:[#allocation7 + $0x60] sm:$0xff]
    %v167 = vld [vmem:[#allocation7 + $0x68] sm:$0xf]
    %v168 = vld [vmem:[#allocation7 + $0x80] sm:$0xff]
    %v169 = vld [vmem:[#allocation7 + $0x88] sm:$0xf]
    %v170 = vld [vmem:[#allocation7 + $0xa0] sm:$0xff]
    %v171 = vld [vmem:[#allocation7 + $0xa8] sm:$0xf]
    %v172 = vld [vmem:[#allocation7 + $0xc0] sm:$0xff]
    %v173 = vld [vmem:[#allocation7 + $0xc8] sm:$0xf]
    %v174 = vld [vmem:[#allocation7 + $0xe0] sm:$0xff]
    %v175 = vld [vmem:[#allocation7 + $0xe8] sm:$0xf]
    %v176 = vld [vmem:[#allocation7 + $0x100] sm:$0xff]
    %v177 = vld [vmem:[#allocation7 + $0x108] sm:$0xf]
    %v178 = vld [vmem:[#allocation7 + $0x120] sm:$0xff]
    %v179 = vld [vmem:[#allocation7 + $0x128] sm:$0xf]
    %v180 = vld [vmem:[#allocation7 + $0x140] sm:$0xff]
    %v181 = vld [vmem:[#allocation7 + $0x148] sm:$0xf]
    %v182 = vld [vmem:[#allocation7 + $0x160] sm:$0xff]
    %v183 = vld [vmem:[#allocation7 + $0x168] sm:$0xf]
    %v184 = vld [vmem:[#allocation7 + $0x180] sm:$0xff]
    %v185 = vld [vmem:[#allocation7 + $0x188] sm:$0xf]
    %v186 = vld [vmem:[#allocation7 + $0x1a0] sm:$0xff]
    %v187 = vld [vmem:[#allocation7 + $0x1a8] sm:$0xf]
    %v188 = vld [vmem:[#allocation7 + $0x1c0] sm:$0xff]
    %v189 = vld [vmem:[#allocation7 + $0x1c8] sm:$0xf]
    %v190 = vld [vmem:[#allocation7 + $0x1e0] sm:$0xff]
    %v191 = vld [vmem:[#allocation7 + $0x1e8] sm:$0xf]
    %v192 = vld [vmem:[#allocation11] sm:$0x7]
    %v194 = vlaneseq
    %v195 = vshrl.u32 %v194, 7
    %v196 = vsub.s32 0, %v195
    %v197 = vrot.slane %v192, %v196
    %v198 = vlaneseq
    %v199 = vshrl.u32 %v198, 7
    %v200 = vsub.s32 1, %v199
    %v201 = vrot.slane %v192, %v200
    %v202 = vlaneseq
    %v203 = vshrl.u32 %v202, 7
    %v204 = vsub.s32 2, %v203
    %v205 = vrot.slane %v192, %v204
    %v241 = vunpack.c.l.b16 %v160
    %v242 = vunpack.c.h.b16 %v160
    %v243 = vunpack.c.l.b16 %v161
    %v244 = vunpack.c.l.b16 %v162
    %v245 = vunpack.c.h.b16 %v162
    %v246 = vunpack.c.l.b16 %v163
    %v247 = vunpack.c.l.b16 %v164
    %v248 = vunpack.c.h.b16 %v164
    %v249 = vunpack.c.l.b16 %v165
    %v250 = vunpack.c.l.b16 %v166
    %v251 = vunpack.c.h.b16 %v166
    %v252 = vunpack.c.l.b16 %v167
    %v253 = vunpack.c.l.b16 %v168
    %v254 = vunpack.c.h.b16 %v168
    %v255 = vunpack.c.l.b16 %v169
    %v256 = vunpack.c.l.b16 %v170
    %v257 = vunpack.c.h.b16 %v170
    %v258 = vunpack.c.l.b16 %v171
    %v259 = vunpack.c.l.b16 %v172
    %v260 = vunpack.c.h.b16 %v172
    %v261 = vunpack.c.l.b16 %v173
    %v262 = vunpack.c.l.b16 %v174
    %v263 = vunpack.c.h.b16 %v174
    %v264 = vunpack.c.l.b16 %v175
    %v265 = vunpack.c.l.b16 %v176
    %v266 = vunpack.c.h.b16 %v176
    %v267 = vunpack.c.l.b16 %v177
    %v268 = vunpack.c.l.b16 %v178
    %v269 = vunpack.c.h.b16 %v178
    %v270 = vunpack.c.l.b16 %v179
    %v271 = vunpack.c.l.b16 %v180
    %v272 = vunpack.c.h.b16 %v180
    %v273 = vunpack.c.l.b16 %v181
    %v274 = vunpack.c.l.b16 %v182
    %v275 = vunpack.c.h.b16 %v182
    %v276 = vunpack.c.l.b16 %v183
    %v277 = vunpack.c.l.b16 %v184
    %v278 = vunpack.c.h.b16 %v184
    %v279 = vunpack.c.l.b16 %v185
    %v280 = vunpack.c.l.b16 %v186
    %v281 = vunpack.c.h.b16 %v186
    %v282 = vunpack.c.l.b16 %v187
    %v283 = vunpack.c.l.b16 %v188
    %v284 = vunpack.c.h.b16 %v188
    %v285 = vunpack.c.l.b16 %v189
    %v286 = vunpack.c.l.b16 %v190
    %v287 = vunpack.c.h.b16 %v190
    %v288 = vunpack.c.l.b16 %v191
    %v289 = vpack.c.b16 %v244, %v241
    %v290 = vpack.c.b16 %v245, %v242
    %v291 = vpack.c.b16 %v246, %v243
    %v292 = vpack.c.b16 %v250, %v247
    %v293 = vpack.c.b16 %v251, %v248
    %v294 = vpack.c.b16 %v252, %v249
    %v295 = vpack.c.b16 %v256, %v253
    %v296 = vpack.c.b16 %v257, %v254
    %v297 = vpack.c.b16 %v258, %v255
    %v298 = vpack.c.b16 %v262, %v259
    %v299 = vpack.c.b16 %v263, %v260
    %v300 = vpack.c.b16 %v264, %v261
    %v301 = vpack.c.b16 %v268, %v265
    %v302 = vpack.c.b16 %v269, %v266
    %v303 = vpack.c.b16 %v270, %v267
    %v304 = vpack.c.b16 %v274, %v271
    %v305 = vpack.c.b16 %v275, %v272
    %v306 = vpack.c.b16 %v276, %v273
    %v307 = vpack.c.b16 %v280, %v277
    %v308 = vpack.c.b16 %v281, %v278
    %v309 = vpack.c.b16 %v282, %v279
    %v310 = vpack.c.b16 %v286, %v283
    %v311 = vpack.c.b16 %v287, %v284
    %v312 = vpack.c.b16 %v288, %v285
    %337 = vmatprep.subr.bf16.mxu0 %v290
    %338 = vmatpush1.bf16.msra.mxu0 %v289
    %339 = vmatprep.subr.bf16.mxu0 %v293
    %340 = vmatpush1.bf16.msra.mxu0 %v292
    %341 = vmatprep.subr.bf16.mxu0 %v296
    %342 = vmatpush1.bf16.msra.mxu0 %v295
    %343 = vmatprep.subr.bf16.mxu0 %v299
    %344 = vmatpush1.bf16.msra.mxu0 %v298
    %345 = vmatprep.subr.bf16.mxu0 %v302
    %346 = vmatpush1.bf16.msra.mxu0 %v301
    %347 = vmatprep.subr.bf16.mxu0 %v305
    %348 = vmatpush1.bf16.msra.mxu0 %v304
    %349 = vmatprep.subr.bf16.mxu0 %v308
    %350 = vmatpush1.bf16.msra.mxu0 %v307
    %351 = vmatprep.subr.bf16.mxu0 %v311
    %352 = vmatpush1.bf16.msra.mxu0 %v310
    %353 = vmatprep.subr.bf16.mxu0 0
    %354 = vmatpush1.bf16.msra.mxu0 0
    %355 = vmatprep.subr.bf16.mxu0 0
    %356 = vmatpush1.bf16.msra.mxu0 0
    %357 = vmatprep.subr.bf16.mxu0 0
    %358 = vmatpush1.bf16.msra.mxu0 0
    %359 = vmatprep.subr.bf16.mxu0 0
    %360 = vmatpush1.bf16.msra.mxu0 0
    %361 = vmatprep.subr.bf16.mxu0 0
    %362 = vmatpush1.bf16.msra.mxu0 0
    %363 = vmatprep.subr.bf16.mxu0 0
    %364 = vmatpush1.bf16.msra.mxu0 0
    %365 = vmatprep.subr.bf16.mxu0 0
    %366 = vmatpush1.bf16.msra.mxu0 0
    %367 = vmatprep.subr.bf16.mxu0 0
    %368 = vmatpush1.bf16.msra.mxu0 0
    %369 = vmatprep.mubr.bf16.mxu0 0
    %370 = vmatmul.mubr.bf16.gmra.mrb[0].mxu0 %v158
    %v371 = vpop.f32.mrb[0].mxu0
    %v372 = vadd.f32 %v197, %v371
    %v373 = vpop.f32.mrb[0].mxu0
    %v374 = vadd.f32 %v201, %v373
    %v375 = vpop.f32.mrb[0].mxu0
    %v376 = vadd.f32 %v197, %v375
    %v377 = vpop.f32.mrb[0].mxu0
    %v378 = vadd.f32 %v201, %v377
    %379 = vmatprep.mubr.bf16.mxu0 0
    %380 = vmatmul.mubr.bf16.gmra.mrb[0].mxu0 %v159
    %v381 = vpop.f32.mrb[0].mxu0
    %v382 = vadd.f32 %v197, %v381
    %v383 = vpop.f32.mrb[0].mxu0
    %v384 = vadd.f32 %v201, %v383
    %v385 = vpop.f32.mrb[0].mxu0
    %v386 = vadd.f32 %v197, %v385
    %v387 = vpop.f32.mrb[0].mxu0
    %v388 = vadd.f32 %v201, %v387
    %389 = vdwg.mxu0
    %390 = vmatprep.subr.bf16.mxu0 0
    %391 = vmatpush1.bf16.msra.mxu0 %v291
    %392 = vmatprep.subr.bf16.mxu0 0
    %393 = vmatpush1.bf16.msra.mxu0 %v294
    %394 = vmatprep.subr.bf16.mxu0 0
    %395 = vmatpush1.bf16.msra.mxu0 %v297
    %396 = vmatprep.subr.bf16.mxu0 0
    %397 = vmatpush1.bf16.msra.mxu0 %v300
    %398 = vmatprep.subr.bf16.mxu0 0
    %399 = vmatpush1.bf16.msra.mxu0 %v303
    %400 = vmatprep.subr.bf16.mxu0 0
    %401 = vmatpush1.bf16.msra.mxu0 %v306
    %402 = vmatprep.subr.bf16.mxu0 0
    %403 = vmatpush1.bf16.msra.mxu0 %v309
    %404 = vmatprep.subr.bf16.mxu0 0
    %405 = vmatpush1.bf16.msra.mxu0 %v312
    %406 = vmatprep.subr.bf16.mxu0 0
    %407 = vmatpush1.bf16.msra.mxu0 0
    %408 = vmatprep.subr.bf16.mxu0 0
    %409 = vmatpush1.bf16.msra.mxu0 0
    %410 = vmatprep.subr.bf16.mxu0 0
    %411 = vmatpush1.bf16.msra.mxu0 0
    %412 = vmatprep.subr.bf16.mxu0 0
    %413 = vmatpush1.bf16.msra.mxu0 0
    %414 = vmatprep.subr.bf16.mxu0 0
    %415 = vmatpush1.bf16.msra.mxu0 0
    %416 = vmatprep.subr.bf16.mxu0 0
    %417 = vmatpush1.bf16.msra.mxu0 0
    %418 = vmatprep.subr.bf16.mxu0 0
    %419 = vmatpush1.bf16.msra.mxu0 0
    %420 = vmatprep.subr.bf16.mxu0 0
    %421 = vmatpush1.bf16.msra.mxu0 0
    %422 = vmatprep.mubr.bf16.mxu0 0
    %423 = vmatmul.mubr.bf16.gmra.mrb[0].mxu0 %v158
    %v424 = vpop.f32.mrb[0].mxu0
    %v425 = vadd.f32 %v205, %v424
    %v426 = vpop.f32.mrb[0].mxu0
    %v427 = vpop.f32.mrb[0].mxu0
    %v428 = vadd.f32 %v205, %v427
    %v429 = vpop.f32.mrb[0].mxu0
    %430 = vmatprep.mubr.bf16.mxu0 0
    %431 = vmatmul.mubr.bf16.gmra.mrb[0].mxu0 %v159
    %v432 = vpop.f32.mrb[0].mxu0
    %v433 = vadd.f32 %v205, %v432
    %v434 = vpop.f32.mrb[0].mxu0
    %v435 = vpop.f32.mrb[0].mxu0
    %v436 = vadd.f32 %v205, %v435
    %v437 = vpop.f32.mrb[0].mxu0
    %438 = vdwg.mxu0
    %v439 = vpack.c.bf16 %v376, %v372
    %v440 = vpack.c.bf16 %v378, %v374
    %v441 = vpack.c.bf16 %v428, %v425
    %v442 = vpack.c.bf16 %v386, %v382
    %v443 = vpack.c.bf16 %v388, %v384
    %v444 = vpack.c.bf16 %v436, %v433
    %vm445 = vcmask 130048
    %v447 = vsel %vm445, %v439, 0
    %v450 = vsel %vm445, %v442, 0
    %v453 = vsel %vm445, %v440, 0
    %v456 = vsel %vm445, %v443, 0
    %458 = vmatprep.subr.bf16.mxu0 0
    %459 = vmatpush1.bf16.xpose.msra.mxu0 %v453
    %460 = vmatprep.subr.bf16.mxu0 0
    %461 = vmatpush1.bf16.xpose.msra.mxu0 %v456
    %462 = vmatprep.subr.bf16.mxu0 0
    %463 = vmatpush1.bf16.xpose.msra.mxu0 0
    %464 = vmatprep.subr.bf16.mxu0 0
    %465 = vmatpush1.bf16.xpose.msra.mxu0 0
    %466 = vmatprep.subr.bf16.mxu0 0
    %467 = vmatpush1.bf16.xpose.msra.mxu0 0
    %468 = vmatprep.subr.bf16.mxu0 0
    %469 = vmatpush1.bf16.xpose.msra.mxu0 0
    %470 = vmatprep.subr.bf16.mxu0 0
    %471 = vmatpush1.bf16.xpose.msra.mxu0 0
    %472 = vmatprep.subr.bf16.mxu0 0
    %473 = vmatpush1.bf16.xpose.msra.mxu0 0
    %474 = vmatprep.subr.bf16.mxu0 0
    %475 = vmatpush1.bf16.xpose.msra.mxu0 0
    %476 = vmatprep.subr.bf16.mxu0 0
    %477 = vmatpush1.bf16.xpose.msra.mxu0 0
    %478 = vmatprep.subr.bf16.mxu0 0
    %479 = vmatpush1.bf16.xpose.msra.mxu0 0
    %480 = vmatprep.subr.bf16.mxu0 0
    %481 = vmatpush1.bf16.xpose.msra.mxu0 0
    %482 = vmatprep.subr.bf16.mxu0 0
    %483 = vmatpush1.bf16.xpose.msra.mxu0 0
    %484 = vmatprep.subr.bf16.mxu0 0
    %485 = vmatpush1.bf16.xpose.msra.mxu0 0
    %486 = vmatprep.subr.bf16.mxu0 0
    %487 = vmatpush1.bf16.xpose.msra.mxu0 0
    %488 = vmatprep.subr.bf16.mxu0 0
    %489 = vmatpush1.bf16.xpose.msra.mxu0 0
    %490 = vmatprep.mubr.bf16.mxu0 0
    %491 = vmatmul.mubr.bf16.gmra.mrb[0].mxu0 %v447
    %v492 = vpop.f32.mrb[0].mxu0
    %v493 = vadd.f32 %v109, %v492
    %v494 = vpop.f32.mrb[0].mxu0
    %v495 = vpop.f32.mrb[0].mxu0
    %v496 = vadd.f32 %v110, %v495
    %v497 = vpop.f32.mrb[0].mxu0
    %498 = vmatprep.mubr.bf16.mxu0 0
    %499 = vmatmul.mubr.bf16.gmra.mrb[0].mxu0 %v450
    %v500 = vpop.f32.mrb[0].mxu0
    %v501 = vadd.f32 %v111, %v500
    %v502 = vpop.f32.mrb[0].mxu0
    %v503 = vpop.f32.mrb[0].mxu0
    %v504 = vadd.f32 %v112, %v503
    %v505 = vpop.f32.mrb[0].mxu0
    %506 = vdwg.mxu0
    %vm507 = vcmask 261120
    %v508 = vsel %vm507, %v493, -inf
    %509 = vmax.xlane.f32.xlu0 %v508
    %v510 = vpop.xlane.xlu0 %509
    %v511 = vsel %vm507, %v496, -inf
    %512 = vmax.xlane.f32.xlu0 %v511
    %v513 = vpop.xlane.xlu0 %512
    %v514 = vsel %vm507, %v501, -inf
    %515 = vmax.xlane.f32.xlu0 %v514
    %v516 = vpop.xlane.xlu0 %515
    %v517 = vsel %vm507, %v504, -inf
    %518 = vmax.xlane.f32.xlu0 %v517
    %v519 = vpop.xlane.xlu0 %518
    %v520 = vsub.f32 %v493, %v510
    %v521 = vsub.f32 %v496, %v513
    %v522 = vsub.f32 %v501, %v516
    %v523 = vsub.f32 %v504, %v519
    %v524 = vmul.f32 %v520, 1.442695
    %v525 = vpow.pop %v524
    %v526 = vmul.f32 %v521, 1.442695
    %v527 = vpow.pop %v526
    %v528 = vmul.f32 %v522, 1.442695
    %v529 = vpow.pop %v528
    %v530 = vmul.f32 %v523, 1.442695
    %v531 = vpow.pop %v530
    %v532 = vsel %vm507, %v525, 0.0
    %533 = vadd.xlane.f32.xlu0 %v532
    %v534 = vpop.xlane.xlu0 %533
    %v535 = vsel %vm507, %v527, 0.0
    %536 = vadd.xlane.f32.xlu0 %v535
    %v537 = vpop.xlane.xlu0 %536
    %v538 = vsel %vm507, %v529, 0.0
    %539 = vadd.xlane.f32.xlu0 %v538
    %v540 = vpop.xlane.xlu0 %539
    %v541 = vsel %vm507, %v531, 0.0
    %542 = vadd.xlane.f32.xlu0 %v541
    %v543 = vpop.xlane.xlu0 %542
    %v544 = vrcp.pop %v534
    %v545 = vrcp.pop %v537
    %v546 = vrcp.pop %v540
    %v547 = vrcp.pop %v543
    %v548 = vmul.f32 %v525, %v544
    %v549 = vmul.f32 %v527, %v545
    %v550 = vmul.f32 %v529, %v546
    %v551 = vmul.f32 %v531, %v547
    %v552 = vpack.c.bf16 %v549, %v548
    %v553 = vpack.c.bf16 %v551, %v550
    %v555 = vsel %vm507, %v552, 0
    %v558 = vsel %vm507, %v553, 0
    %560 = vmatprep.subr.bf16.mxu0 0
    %561 = vmatpush1.bf16.msra.mxu0 %v441
    %562 = vmatprep.subr.bf16.mxu0 0
    %563 = vmatpush1.bf16.msra.mxu0 %v444
    %564 = vmatprep.subr.bf16.mxu0 0
    %565 = vmatpush1.bf16.msra.mxu0 0
    %566 = vmatprep.subr.bf16.mxu0 0
    %567 = vmatpush1.bf16.msra.mxu0 0
    %568 = vmatprep.subr.bf16.mxu0 0
    %569 = vmatpush1.bf16.msra.mxu0 0
    %570 = vmatprep.subr.bf16.mxu0 0
    %571 = vmatpush1.bf16.msra.mxu0 0
    %572 = vmatprep.subr.bf16.mxu0 0
    %573 = vmatpush1.bf16.msra.mxu0 0
    %574 = vmatprep.subr.bf16.mxu0 0
    %575 = vmatpush1.bf16.msra.mxu0 0
    %576 = vmatprep.subr.bf16.mxu0 0
    %577 = vmatpush1.bf16.msra.mxu0 0
    %578 = vmatprep.subr.bf16.mxu0 0
    %579 = vmatpush1.bf16.msra.mxu0 0
    %580 = vmatprep.subr.bf16.mxu0 0
    %581 = vmatpush1.bf16.msra.mxu0 0
    %582 = vmatprep.subr.bf16.mxu0 0
    %583 = vmatpush1.bf16.msra.mxu0 0
    %584 = vmatprep.subr.bf16.mxu0 0
    %585 = vmatpush1.bf16.msra.mxu0 0
    %586 = vmatprep.subr.bf16.mxu0 0
    %587 = vmatpush1.bf16.msra.mxu0 0
    %588 = vmatprep.subr.bf16.mxu0 0
    %589 = vmatpush1.bf16.msra.mxu0 0
    %590 = vmatprep.subr.bf16.mxu0 0
    %591 = vmatpush1.bf16.msra.mxu0 0
    %592 = vmatprep.mubr.bf16.mxu0 0
    %593 = vmatmul.mubr.bf16.gmra.mrb[0].mxu0 %v555
    %v594 = vpop.f32.mrb[0].mxu0
    %v595 = vadd.f32 0.0, %v594
    %v596 = vpop.f32.mrb[0].mxu0
    %v597 = vpop.f32.mrb[0].mxu0
    %v598 = vadd.f32 0.0, %v597
    %v599 = vpop.f32.mrb[0].mxu0
    %600 = vmatprep.mubr.bf16.mxu0 0
    %601 = vmatmul.mubr.bf16.gmra.mrb[0].mxu0 %v558
    %v602 = vpop.f32.mrb[0].mxu0
    %v603 = vadd.f32 0.0, %v602
    %v604 = vpop.f32.mrb[0].mxu0
    %v605 = vpop.f32.mrb[0].mxu0
    %v606 = vadd.f32 0.0, %v605
    %v607 = vpop.f32.mrb[0].mxu0
    %608 = vdwg.mxu0
    %611 = vrot.lane.b32.xlu0 %v439, 112
    %v612 = vpop.permute.xlu0 %611
    %613 = vrot.lane.b32.xlu0 %v442, 112
    %v614 = vpop.permute.xlu0 %613
    %617 = vrot.lane.b32.xlu0 %v440, 112
    %v618 = vpop.permute.xlu0 %617
    %619 = vrot.lane.b32.xlu0 %v443, 112
    %v620 = vpop.permute.xlu0 %619
    %v622 = vsel %vm445, %v612, 0
    %v625 = vsel %vm445, %v614, 0
    %v628 = vsel %vm445, %v618, 0
    %v631 = vsel %vm445, %v620, 0
    %633 = vmatprep.subr.bf16.mxu0 0
    %634 = vmatpush1.bf16.xpose.msra.mxu0 %v628
    %635 = vmatprep.subr.bf16.mxu0 0
    %636 = vmatpush1.bf16.xpose.msra.mxu0 %v631
    %637 = vmatprep.subr.bf16.mxu0 0
    %638 = vmatpush1.bf16.xpose.msra.mxu0 0
    %639 = vmatprep.subr.bf16.mxu0 0
    %640 = vmatpush1.bf16.xpose.msra.mxu0 0
    %641 = vmatprep.subr.bf16.mxu0 0
    %642 = vmatpush1.bf16.xpose.msra.mxu0 0
    %643 = vmatprep.subr.bf16.mxu0 0
    %644 = vmatpush1.bf16.xpose.msra.mxu0 0
    %645 = vmatprep.subr.bf16.mxu0 0
    %646 = vmatpush1.bf16.xpose.msra.mxu0 0
    %647 = vmatprep.subr.bf16.mxu0 0
    %648 = vmatpush1.bf16.xpose.msra.mxu0 0
    %649 = vmatprep.subr.bf16.mxu0 0
    %650 = vmatpush1.bf16.xpose.msra.mxu0 0
    %651 = vmatprep.subr.bf16.mxu0 0
    %652 = vmatpush1.bf16.xpose.msra.mxu0 0
    %653 = vmatprep.subr.bf16.mxu0 0
    %654 = vmatpush1.bf16.xpose.msra.mxu0 0
    %655 = vmatprep.subr.bf16.mxu0 0
    %656 = vmatpush1.bf16.xpose.msra.mxu0 0
    %657 = vmatprep.subr.bf16.mxu0 0
    %658 = vmatpush1.bf16.xpose.msra.mxu0 0
    %659 = vmatprep.subr.bf16.mxu0 0
    %660 = vmatpush1.bf16.xpose.msra.mxu0 0
    %661 = vmatprep.subr.bf16.mxu0 0
    %662 = vmatpush1.bf16.xpose.msra.mxu0 0
    %663 = vmatprep.subr.bf16.mxu0 0
    %664 = vmatpush1.bf16.xpose.msra.mxu0 0
    %665 = vmatprep.mubr.bf16.mxu0 0
    %666 = vmatmul.mubr.bf16.gmra.mrb[0].mxu0 %v622
    %v667 = vpop.f32.mrb[0].mxu0
    %v668 = vadd.f32 %v109, %v667
    %v669 = vpop.f32.mrb[0].mxu0
    %v670 = vpop.f32.mrb[0].mxu0
    %v671 = vadd.f32 %v110, %v670
    %v672 = vpop.f32.mrb[0].mxu0
    %673 = vmatprep.mubr.bf16.mxu0 0
    %674 = vmatmul.mubr.bf16.gmra.mrb[0].mxu0 %v625
    %v675 = vpop.f32.mrb[0].mxu0
    %v676 = vadd.f32 %v111, %v675
    %v677 = vpop.f32.mrb[0].mxu0
    %v678 = vpop.f32.mrb[0].mxu0
    %v679 = vadd.f32 %v112, %v678
    %v680 = vpop.f32.mrb[0].mxu0
    %681 = vdwg.mxu0
    %v682 = vsel %vm507, %v668, -inf
    %683 = vmax.xlane.f32.xlu0 %v682
    %v684 = vpop.xlane.xlu0 %683
    %v685 = vsel %vm507, %v671, -inf
    %686 = vmax.xlane.f32.xlu0 %v685
    %v687 = vpop.xlane.xlu0 %686
    %v688 = vsel %vm507, %v676, -inf
    %689 = vmax.xlane.f32.xlu0 %v688
    %v690 = vpop.xlane.xlu0 %689
    %v691 = vsel %vm507, %v679, -inf
    %692 = vmax.xlane.f32.xlu0 %v691
    %v693 = vpop.xlane.xlu0 %692
    %v694 = vsub.f32 %v668, %v684
    %v695 = vsub.f32 %v671, %v687
    %v696 = vsub.f32 %v676, %v690
    %v697 = vsub.f32 %v679, %v693
    %v698 = vmul.f32 %v694, 1.442695
    %v699 = vpow.pop %v698
    %v700 = vmul.f32 %v695, 1.442695
    %v701 = vpow.pop %v700
    %v702 = vmul.f32 %v696, 1.442695
    %v703 = vpow.pop %v702
    %v704 = vmul.f32 %v697, 1.442695
    %v705 = vpow.pop %v704
    %v706 = vsel %vm507, %v699, 0.0
    %707 = vadd.xlane.f32.xlu0 %v706
    %v708 = vpop.xlane.xlu0 %707
    %v709 = vsel %vm507, %v701, 0.0
    %710 = vadd.xlane.f32.xlu0 %v709
    %v711 = vpop.xlane.xlu0 %710
    %v712 = vsel %vm507, %v703, 0.0
    %713 = vadd.xlane.f32.xlu0 %v712
    %v714 = vpop.xlane.xlu0 %713
    %v715 = vsel %vm507, %v705, 0.0
    %716 = vadd.xlane.f32.xlu0 %v715
    %v717 = vpop.xlane.xlu0 %716
    %v718 = vrcp.pop %v708
    %v719 = vrcp.pop %v711
    %v720 = vrcp.pop %v714
    %v721 = vrcp.pop %v717
    %v722 = vmul.f32 %v699, %v718
    %v723 = vmul.f32 %v701, %v719
    %v724 = vmul.f32 %v703, %v720
    %v725 = vmul.f32 %v705, %v721
    %v726 = vpack.c.bf16 %v723, %v722
    %v727 = vpack.c.bf16 %v725, %v724
    %730 = vrot.lane.b32.xlu0 %v441, 112
    %v731 = vpop.permute.xlu0 %730
    %732 = vrot.lane.b32.xlu0 %v444, 112
    %v733 = vpop.permute.xlu0 %732
    %v737 = vsel %vm507, %v726, 0
    %v740 = vsel %vm507, %v727, 0
    %742 = vmatprep.subr.bf16.mxu0 0
    %743 = vmatpush1.bf16.msra.mxu0 %v731
    %744 = vmatprep.subr.bf16.mxu0 0
    %745 = vmatpush1.bf16.msra.mxu0 %v733
    %746 = vmatprep.subr.bf16.mxu0 0
    %747 = vmatpush1.bf16.msra.mxu0 0
    %748 = vmatprep.subr.bf16.mxu0 0
    %749 = vmatpush1.bf16.msra.mxu0 0
    %750 = vmatprep.subr.bf16.mxu0 0
    %751 = vmatpush1.bf16.msra.mxu0 0
    %752 = vmatprep.subr.bf16.mxu0 0
    %753 = vmatpush1.bf16.msra.mxu0 0
    %754 = vmatprep.subr.bf16.mxu0 0
    %755 = vmatpush1.bf16.msra.mxu0 0
    %756 = vmatprep.subr.bf16.mxu0 0
    %757 = vmatpush1.bf16.msra.mxu0 0
    %758 = vmatprep.subr.bf16.mxu0 0
    %759 = vmatpush1.bf16.msra.mxu0 0
    %760 = vmatprep.subr.bf16.mxu0 0
    %761 = vmatpush1.bf16.msra.mxu0 0
    %762 = vmatprep.subr.bf16.mxu0 0
    %763 = vmatpush1.bf16.msra.mxu0 0
    %764 = vmatprep.subr.bf16.mxu0 0
    %765 = vmatpush1.bf16.msra.mxu0 0
    %766 = vmatprep.subr.bf16.mxu0 0
    %767 = vmatpush1.bf16.msra.mxu0 0
    %768 = vmatprep.subr.bf16.mxu0 0
    %769 = vmatpush1.bf16.msra.mxu0 0
    %770 = vmatprep.subr.bf16.mxu0 0
    %771 = vmatpush1.bf16.msra.mxu0 0
    %772 = vmatprep.subr.bf16.mxu0 0
    %773 = vmatpush1.bf16.msra.mxu0 0
    %774 = vmatprep.mubr.bf16.mxu0 0
    %775 = vmatmul.mubr.bf16.gmra.mrb[0].mxu0 %v737
    %v776 = vpop.f32.mrb[0].mxu0
    %v777 = vadd.f32 0.0, %v776
    %v778 = vpop.f32.mrb[0].mxu0
    %v779 = vpop.f32.mrb[0].mxu0
    %v780 = vadd.f32 0.0, %v779
    %v781 = vpop.f32.mrb[0].mxu0
    %782 = vmatprep.mubr.bf16.mxu0 0
    %783 = vmatmul.mubr.bf16.gmra.mrb[0].mxu0 %v740
    %v784 = vpop.f32.mrb[0].mxu0
    %v785 = vadd.f32 0.0, %v784
    %v786 = vpop.f32.mrb[0].mxu0
    %v787 = vpop.f32.mrb[0].mxu0
    %v788 = vadd.f32 0.0, %v787
    %v789 = vpop.f32.mrb[0].mxu0
    %790 = vdwg.mxu0
    %791 = vrot.lane.b32.xlu0 %v439, 96
    %v792 = vpop.permute.xlu0 %791
    %793 = vrot.lane.b32.xlu0 %v442, 96
    %v794 = vpop.permute.xlu0 %793
    %795 = vrot.lane.b32.xlu0 %v440, 96
    %v796 = vpop.permute.xlu0 %795
    %797 = vrot.lane.b32.xlu0 %v443, 96
    %v798 = vpop.permute.xlu0 %797
    %v800 = vsel %vm445, %v792, 0
    %v803 = vsel %vm445, %v794, 0
    %v806 = vsel %vm445, %v796, 0
    %v809 = vsel %vm445, %v798, 0
    %811 = vmatprep.subr.bf16.mxu0 0
    %812 = vmatpush1.bf16.xpose.msra.mxu0 %v806
    %813 = vmatprep.subr.bf16.mxu0 0
    %814 = vmatpush1.bf16.xpose.msra.mxu0 %v809
    %815 = vmatprep.subr.bf16.mxu0 0
    %816 = vmatpush1.bf16.xpose.msra.mxu0 0
    %817 = vmatprep.subr.bf16.mxu0 0
    %818 = vmatpush1.bf16.xpose.msra.mxu0 0
    %819 = vmatprep.subr.bf16.mxu0 0
    %820 = vmatpush1.bf16.xpose.msra.mxu0 0
    %821 = vmatprep.subr.bf16.mxu0 0
    %822 = vmatpush1.bf16.xpose.msra.mxu0 0
    %823 = vmatprep.subr.bf16.mxu0 0
    %824 = vmatpush1.bf16.xpose.msra.mxu0 0
    %825 = vmatprep.subr.bf16.mxu0 0
    %826 = vmatpush1.bf16.xpose.msra.mxu0 0
    %827 = vmatprep.subr.bf16.mxu0 0
    %828 = vmatpush1.bf16.xpose.msra.mxu0 0
    %829 = vmatprep.subr.bf16.mxu0 0
    %830 = vmatpush1.bf16.xpose.msra.mxu0 0
    %831 = vmatprep.subr.bf16.mxu0 0
    %832 = vmatpush1.bf16.xpose.msra.mxu0 0
    %833 = vmatprep.subr.bf16.mxu0 0
    %834 = vmatpush1.bf16.xpose.msra.mxu0 0
    %835 = vmatprep.subr.bf16.mxu0 0
    %836 = vmatpush1.bf16.xpose.msra.mxu0 0
    %837 = vmatprep.subr.bf16.mxu0 0
    %838 = vmatpush1.bf16.xpose.msra.mxu0 0
    %839 = vmatprep.subr.bf16.mxu0 0
    %840 = vmatpush1.bf16.xpose.msra.mxu0 0
    %841 = vmatprep.subr.bf16.mxu0 0
    %842 = vmatpush1.bf16.xpose.msra.mxu0 0
    %843 = vmatprep.mubr.bf16.mxu0 0
    %844 = vmatmul.mubr.bf16.gmra.mrb[0].mxu0 %v800
    %v845 = vpop.f32.mrb[0].mxu0
    %v846 = vadd.f32 %v109, %v845
    %v847 = vpop.f32.mrb[0].mxu0
    %v848 = vpop.f32.mrb[0].mxu0
    %v849 = vadd.f32 %v110, %v848
    %v850 = vpop.f32.mrb[0].mxu0
    %851 = vmatprep.mubr.bf16.mxu0 0
    %852 = vmatmul.mubr.bf16.gmra.mrb[0].mxu0 %v803
    %v853 = vpop.f32.mrb[0].mxu0
    %v854 = vadd.f32 %v111, %v853
    %v855 = vpop.f32.mrb[0].mxu0
    %v856 = vpop.f32.mrb[0].mxu0
    %v857 = vadd.f32 %v112, %v856
    %v858 = vpop.f32.mrb[0].mxu0
    %859 = vdwg.mxu0
    %v860 = vsel %vm507, %v846, -inf
    %861 = vmax.xlane.f32.xlu0 %v860
    %v862 = vpop.xlane.xlu0 %861
    %v863 = vsel %vm507, %v849, -inf
    %864 = vmax.xlane.f32.xlu0 %v863
    %v865 = vpop.xlane.xlu0 %864
    %v866 = vsel %vm507, %v854, -inf
    %867 = vmax.xlane.f32.xlu0 %v866
    %v868 = vpop.xlane.xlu0 %867
    %v869 = vsel %vm507, %v857, -inf
    %870 = vmax.xlane.f32.xlu0 %v869
    %v871 = vpop.xlane.xlu0 %870
    %v872 = vsub.f32 %v846, %v862
    %v873 = vsub.f32 %v849, %v865
    %v874 = vsub.f32 %v854, %v868
    %v875 = vsub.f32 %v857, %v871
    %v876 = vmul.f32 %v872, 1.442695
    %v877 = vpow.pop %v876
    %v878 = vmul.f32 %v873, 1.442695
    %v879 = vpow.pop %v878
    %v880 = vmul.f32 %v874, 1.442695
    %v881 = vpow.pop %v880
    %v882 = vmul.f32 %v875, 1.442695
    %v883 = vpow.pop %v882
    %v884 = vsel %vm507, %v877, 0.0
    %885 = vadd.xlane.f32.xlu0 %v884
    %v886 = vpop.xlane.xlu0 %885
    %v887 = vsel %vm507, %v879, 0.0
    %888 = vadd.xlane.f32.xlu0 %v887
    %v889 = vpop.xlane.xlu0 %888
    %v890 = vsel %vm507, %v881, 0.0
    %891 = vadd.xlane.f32.xlu0 %v890
    %v892 = vpop.xlane.xlu0 %891
    %v893 = vsel %vm507, %v883, 0.0
    %894 = vadd.xlane.f32.xlu0 %v893
    %v895 = vpop.xlane.xlu0 %894
    %v896 = vrcp.pop %v886
    %v897 = vrcp.pop %v889
    %v898 = vrcp.pop %v892
    %v899 = vrcp.pop %v895
    %v900 = vmul.f32 %v877, %v896
    %v901 = vmul.f32 %v879, %v897
    %v902 = vmul.f32 %v881, %v898
    %v903 = vmul.f32 %v883, %v899
    %v904 = vpack.c.bf16 %v901, %v900
    %v905 = vpack.c.bf16 %v903, %v902
    %906 = vrot.lane.b32.xlu0 %v441, 96
    %v907 = vpop.permute.xlu0 %906
    %908 = vrot.lane.b32.xlu0 %v444, 96
    %v909 = vpop.permute.xlu0 %908
    %v913 = vsel %vm507, %v904, 0
    %v916 = vsel %vm507, %v905, 0
    %918 = vmatprep.subr.bf16.mxu0 0
    %919 = vmatpush1.bf16.msra.mxu0 %v907
    %920 = vmatprep.subr.bf16.mxu0 0
    %921 = vmatpush1.bf16.msra.mxu0 %v909
    %922 = vmatprep.subr.bf16.mxu0 0
    %923 = vmatpush1.bf16.msra.mxu0 0
    %924 = vmatprep.subr.bf16.mxu0 0
    %925 = vmatpush1.bf16.msra.mxu0 0
    %926 = vmatprep.subr.bf16.mxu0 0
    %927 = vmatpush1.bf16.msra.mxu0 0
    %928 = vmatprep.subr.bf16.mxu0 0
    %929 = vmatpush1.bf16.msra.mxu0 0
    %930 = vmatprep.subr.bf16.mxu0 0
    %931 = vmatpush1.bf16.msra.mxu0 0
    %932 = vmatprep.subr.bf16.mxu0 0
    %933 = vmatpush1.bf16.msra.mxu0 0
    %934 = vmatprep.subr.bf16.mxu0 0
    %935 = vmatpush1.bf16.msra.mxu0 0
    %936 = vmatprep.subr.bf16.mxu0 0
    %937 = vmatpush1.bf16.msra.mxu0 0
    %938 = vmatprep.subr.bf16.mxu0 0
    %939 = vmatpush1.bf16.msra.mxu0 0
    %940 = vmatprep.subr.bf16.mxu0 0
    %941 = vmatpush1.bf16.msra.mxu0 0
    %942 = vmatprep.subr.bf16.mxu0 0
    %943 = vmatpush1.bf16.msra.mxu0 0
    %944 = vmatprep.subr.bf16.mxu0 0
    %945 = vmatpush1.bf16.msra.mxu0 0
    %946 = vmatprep.subr.bf16.mxu0 0
    %947 = vmatpush1.bf16.msra.mxu0 0
    %948 = vmatprep.subr.bf16.mxu0 0
    %949 = vmatpush1.bf16.msra.mxu0 0
    %950 = vmatprep.mubr.bf16.mxu0 0
    %951 = vmatmul.mubr.bf16.gmra.mrb[0].mxu0 %v913
    %v952 = vpop.f32.mrb[0].mxu0
    %v953 = vadd.f32 0.0, %v952
    %v954 = vpop.f32.mrb[0].mxu0
    %v955 = vpop.f32.mrb[0].mxu0
    %v956 = vadd.f32 0.0, %v955
    %v957 = vpop.f32.mrb[0].mxu0
    %958 = vmatprep.mubr.bf16.mxu0 0
    %959 = vmatmul.mubr.bf16.gmra.mrb[0].mxu0 %v916
    %v960 = vpop.f32.mrb[0].mxu0
    %v961 = vadd.f32 0.0, %v960
    %v962 = vpop.f32.mrb[0].mxu0
    %v963 = vpop.f32.mrb[0].mxu0
    %v964 = vadd.f32 0.0, %v963
    %v965 = vpop.f32.mrb[0].mxu0
    %966 = vdwg.mxu0
    %967 = vrot.lane.b32.xlu0 %v439, 80
    %v968 = vpop.permute.xlu0 %967
    %969 = vrot.lane.b32.xlu0 %v442, 80
    %v970 = vpop.permute.xlu0 %969
    %971 = vrot.lane.b32.xlu0 %v440, 80
    %v972 = vpop.permute.xlu0 %971
    %973 = vrot.lane.b32.xlu0 %v443, 80
    %v974 = vpop.permute.xlu0 %973
    %v976 = vsel %vm445, %v968, 0
    %v979 = vsel %vm445, %v970, 0
    %v982 = vsel %vm445, %v972, 0
    %v985 = vsel %vm445, %v974, 0
    %987 = vmatprep.subr.bf16.mxu0 0
    %988 = vmatpush1.bf16.xpose.msra.mxu0 %v982
    %989 = vmatprep.subr.bf16.mxu0 0
    %990 = vmatpush1.bf16.xpose.msra.mxu0 %v985
    %991 = vmatprep.subr.bf16.mxu0 0
    %992 = vmatpush1.bf16.xpose.msra.mxu0 0
    %993 = vmatprep.subr.bf16.mxu0 0
    %994 = vmatpush1.bf16.xpose.msra.mxu0 0
    %995 = vmatprep.subr.bf16.mxu0 0
    %996 = vmatpush1.bf16.xpose.msra.mxu0 0
    %997 = vmatprep.subr.bf16.mxu0 0
    %998 = vmatpush1.bf16.xpose.msra.mxu0 0
    %999 = vmatprep.subr.bf16.mxu0 0
    %1000 = vmatpush1.bf16.xpose.msra.mxu0 0
    %1001 = vmatprep.subr.bf16.mxu0 0
    %1002 = vmatpush1.bf16.xpose.msra.mxu0 0
    %1003 = vmatprep.subr.bf16.mxu0 0
    %1004 = vmatpush1.bf16.xpose.msra.mxu0 0
    %1005 = vmatprep.subr.bf16.mxu0 0
    %1006 = vmatpush1.bf16.xpose.msra.mxu0 0
    %1007 = vmatprep.subr.bf16.mxu0 0
    %1008 = vmatpush1.bf16.xpose.msra.mxu0 0
    %1009 = vmatprep.subr.bf16.mxu0 0
    %1010 = vmatpush1.bf16.xpose.msra.mxu0 0
    %1011 = vmatprep.subr.bf16.mxu0 0
    %1012 = vmatpush1.bf16.xpose.msra.mxu0 0
    %1013 = vmatprep.subr.bf16.mxu0 0
    %1014 = vmatpush1.bf16.xpose.msra.mxu0 0
    %1015 = vmatprep.subr.bf16.mxu0 0
    %1016 = vmatpush1.bf16.xpose.msra.mxu0 0
    %1017 = vmatprep.subr.bf16.mxu0 0
    %1018 = vmatpush1.bf16.xpose.msra.mxu0 0
    %1019 = vmatprep.mubr.bf16.mxu0 0
    %1020 = vmatmul.mubr.bf16.gmra.mrb[0].mxu0 %v976
    %v1021 = vpop.f32.mrb[0].mxu0
    %v1022 = vadd.f32 %v109, %v1021
    %v1023 = vpop.f32.mrb[0].mxu0
    %v1024 = vpop.f32.mrb[0].mxu0
    %v1025 = vadd.f32 %v110, %v1024
    %v1026 = vpop.f32.mrb[0].mxu0
    %1027 = vmatprep.mubr.bf16.mxu0 0
    %1028 = vmatmul.mubr.bf16.gmra.mrb[0].mxu0 %v979
    %v1029 = vpop.f32.mrb[0].mxu0
    %v1030 = vadd.f32 %v111, %v1029
    %v1031 = vpop.f32.mrb[0].mxu0
    %v1032 = vpop.f32.mrb[0].mxu0
    %v1033 = vadd.f32 %v112, %v1032
    %v1034 = vpop.f32.mrb[0].mxu0
    %1035 = vdwg.mxu0
    %v1036 = vsel %vm507, %v1022, -inf
    %1037 = vmax.xlane.f32.xlu0 %v1036
    %v1038 = vpop.xlane.xlu0 %1037
    %v1039 = vsel %vm507, %v1025, -inf
    %1040 = vmax.xlane.f32.xlu0 %v1039
    %v1041 = vpop.xlane.xlu0 %1040
    %v1042 = vsel %vm507, %v1030, -inf
    %1043 = vmax.xlane.f32.xlu0 %v1042
    %v1044 = vpop.xlane.xlu0 %1043
    %v1045 = vsel %vm507, %v1033, -inf
    %1046 = vmax.xlane.f32.xlu0 %v1045
    %v1047 = vpop.xlane.xlu0 %1046
    %v1048 = vsub.f32 %v1022, %v1038
    %v1049 = vsub.f32 %v1025, %v1041
    %v1050 = vsub.f32 %v1030, %v1044
    %v1051 = vsub.f32 %v1033, %v1047
    %v1052 = vmul.f32 %v1048, 1.442695
    %v1053 = vpow.pop %v1052
    %v1054 = vmul.f32 %v1049, 1.442695
    %v1055 = vpow.pop %v1054
    %v1056 = vmul.f32 %v1050, 1.442695
    %v1057 = vpow.pop %v1056
    %v1058 = vmul.f32 %v1051, 1.442695
    %v1059 = vpow.pop %v1058
    %v1060 = vsel %vm507, %v1053, 0.0
    %1061 = vadd.xlane.f32.xlu0 %v1060
    %v1062 = vpop.xlane.xlu0 %1061
    %v1063 = vsel %vm507, %v1055, 0.0
    %1064 = vadd.xlane.f32.xlu0 %v1063
    %v1065 = vpop.xlane.xlu0 %1064
    %v1066 = vsel %vm507, %v1057, 0.0
    %1067 = vadd.xlane.f32.xlu0 %v1066
    %v1068 = vpop.xlane.xlu0 %1067
    %v1069 = vsel %vm507, %v1059, 0.0
    %1070 = vadd.xlane.f32.xlu0 %v1069
    %v1071 = vpop.xlane.xlu0 %1070
    %v1072 = vrcp.pop %v1062
    %v1073 = vrcp.pop %v1065
    %v1074 = vrcp.pop %v1068
    %v1075 = vrcp.pop %v1071
    %v1076 = vmul.f32 %v1053, %v1072
    %v1077 = vmul.f32 %v1055, %v1073
    %v1078 = vmul.f32 %v1057, %v1074
    %v1079 = vmul.f32 %v1059, %v1075
    %v1080 = vpack.c.bf16 %v1077, %v1076
    %v1081 = vpack.c.bf16 %v1079, %v1078
    %1082 = vrot.lane.b32.xlu0 %v441, 80
    %v1083 = vpop.permute.xlu0 %1082
    %1084 = vrot.lane.b32.xlu0 %v444, 80
    %v1085 = vpop.permute.xlu0 %1084
    %v1089 = vsel %vm507, %v1080, 0
    %v1092 = vsel %vm507, %v1081, 0
    %1094 = vmatprep.subr.bf16.mxu0 0
    %1095 = vmatpush1.bf16.msra.mxu0 %v1083
    %1096 = vmatprep.subr.bf16.mxu0 0
    %1097 = vmatpush1.bf16.msra.mxu0 %v1085
    %1098 = vmatprep.subr.bf16.mxu0 0
    %1099 = vmatpush1.bf16.msra.mxu0 0
    %1100 = vmatprep.subr.bf16.mxu0 0
    %1101 = vmatpush1.bf16.msra.mxu0 0
    %1102 = vmatprep.subr.bf16.mxu0 0
    %1103 = vmatpush1.bf16.msra.mxu0 0
    %1104 = vmatprep.subr.bf16.mxu0 0
    %1105 = vmatpush1.bf16.msra.mxu0 0
    %1106 = vmatprep.subr.bf16.mxu0 0
    %1107 = vmatpush1.bf16.msra.mxu0 0
    %1108 = vmatprep.subr.bf16.mxu0 0
    %1109 = vmatpush1.bf16.msra.mxu0 0
    %1110 = vmatprep.subr.bf16.mxu0 0
    %1111 = vmatpush1.bf16.msra.mxu0 0
    %1112 = vmatprep.subr.bf16.mxu0 0
    %1113 = vmatpush1.bf16.msra.mxu0 0
    %1114 = vmatprep.subr.bf16.mxu0 0
    %1115 = vmatpush1.bf16.msra.mxu0 0
    %1116 = vmatprep.subr.bf16.mxu0 0
    %1117 = vmatpush1.bf16.msra.mxu0 0
    %1118 = vmatprep.subr.bf16.mxu0 0
    %1119 = vmatpush1.bf16.msra.mxu0 0
    %1120 = vmatprep.subr.bf16.mxu0 0
    %1121 = vmatpush1.bf16.msra.mxu0 0
    %1122 = vmatprep.subr.bf16.mxu0 0
    %1123 = vmatpush1.bf16.msra.mxu0 0
    %1124 = vmatprep.subr.bf16.mxu0 0
    %1125 = vmatpush1.bf16.msra.mxu0 0
    %1126 = vmatprep.mubr.bf16.mxu0 0
    %1127 = vmatmul.mubr.bf16.gmra.mrb[0].mxu0 %v1089
    %v1128 = vpop.f32.mrb[0].mxu0
    %v1129 = vadd.f32 0.0, %v1128
    %v1130 = vpop.f32.mrb[0].mxu0
    %v1131 = vpop.f32.mrb[0].mxu0
    %v1132 = vadd.f32 0.0, %v1131
    %v1133 = vpop.f32.mrb[0].mxu0
    %1134 = vmatprep.mubr.bf16.mxu0 0
    %1135 = vmatmul.mubr.bf16.gmra.mrb[0].mxu0 %v1092
    %v1136 = vpop.f32.mrb[0].mxu0
    %v1137 = vadd.f32 0.0, %v1136
    %v1138 = vpop.f32.mrb[0].mxu0
    %v1139 = vpop.f32.mrb[0].mxu0
    %v1140 = vadd.f32 0.0, %v1139
    %v1141 = vpop.f32.mrb[0].mxu0
    %1142 = vdwg.mxu0
    %1143 = vrot.lane.b32.xlu0 %v439, 64
    %v1144 = vpop.permute.xlu0 %1143
    %1145 = vrot.lane.b32.xlu0 %v442, 64
    %v1146 = vpop.permute.xlu0 %1145
    %1147 = vrot.lane.b32.xlu0 %v440, 64
    %v1148 = vpop.permute.xlu0 %1147
    %1149 = vrot.lane.b32.xlu0 %v443, 64
    %v1150 = vpop.permute.xlu0 %1149
    %v1152 = vsel %vm445, %v1144, 0
    %v1155 = vsel %vm445, %v1146, 0
    %v1158 = vsel %vm445, %v1148, 0
    %v1161 = vsel %vm445, %v1150, 0
    %1163 = vmatprep.subr.bf16.mxu0 0
    %1164 = vmatpush1.bf16.xpose.msra.mxu0 %v1158
    %1165 = vmatprep.subr.bf16.mxu0 0
    %1166 = vmatpush1.bf16.xpose.msra.mxu0 %v1161
    %1167 = vmatprep.subr.bf16.mxu0 0
    %1168 = vmatpush1.bf16.xpose.msra.mxu0 0
    %1169 = vmatprep.subr.bf16.mxu0 0
    %1170 = vmatpush1.bf16.xpose.msra.mxu0 0
    %1171 = vmatprep.subr.bf16.mxu0 0
    %1172 = vmatpush1.bf16.xpose.msra.mxu0 0
    %1173 = vmatprep.subr.bf16.mxu0 0
    %1174 = vmatpush1.bf16.xpose.msra.mxu0 0
    %1175 = vmatprep.subr.bf16.mxu0 0
    %1176 = vmatpush1.bf16.xpose.msra.mxu0 0
    %1177 = vmatprep.subr.bf16.mxu0 0
    %1178 = vmatpush1.bf16.xpose.msra.mxu0 0
    %1179 = vmatprep.subr.bf16.mxu0 0
    %1180 = vmatpush1.bf16.xpose.msra.mxu0 0
    %1181 = vmatprep.subr.bf16.mxu0 0
    %1182 = vmatpush1.bf16.xpose.msra.mxu0 0
    %1183 = vmatprep.subr.bf16.mxu0 0
    %1184 = vmatpush1.bf16.xpose.msra.mxu0 0
    %1185 = vmatprep.subr.bf16.mxu0 0
    %1186 = vmatpush1.bf16.xpose.msra.mxu0 0
    %1187 = vmatprep.subr.bf16.mxu0 0
    %1188 = vmatpush1.bf16.xpose.msra.mxu0 0
    %1189 = vmatprep.subr.bf16.mxu0 0
    %1190 = vmatpush1.bf16.xpose.msra.mxu0 0
    %1191 = vmatprep.subr.bf16.mxu0 0
    %1192 = vmatpush1.bf16.xpose.msra.mxu0 0
    %1193 = vmatprep.subr.bf16.mxu0 0
    %1194 = vmatpush1.bf16.xpose.msra.mxu0 0
    %1195 = vmatprep.mubr.bf16.mxu0 0
    %1196 = vmatmul.mubr.bf16.gmra.mrb[0].mxu0 %v1152
    %v1197 = vpop.f32.mrb[0].mxu0
    %v1198 = vadd.f32 %v109, %v1197
    %v1199 = vpop.f32.mrb[0].mxu0
    %v1200 = vpop.f32.mrb[0].mxu0
    %v1201 = vadd.f32 %v110, %v1200
    %v1202 = vpop.f32.mrb[0].mxu0
    %1203 = vmatprep.mubr.bf16.mxu0 0
    %1204 = vmatmul.mubr.bf16.gmra.mrb[0].mxu0 %v1155
    %v1205 = vpop.f32.mrb[0].mxu0
    %v1206 = vadd.f32 %v111, %v1205
    %v1207 = vpop.f32.mrb[0].mxu0
    %v1208 = vpop.f32.mrb[0].mxu0
    %v1209 = vadd.f32 %v112, %v1208
    %v1210 = vpop.f32.mrb[0].mxu0
    %1211 = vdwg.mxu0
    %v1212 = vsel %vm507, %v1198, -inf
    %1213 = vmax.xlane.f32.xlu0 %v1212
    %v1214 = vpop.xlane.xlu0 %1213
    %v1215 = vsel %vm507, %v1201, -inf
    %1216 = vmax.xlane.f32.xlu0 %v1215
    %v1217 = vpop.xlane.xlu0 %1216
    %v1218 = vsel %vm507, %v1206, -inf
    %1219 = vmax.xlane.f32.xlu0 %v1218
    %v1220 = vpop.xlane.xlu0 %1219
    %v1221 = vsel %vm507, %v1209, -inf
    %1222 = vmax.xlane.f32.xlu0 %v1221
    %v1223 = vpop.xlane.xlu0 %1222
    %v1224 = vsub.f32 %v1198, %v1214
    %v1225 = vsub.f32 %v1201, %v1217
    %v1226 = vsub.f32 %v1206, %v1220
    %v1227 = vsub.f32 %v1209, %v1223
    %v1228 = vmul.f32 %v1224, 1.442695
    %v1229 = vpow.pop %v1228
    %v1230 = vmul.f32 %v1225, 1.442695
    %v1231 = vpow.pop %v1230
    %v1232 = vmul.f32 %v1226, 1.442695
    %v1233 = vpow.pop %v1232
    %v1234 = vmul.f32 %v1227, 1.442695
    %v1235 = vpow.pop %v1234
    %v1236 = vsel %vm507, %v1229, 0.0
    %1237 = vadd.xlane.f32.xlu0 %v1236
    %v1238 = vpop.xlane.xlu0 %1237
    %v1239 = vsel %vm507, %v1231, 0.0
    %1240 = vadd.xlane.f32.xlu0 %v1239
    %v1241 = vpop.xlane.xlu0 %1240
    %v1242 = vsel %vm507, %v1233, 0.0
    %1243 = vadd.xlane.f32.xlu0 %v1242
    %v1244 = vpop.xlane.xlu0 %1243
    %v1245 = vsel %vm507, %v1235, 0.0
    %1246 = vadd.xlane.f32.xlu0 %v1245
    %v1247 = vpop.xlane.xlu0 %1246
    %v1248 = vrcp.pop %v1238
    %v1249 = vrcp.pop %v1241
    %v1250 = vrcp.pop %v1244
    %v1251 = vrcp.pop %v1247
    %v1252 = vmul.f32 %v1229, %v1248
    %v1253 = vmul.f32 %v1231, %v1249
    %v1254 = vmul.f32 %v1233, %v1250
    %v1255 = vmul.f32 %v1235, %v1251
    %v1256 = vpack.c.bf16 %v1253, %v1252
    %v1257 = vpack.c.bf16 %v1255, %v1254
    %1258 = vrot.lane.b32.xlu0 %v441, 64
    %v1259 = vpop.permute.xlu0 %1258
    %1260 = vrot.lane.b32.xlu0 %v444, 64
    %v1261 = vpop.permute.xlu0 %1260
    %v1265 = vsel %vm507, %v1256, 0
    %v1268 = vsel %vm507, %v1257, 0
    %1270 = vmatprep.subr.bf16.mxu0 0
    %1271 = vmatpush1.bf16.msra.mxu0 %v1259
    %1272 = vmatprep.subr.bf16.mxu0 0
    %1273 = vmatpush1.bf16.msra.mxu0 %v1261
    %1274 = vmatprep.subr.bf16.mxu0 0
    %1275 = vmatpush1.bf16.msra.mxu0 0
    %1276 = vmatprep.subr.bf16.mxu0 0
    %1277 = vmatpush1.bf16.msra.mxu0 0
    %1278 = vmatprep.subr.bf16.mxu0 0
    %1279 = vmatpush1.bf16.msra.mxu0 0
    %1280 = vmatprep.subr.bf16.mxu0 0
    %1281 = vmatpush1.bf16.msra.mxu0 0
    %1282 = vmatprep.subr.bf16.mxu0 0
    %1283 = vmatpush1.bf16.msra.mxu0 0
    %1284 = vmatprep.subr.bf16.mxu0 0
    %1285 = vmatpush1.bf16.msra.mxu0 0
    %1286 = vmatprep.subr.bf16.mxu0 0
    %1287 = vmatpush1.bf16.msra.mxu0 0
    %1288 = vmatprep.subr.bf16.mxu0 0
    %1289 = vmatpush1.bf16.msra.mxu0 0
    %1290 = vmatprep.subr.bf16.mxu0 0
    %1291 = vmatpush1.bf16.msra.mxu0 0
    %1292 = vmatprep.subr.bf16.mxu0 0
    %1293 = vmatpush1.bf16.msra.mxu0 0
    %1294 = vmatprep.subr.bf16.mxu0 0
    %1295 = vmatpush1.bf16.msra.mxu0 0
    %1296 = vmatprep.subr.bf16.mxu0 0
    %1297 = vmatpush1.bf16.msra.mxu0 0
    %1298 = vmatprep.subr.bf16.mxu0 0
    %1299 = vmatpush1.bf16.msra.mxu0 0
    %1300 = vmatprep.subr.bf16.mxu0 0
    %1301 = vmatpush1.bf16.msra.mxu0 0
    %1302 = vmatprep.mubr.bf16.mxu0 0
    %1303 = vmatmul.mubr.bf16.gmra.mrb[0].mxu0 %v1265
    %v1304 = vpop.f32.mrb[0].mxu0
    %v1305 = vadd.f32 0.0, %v1304
    %v1306 = vpop.f32.mrb[0].mxu0
    %v1307 = vpop.f32.mrb[0].mxu0
    %v1308 = vadd.f32 0.0, %v1307
    %v1309 = vpop.f32.mrb[0].mxu0
    %1310 = vmatprep.mubr.bf16.mxu0 0
    %1311 = vmatmul.mubr.bf16.gmra.mrb[0].mxu0 %v1268
    %v1312 = vpop.f32.mrb[0].mxu0
    %v1313 = vadd.f32 0.0, %v1312
    %v1314 = vpop.f32.mrb[0].mxu0
    %v1315 = vpop.f32.mrb[0].mxu0
    %v1316 = vadd.f32 0.0, %v1315
    %v1317 = vpop.f32.mrb[0].mxu0
    %1318 = vdwg.mxu0
    %1319 = vrot.lane.b32.xlu0 %v439, 48
    %v1320 = vpop.permute.xlu0 %1319
    %1321 = vrot.lane.b32.xlu0 %v442, 48
    %v1322 = vpop.permute.xlu0 %1321
    %1323 = vrot.lane.b32.xlu0 %v440, 48
    %v1324 = vpop.permute.xlu0 %1323
    %1325 = vrot.lane.b32.xlu0 %v443, 48
    %v1326 = vpop.permute.xlu0 %1325
    %v1328 = vsel %vm445, %v1320, 0
    %v1331 = vsel %vm445, %v1322, 0
    %v1334 = vsel %vm445, %v1324, 0
    %v1337 = vsel %vm445, %v1326, 0
    %1339 = vmatprep.subr.bf16.mxu0 0
    %1340 = vmatpush1.bf16.xpose.msra.mxu0 %v1334
    %1341 = vmatprep.subr.bf16.mxu0 0
    %1342 = vmatpush1.bf16.xpose.msra.mxu0 %v1337
    %1343 = vmatprep.subr.bf16.mxu0 0
    %1344 = vmatpush1.bf16.xpose.msra.mxu0 0
    %1345 = vmatprep.subr.bf16.mxu0 0
    %1346 = vmatpush1.bf16.xpose.msra.mxu0 0
    %1347 = vmatprep.subr.bf16.mxu0 0
    %1348 = vmatpush1.bf16.xpose.msra.mxu0 0
    %1349 = vmatprep.subr.bf16.mxu0 0
    %1350 = vmatpush1.bf16.xpose.msra.mxu0 0
    %1351 = vmatprep.subr.bf16.mxu0 0
    %1352 = vmatpush1.bf16.xpose.msra.mxu0 0
    %1353 = vmatprep.subr.bf16.mxu0 0
    %1354 = vmatpush1.bf16.xpose.msra.mxu0 0
    %1355 = vmatprep.subr.bf16.mxu0 0
    %1356 = vmatpush1.bf16.xpose.msra.mxu0 0
    %1357 = vmatprep.subr.bf16.mxu0 0
    %1358 = vmatpush1.bf16.xpose.msra.mxu0 0
    %1359 = vmatprep.subr.bf16.mxu0 0
    %1360 = vmatpush1.bf16.xpose.msra.mxu0 0
    %1361 = vmatprep.subr.bf16.mxu0 0
    %1362 = vmatpush1.bf16.xpose.msra.mxu0 0
    %1363 = vmatprep.subr.bf16.mxu0 0
    %1364 = vmatpush1.bf16.xpose.msra.mxu0 0
    %1365 = vmatprep.subr.bf16.mxu0 0
    %1366 = vmatpush1.bf16.xpose.msra.mxu0 0
    %1367 = vmatprep.subr.bf16.mxu0 0
    %1368 = vmatpush1.bf16.xpose.msra.mxu0 0
    %1369 = vmatprep.subr.bf16.mxu0 0
    %1370 = vmatpush1.bf16.xpose.msra.mxu0 0
    %1371 = vmatprep.mubr.bf16.mxu0 0
    %1372 = vmatmul.mubr.bf16.gmra.mrb[0].mxu0 %v1328
    %v1373 = vpop.f32.mrb[0].mxu0
    %v1374 = vadd.f32 %v109, %v1373
    %v1375 = vpop.f32.mrb[0].mxu0
    %v1376 = vpop.f32.mrb[0].mxu0
    %v1377 = vadd.f32 %v110, %v1376
    %v1378 = vpop.f32.mrb[0].mxu0
    %1379 = vmatprep.mubr.bf16.mxu0 0
    %1380 = vmatmul.mubr.bf16.gmra.mrb[0].mxu0 %v1331
    %v1381 = vpop.f32.mrb[0].mxu0
    %v1382 = vadd.f32 %v111, %v1381
    %v1383 = vpop.f32.mrb[0].mxu0
    %v1384 = vpop.f32.mrb[0].mxu0
    %v1385 = vadd.f32 %v112, %v1384
    %v1386 = vpop.f32.mrb[0].mxu0
    %1387 = vdwg.mxu0
    %v1388 = vsel %vm507, %v1374, -inf
    %1389 = vmax.xlane.f32.xlu0 %v1388
    %v1390 = vpop.xlane.xlu0 %1389
    %v1391 = vsel %vm507, %v1377, -inf
    %1392 = vmax.xlane.f32.xlu0 %v1391
    %v1393 = vpop.xlane.xlu0 %1392
    %v1394 = vsel %vm507, %v1382, -inf
    %1395 = vmax.xlane.f32.xlu0 %v1394
    %v1396 = vpop.xlane.xlu0 %1395
    %v1397 = vsel %vm507, %v1385, -inf
    %1398 = vmax.xlane.f32.xlu0 %v1397
    %v1399 = vpop.xlane.xlu0 %1398
    %v1400 = vsub.f32 %v1374, %v1390
    %v1401 = vsub.f32 %v1377, %v1393
    %v1402 = vsub.f32 %v1382, %v1396
    %v1403 = vsub.f32 %v1385, %v1399
    %v1404 = vmul.f32 %v1400, 1.442695
    %v1405 = vpow.pop %v1404
    %v1406 = vmul.f32 %v1401, 1.442695
    %v1407 = vpow.pop %v1406
    %v1408 = vmul.f32 %v1402, 1.442695
    %v1409 = vpow.pop %v1408
    %v1410 = vmul.f32 %v1403, 1.442695
    %v1411 = vpow.pop %v1410
    %v1412 = vsel %vm507, %v1405, 0.0
    %1413 = vadd.xlane.f32.xlu0 %v1412
    %v1414 = vpop.xlane.xlu0 %1413
    %v1415 = vsel %vm507, %v1407, 0.0
    %1416 = vadd.xlane.f32.xlu0 %v1415
    %v1417 = vpop.xlane.xlu0 %1416
    %v1418 = vsel %vm507, %v1409, 0.0
    %1419 = vadd.xlane.f32.xlu0 %v1418
    %v1420 = vpop.xlane.xlu0 %1419
    %v1421 = vsel %vm507, %v1411, 0.0
    %1422 = vadd.xlane.f32.xlu0 %v1421
    %v1423 = vpop.xlane.xlu0 %1422
    %v1424 = vrcp.pop %v1414
    %v1425 = vrcp.pop %v1417
    %v1426 = vrcp.pop %v1420
    %v1427 = vrcp.pop %v1423
    %v1428 = vmul.f32 %v1405, %v1424
    %v1429 = vmul.f32 %v1407, %v1425
    %v1430 = vmul.f32 %v1409, %v1426
    %v1431 = vmul.f32 %v1411, %v1427
    %v1432 = vpack.c.bf16 %v1429, %v1428
    %v1433 = vpack.c.bf16 %v1431, %v1430
    %1434 = vrot.lane.b32.xlu0 %v441, 48
    %v1435 = vpop.permute.xlu0 %1434
    %1436 = vrot.lane.b32.xlu0 %v444, 48
    %v1437 = vpop.permute.xlu0 %1436
    %v1441 = vsel %vm507, %v1432, 0
    %v1444 = vsel %vm507, %v1433, 0
    %1446 = vmatprep.subr.bf16.mxu0 0
    %1447 = vmatpush1.bf16.msra.mxu0 %v1435
    %1448 = vmatprep.subr.bf16.mxu0 0
    %1449 = vmatpush1.bf16.msra.mxu0 %v1437
    %1450 = vmatprep.subr.bf16.mxu0 0
    %1451 = vmatpush1.bf16.msra.mxu0 0
    %1452 = vmatprep.subr.bf16.mxu0 0
    %1453 = vmatpush1.bf16.msra.mxu0 0
    %1454 = vmatprep.subr.bf16.mxu0 0
    %1455 = vmatpush1.bf16.msra.mxu0 0
    %1456 = vmatprep.subr.bf16.mxu0 0
    %1457 = vmatpush1.bf16.msra.mxu0 0
    %1458 = vmatprep.subr.bf16.mxu0 0
    %1459 = vmatpush1.bf16.msra.mxu0 0
    %1460 = vmatprep.subr.bf16.mxu0 0
    %1461 = vmatpush1.bf16.msra.mxu0 0
    %1462 = vmatprep.subr.bf16.mxu0 0
    %1463 = vmatpush1.bf16.msra.mxu0 0
    %1464 = vmatprep.subr.bf16.mxu0 0
    %1465 = vmatpush1.bf16.msra.mxu0 0
    %1466 = vmatprep.subr.bf16.mxu0 0
    %1467 = vmatpush1.bf16.msra.mxu0 0
    %1468 = vmatprep.subr.bf16.mxu0 0
    %1469 = vmatpush1.bf16.msra.mxu0 0
    %1470 = vmatprep.subr.bf16.mxu0 0
    %1471 = vmatpush1.bf16.msra.mxu0 0
    %1472 = vmatprep.subr.bf16.mxu0 0
    %1473 = vmatpush1.bf16.msra.mxu0 0
    %1474 = vmatprep.subr.bf16.mxu0 0
    %1475 = vmatpush1.bf16.msra.mxu0 0
    %1476 = vmatprep.subr.bf16.mxu0 0
    %1477 = vmatpush1.bf16.msra.mxu0 0
    %1478 = vmatprep.mubr.bf16.mxu0 0
    %1479 = vmatmul.mubr.bf16.gmra.mrb[0].mxu0 %v1441
    %v1480 = vpop.f32.mrb[0].mxu0
    %v1481 = vadd.f32 0.0, %v1480
    %v1482 = vpop.f32.mrb[0].mxu0
    %v1483 = vpop.f32.mrb[0].mxu0
    %v1484 = vadd.f32 0.0, %v1483
    %v1485 = vpop.f32.mrb[0].mxu0
    %1486 = vmatprep.mubr.bf16.mxu0 0
    %1487 = vmatmul.mubr.bf16.gmra.mrb[0].mxu0 %v1444
    %v1488 = vpop.f32.mrb[0].mxu0
    %v1489 = vadd.f32 0.0, %v1488
    %v1490 = vpop.f32.mrb[0].mxu0
    %v1491 = vpop.f32.mrb[0].mxu0
    %v1492 = vadd.f32 0.0, %v1491
    %v1493 = vpop.f32.mrb[0].mxu0
    %1494 = vdwg.mxu0
    %1495 = vrot.lane.b32.xlu0 %v439, 32
    %v1496 = vpop.permute.xlu0 %1495
    %1497 = vrot.lane.b32.xlu0 %v442, 32
    %v1498 = vpop.permute.xlu0 %1497
    %1499 = vrot.lane.b32.xlu0 %v440, 32
    %v1500 = vpop.permute.xlu0 %1499
    %1501 = vrot.lane.b32.xlu0 %v443, 32
    %v1502 = vpop.permute.xlu0 %1501
    %v1504 = vsel %vm445, %v1496, 0
    %v1507 = vsel %vm445, %v1498, 0
    %v1510 = vsel %vm445, %v1500, 0
    %v1513 = vsel %vm445, %v1502, 0
    %1515 = vmatprep.subr.bf16.mxu0 0
    %1516 = vmatpush1.bf16.xpose.msra.mxu0 %v1510
    %1517 = vmatprep.subr.bf16.mxu0 0
    %1518 = vmatpush1.bf16.xpose.msra.mxu0 %v1513
    %1519 = vmatprep.subr.bf16.mxu0 0
    %1520 = vmatpush1.bf16.xpose.msra.mxu0 0
    %1521 = vmatprep.subr.bf16.mxu0 0
    %1522 = vmatpush1.bf16.xpose.msra.mxu0 0
    %1523 = vmatprep.subr.bf16.mxu0 0
    %1524 = vmatpush1.bf16.xpose.msra.mxu0 0
    %1525 = vmatprep.subr.bf16.mxu0 0
    %1526 = vmatpush1.bf16.xpose.msra.mxu0 0
    %1527 = vmatprep.subr.bf16.mxu0 0
    %1528 = vmatpush1.bf16.xpose.msra.mxu0 0
    %1529 = vmatprep.subr.bf16.mxu0 0
    %1530 = vmatpush1.bf16.xpose.msra.mxu0 0
    %1531 = vmatprep.subr.bf16.mxu0 0
    %1532 = vmatpush1.bf16.xpose.msra.mxu0 0
    %1533 = vmatprep.subr.bf16.mxu0 0
    %1534 = vmatpush1.bf16.xpose.msra.mxu0 0
    %1535 = vmatprep.subr.bf16.mxu0 0
    %1536 = vmatpush1.bf16.xpose.msra.mxu0 0
    %1537 = vmatprep.subr.bf16.mxu0 0
    %1538 = vmatpush1.bf16.xpose.msra.mxu0 0
    %1539 = vmatprep.subr.bf16.mxu0 0
    %1540 = vmatpush1.bf16.xpose.msra.mxu0 0
    %1541 = vmatprep.subr.bf16.mxu0 0
    %1542 = vmatpush1.bf16.xpose.msra.mxu0 0
    %1543 = vmatprep.subr.bf16.mxu0 0
    %1544 = vmatpush1.bf16.xpose.msra.mxu0 0
    %1545 = vmatprep.subr.bf16.mxu0 0
    %1546 = vmatpush1.bf16.xpose.msra.mxu0 0
    %1547 = vmatprep.mubr.bf16.mxu0 0
    %1548 = vmatmul.mubr.bf16.gmra.mrb[0].mxu0 %v1504
    %v1549 = vpop.f32.mrb[0].mxu0
    %v1550 = vadd.f32 %v109, %v1549
    %v1551 = vpop.f32.mrb[0].mxu0
    %v1552 = vpop.f32.mrb[0].mxu0
    %v1553 = vadd.f32 %v110, %v1552
    %v1554 = vpop.f32.mrb[0].mxu0
    %1555 = vmatprep.mubr.bf16.mxu0 0
    %1556 = vmatmul.mubr.bf16.gmra.mrb[0].mxu0 %v1507
    %v1557 = vpop.f32.mrb[0].mxu0
    %v1558 = vadd.f32 %v111, %v1557
    %v1559 = vpop.f32.mrb[0].mxu0
    %v1560 = vpop.f32.mrb[0].mxu0
    %v1561 = vadd.f32 %v112, %v1560
    %v1562 = vpop.f32.mrb[0].mxu0
    %1563 = vdwg.mxu0
    %v1564 = vsel %vm507, %v1550, -inf
    %1565 = vmax.xlane.f32.xlu0 %v1564
    %v1566 = vpop.xlane.xlu0 %1565
    %v1567 = vsel %vm507, %v1553, -inf
    %1568 = vmax.xlane.f32.xlu0 %v1567
    %v1569 = vpop.xlane.xlu0 %1568
    %v1570 = vsel %vm507, %v1558, -inf
    %1571 = vmax.xlane.f32.xlu0 %v1570
    %v1572 = vpop.xlane.xlu0 %1571
    %v1573 = vsel %vm507, %v1561, -inf
    %1574 = vmax.xlane.f32.xlu0 %v1573
    %v1575 = vpop.xlane.xlu0 %1574
    %v1576 = vsub.f32 %v1550, %v1566
    %v1577 = vsub.f32 %v1553, %v1569
    %v1578 = vsub.f32 %v1558, %v1572
    %v1579 = vsub.f32 %v1561, %v1575
    %v1580 = vmul.f32 %v1576, 1.442695
    %v1581 = vpow.pop %v1580
    %v1582 = vmul.f32 %v1577, 1.442695
    %v1583 = vpow.pop %v1582
    %v1584 = vmul.f32 %v1578, 1.442695
    %v1585 = vpow.pop %v1584
    %v1586 = vmul.f32 %v1579, 1.442695
    %v1587 = vpow.pop %v1586
    %v1588 = vsel %vm507, %v1581, 0.0
    %1589 = vadd.xlane.f32.xlu0 %v1588
    %v1590 = vpop.xlane.xlu0 %1589
    %v1591 = vsel %vm507, %v1583, 0.0
    %1592 = vadd.xlane.f32.xlu0 %v1591
    %v1593 = vpop.xlane.xlu0 %1592
    %v1594 = vsel %vm507, %v1585, 0.0
    %1595 = vadd.xlane.f32.xlu0 %v1594
    %v1596 = vpop.xlane.xlu0 %1595
    %v1597 = vsel %vm507, %v1587, 0.0
    %1598 = vadd.xlane.f32.xlu0 %v1597
    %v1599 = vpop.xlane.xlu0 %1598
    %v1600 = vrcp.pop %v1590
    %v1601 = vrcp.pop %v1593
    %v1602 = vrcp.pop %v1596
    %v1603 = vrcp.pop %v1599
    %v1604 = vmul.f32 %v1581, %v1600
    %v1605 = vmul.f32 %v1583, %v1601
    %v1606 = vmul.f32 %v1585, %v1602
    %v1607 = vmul.f32 %v1587, %v1603
    %v1608 = vpack.c.bf16 %v1605, %v1604
    %v1609 = vpack.c.bf16 %v1607, %v1606
    %1610 = vrot.lane.b32.xlu0 %v441, 32
    %v1611 = vpop.permute.xlu0 %1610
    %1612 = vrot.lane.b32.xlu0 %v444, 32
    %v1613 = vpop.permute.xlu0 %1612
    %v1617 = vsel %vm507, %v1608, 0
    %v1620 = vsel %vm507, %v1609, 0
    %1622 = vmatprep.subr.bf16.mxu0 0
    %1623 = vmatpush1.bf16.msra.mxu0 %v1611
    %1624 = vmatprep.subr.bf16.mxu0 0
    %1625 = vmatpush1.bf16.msra.mxu0 %v1613
    %1626 = vmatprep.subr.bf16.mxu0 0
    %1627 = vmatpush1.bf16.msra.mxu0 0
    %1628 = vmatprep.subr.bf16.mxu0 0
    %1629 = vmatpush1.bf16.msra.mxu0 0
    %1630 = vmatprep.subr.bf16.mxu0 0
    %1631 = vmatpush1.bf16.msra.mxu0 0
    %1632 = vmatprep.subr.bf16.mxu0 0
    %1633 = vmatpush1.bf16.msra.mxu0 0
    %1634 = vmatprep.subr.bf16.mxu0 0
    %1635 = vmatpush1.bf16.msra.mxu0 0
    %1636 = vmatprep.subr.bf16.mxu0 0
    %1637 = vmatpush1.bf16.msra.mxu0 0
    %1638 = vmatprep.subr.bf16.mxu0 0
    %1639 = vmatpush1.bf16.msra.mxu0 0
    %1640 = vmatprep.subr.bf16.mxu0 0
    %1641 = vmatpush1.bf16.msra.mxu0 0
    %1642 = vmatprep.subr.bf16.mxu0 0
    %1643 = vmatpush1.bf16.msra.mxu0 0
    %1644 = vmatprep.subr.bf16.mxu0 0
    %1645 = vmatpush1.bf16.msra.mxu0 0
    %1646 = vmatprep.subr.bf16.mxu0 0
    %1647 = vmatpush1.bf16.msra.mxu0 0
    %1648 = vmatprep.subr.bf16.mxu0 0
    %1649 = vmatpush1.bf16.msra.mxu0 0
    %1650 = vmatprep.subr.bf16.mxu0 0
    %1651 = vmatpush1.bf16.msra.mxu0 0
    %1652 = vmatprep.subr.bf16.mxu0 0
    %1653 = vmatpush1.bf16.msra.mxu0 0
    %1654 = vmatprep.mubr.bf16.mxu0 0
    %1655 = vmatmul.mubr.bf16.gmra.mrb[0].mxu0 %v1617
    %v1656 = vpop.f32.mrb[0].mxu0
    %v1657 = vadd.f32 0.0, %v1656
    %v1658 = vpop.f32.mrb[0].mxu0
    %v1659 = vpop.f32.mrb[0].mxu0
    %v1660 = vadd.f32 0.0, %v1659
    %v1661 = vpop.f32.mrb[0].mxu0
    %1662 = vmatprep.mubr.bf16.mxu0 0
    %1663 = vmatmul.mubr.bf16.gmra.mrb[0].mxu0 %v1620
    %v1664 = vpop.f32.mrb[0].mxu0
    %v1665 = vadd.f32 0.0, %v1664
    %v1666 = vpop.f32.mrb[0].mxu0
    %v1667 = vpop.f32.mrb[0].mxu0
    %v1668 = vadd.f32 0.0, %v1667
    %v1669 = vpop.f32.mrb[0].mxu0
    %1670 = vdwg.mxu0
    %1671 = vrot.lane.b32.xlu0 %v439, 16
    %v1672 = vpop.permute.xlu0 %1671
    %1673 = vrot.lane.b32.xlu0 %v442, 16
    %v1674 = vpop.permute.xlu0 %1673
    %1675 = vrot.lane.b32.xlu0 %v440, 16
    %v1676 = vpop.permute.xlu0 %1675
    %1677 = vrot.lane.b32.xlu0 %v443, 16
    %v1678 = vpop.permute.xlu0 %1677
    %v1680 = vsel %vm445, %v1672, 0
    %v1683 = vsel %vm445, %v1674, 0
    %v1686 = vsel %vm445, %v1676, 0
    %v1689 = vsel %vm445, %v1678, 0
    %1691 = vmatprep.subr.bf16.mxu0 0
    %1692 = vmatpush1.bf16.xpose.msra.mxu0 %v1686
    %1693 = vmatprep.subr.bf16.mxu0 0
    %1694 = vmatpush1.bf16.xpose.msra.mxu0 %v1689
    %1695 = vmatprep.subr.bf16.mxu0 0
    %1696 = vmatpush1.bf16.xpose.msra.mxu0 0
    %1697 = vmatprep.subr.bf16.mxu0 0
    %1698 = vmatpush1.bf16.xpose.msra.mxu0 0
    %1699 = vmatprep.subr.bf16.mxu0 0
    %1700 = vmatpush1.bf16.xpose.msra.mxu0 0
    %1701 = vmatprep.subr.bf16.mxu0 0
    %1702 = vmatpush1.bf16.xpose.msra.mxu0 0
    %1703 = vmatprep.subr.bf16.mxu0 0
    %1704 = vmatpush1.bf16.xpose.msra.mxu0 0
    %1705 = vmatprep.subr.bf16.mxu0 0
    %1706 = vmatpush1.bf16.xpose.msra.mxu0 0
    %1707 = vmatprep.subr.bf16.mxu0 0
    %1708 = vmatpush1.bf16.xpose.msra.mxu0 0
    %1709 = vmatprep.subr.bf16.mxu0 0
    %1710 = vmatpush1.bf16.xpose.msra.mxu0 0
    %1711 = vmatprep.subr.bf16.mxu0 0
    %1712 = vmatpush1.bf16.xpose.msra.mxu0 0
    %1713 = vmatprep.subr.bf16.mxu0 0
    %1714 = vmatpush1.bf16.xpose.msra.mxu0 0
    %1715 = vmatprep.subr.bf16.mxu0 0
    %1716 = vmatpush1.bf16.xpose.msra.mxu0 0
    %1717 = vmatprep.subr.bf16.mxu0 0
    %1718 = vmatpush1.bf16.xpose.msra.mxu0 0
    %1719 = vmatprep.subr.bf16.mxu0 0
    %1720 = vmatpush1.bf16.xpose.msra.mxu0 0
    %1721 = vmatprep.subr.bf16.mxu0 0
    %1722 = vmatpush1.bf16.xpose.msra.mxu0 0
    %1723 = vmatprep.mubr.bf16.mxu0 0
    %1724 = vmatmul.mubr.bf16.gmra.mrb[0].mxu0 %v1680
    %v1725 = vpop.f32.mrb[0].mxu0
    %v1726 = vadd.f32 %v109, %v1725
    %v1727 = vpop.f32.mrb[0].mxu0
    %v1728 = vpop.f32.mrb[0].mxu0
    %v1729 = vadd.f32 %v110, %v1728
    %v1730 = vpop.f32.mrb[0].mxu0
    %1731 = vmatprep.mubr.bf16.mxu0 0
    %1732 = vmatmul.mubr.bf16.gmra.mrb[0].mxu0 %v1683
    %v1733 = vpop.f32.mrb[0].mxu0
    %v1734 = vadd.f32 %v111, %v1733
    %v1735 = vpop.f32.mrb[0].mxu0
    %v1736 = vpop.f32.mrb[0].mxu0
    %v1737 = vadd.f32 %v112, %v1736
    %v1738 = vpop.f32.mrb[0].mxu0
    %1739 = vdwg.mxu0
    %v1740 = vsel %vm507, %v1726, -inf
    %1741 = vmax.xlane.f32.xlu0 %v1740
    %v1742 = vpop.xlane.xlu0 %1741
    %v1743 = vsel %vm507, %v1729, -inf
    %1744 = vmax.xlane.f32.xlu0 %v1743
    %v1745 = vpop.xlane.xlu0 %1744
    %v1746 = vsel %vm507, %v1734, -inf
    %1747 = vmax.xlane.f32.xlu0 %v1746
    %v1748 = vpop.xlane.xlu0 %1747
    %v1749 = vsel %vm507, %v1737, -inf
    %1750 = vmax.xlane.f32.xlu0 %v1749
    %v1751 = vpop.xlane.xlu0 %1750
    %v1752 = vsub.f32 %v1726, %v1742
    %v1753 = vsub.f32 %v1729, %v1745
    %v1754 = vsub.f32 %v1734, %v1748
    %v1755 = vsub.f32 %v1737, %v1751
    %v1756 = vmul.f32 %v1752, 1.442695
    %v1757 = vpow.pop %v1756
    %v1758 = vmul.f32 %v1753, 1.442695
    %v1759 = vpow.pop %v1758
    %v1760 = vmul.f32 %v1754, 1.442695
    %v1761 = vpow.pop %v1760
    %v1762 = vmul.f32 %v1755, 1.442695
    %v1763 = vpow.pop %v1762
    %v1764 = vsel %vm507, %v1757, 0.0
    %1765 = vadd.xlane.f32.xlu0 %v1764
    %v1766 = vpop.xlane.xlu0 %1765
    %v1767 = vsel %vm507, %v1759, 0.0
    %1768 = vadd.xlane.f32.xlu0 %v1767
    %v1769 = vpop.xlane.xlu0 %1768
    %v1770 = vsel %vm507, %v1761, 0.0
    %1771 = vadd.xlane.f32.xlu0 %v1770
    %v1772 = vpop.xlane.xlu0 %1771
    %v1773 = vsel %vm507, %v1763, 0.0
    %1774 = vadd.xlane.f32.xlu0 %v1773
    %v1775 = vpop.xlane.xlu0 %1774
    %v1776 = vrcp.pop %v1766
    %v1777 = vrcp.pop %v1769
    %v1778 = vrcp.pop %v1772
    %v1779 = vrcp.pop %v1775
    %v1780 = vmul.f32 %v1757, %v1776
    %v1781 = vmul.f32 %v1759, %v1777
    %v1782 = vmul.f32 %v1761, %v1778
    %v1783 = vmul.f32 %v1763, %v1779
    %v1784 = vpack.c.bf16 %v1781, %v1780
    %v1785 = vpack.c.bf16 %v1783, %v1782
    %1786 = vrot.lane.b32.xlu0 %v441, 16
    %v1787 = vpop.permute.xlu0 %1786
    %1788 = vrot.lane.b32.xlu0 %v444, 16
    %v1789 = vpop.permute.xlu0 %1788
    %v1793 = vsel %vm507, %v1784, 0
    %v1796 = vsel %vm507, %v1785, 0
    %1798 = vmatprep.subr.bf16.mxu0 0
    %1799 = vmatpush1.bf16.msra.mxu0 %v1787
    %1800 = vmatprep.subr.bf16.mxu0 0
    %1801 = vmatpush1.bf16.msra.mxu0 %v1789
    %1802 = vmatprep.subr.bf16.mxu0 0
    %1803 = vmatpush1.bf16.msra.mxu0 0
    %1804 = vmatprep.subr.bf16.mxu0 0
    %1805 = vmatpush1.bf16.msra.mxu0 0
    %1806 = vmatprep.subr.bf16.mxu0 0
    %1807 = vmatpush1.bf16.msra.mxu0 0
    %1808 = vmatprep.subr.bf16.mxu0 0
    %1809 = vmatpush1.bf16.msra.mxu0 0
    %1810 = vmatprep.subr.bf16.mxu0 0
    %1811 = vmatpush1.bf16.msra.mxu0 0
    %1812 = vmatprep.subr.bf16.mxu0 0
    %1813 = vmatpush1.bf16.msra.mxu0 0
    %1814 = vmatprep.subr.bf16.mxu0 0
    %1815 = vmatpush1.bf16.msra.mxu0 0
    %1816 = vmatprep.subr.bf16.mxu0 0
    %1817 = vmatpush1.bf16.msra.mxu0 0
    %1818 = vmatprep.subr.bf16.mxu0 0
    %1819 = vmatpush1.bf16.msra.mxu0 0
    %1820 = vmatprep.subr.bf16.mxu0 0
    %1821 = vmatpush1.bf16.msra.mxu0 0
    %1822 = vmatprep.subr.bf16.mxu0 0
    %1823 = vmatpush1.bf16.msra.mxu0 0
    %1824 = vmatprep.subr.bf16.mxu0 0
    %1825 = vmatpush1.bf16.msra.mxu0 0
    %1826 = vmatprep.subr.bf16.mxu0 0
    %1827 = vmatpush1.bf16.msra.mxu0 0
    %1828 = vmatprep.subr.bf16.mxu0 0
    %1829 = vmatpush1.bf16.msra.mxu0 0
    %1830 = vmatprep.mubr.bf16.mxu0 0
    %1831 = vmatmul.mubr.bf16.gmra.mrb[0].mxu0 %v1793
    %v1832 = vpop.f32.mrb[0].mxu0
    %v1833 = vadd.f32 0.0, %v1832
    %v1834 = vpop.f32.mrb[0].mxu0
    %v1835 = vpop.f32.mrb[0].mxu0
    %v1836 = vadd.f32 0.0, %v1835
    %v1837 = vpop.f32.mrb[0].mxu0
    %1838 = vmatprep.mubr.bf16.mxu0 0
    %1839 = vmatmul.mubr.bf16.gmra.mrb[0].mxu0 %v1796
    %v1840 = vpop.f32.mrb[0].mxu0
    %v1841 = vadd.f32 0.0, %v1840
    %v1842 = vpop.f32.mrb[0].mxu0
    %v1843 = vpop.f32.mrb[0].mxu0
    %v1844 = vadd.f32 0.0, %v1843
    %v1845 = vpop.f32.mrb[0].mxu0
    %1846 = vdwg.mxu0
    %1851 = vrot.lane.b32.xlu0 %v777, 16
    %v1852 = vpop.permute.xlu0 %1851
    %1853 = vrot.lane.b32.xlu0 %v780, 16
    %v1854 = vpop.permute.xlu0 %1853
    %1855 = vrot.lane.b32.xlu0 %v785, 16
    %v1856 = vpop.permute.xlu0 %1855
    %1857 = vrot.lane.b32.xlu0 %v788, 16
    %v1858 = vpop.permute.xlu0 %1857
    %1867 = vrot.lane.b32.xlu0 %v953, 32
    %v1868 = vpop.permute.xlu0 %1867
    %1869 = vrot.lane.b32.xlu0 %v956, 32
    %v1870 = vpop.permute.xlu0 %1869
    %1871 = vrot.lane.b32.xlu0 %v961, 32
    %v1872 = vpop.permute.xlu0 %1871
    %1873 = vrot.lane.b32.xlu0 %v964, 32
    %v1874 = vpop.permute.xlu0 %1873
    %1883 = vrot.lane.b32.xlu0 %v1129, 48
    %v1884 = vpop.permute.xlu0 %1883
    %1885 = vrot.lane.b32.xlu0 %v1132, 48
    %v1886 = vpop.permute.xlu0 %1885
    %1887 = vrot.lane.b32.xlu0 %v1137, 48
    %v1888 = vpop.permute.xlu0 %1887
    %1889 = vrot.lane.b32.xlu0 %v1140, 48
    %v1890 = vpop.permute.xlu0 %1889
    %1899 = vrot.lane.b32.xlu0 %v1305, 64
    %v1900 = vpop.permute.xlu0 %1899
    %1901 = vrot.lane.b32.xlu0 %v1308, 64
    %v1902 = vpop.permute.xlu0 %1901
    %1903 = vrot.lane.b32.xlu0 %v1313, 64
    %v1904 = vpop.permute.xlu0 %1903
    %1905 = vrot.lane.b32.xlu0 %v1316, 64
    %v1906 = vpop.permute.xlu0 %1905
    %1915 = vrot.lane.b32.xlu0 %v1481, 80
    %v1916 = vpop.permute.xlu0 %1915
    %1917 = vrot.lane.b32.xlu0 %v1484, 80
    %v1918 = vpop.permute.xlu0 %1917
    %1919 = vrot.lane.b32.xlu0 %v1489, 80
    %v1920 = vpop.permute.xlu0 %1919
    %1921 = vrot.lane.b32.xlu0 %v1492, 80
    %v1922 = vpop.permute.xlu0 %1921
    %1931 = vrot.lane.b32.xlu0 %v1657, 96
    %v1932 = vpop.permute.xlu0 %1931
    %1933 = vrot.lane.b32.xlu0 %v1660, 96
    %v1934 = vpop.permute.xlu0 %1933
    %1935 = vrot.lane.b32.xlu0 %v1665, 96
    %v1936 = vpop.permute.xlu0 %1935
    %1937 = vrot.lane.b32.xlu0 %v1668, 96
    %v1938 = vpop.permute.xlu0 %1937
    %1947 = vrot.lane.b32.xlu0 %v1833, 112
    %v1948 = vpop.permute.xlu0 %1947
    %1949 = vrot.lane.b32.xlu0 %v1836, 112
    %v1950 = vpop.permute.xlu0 %1949
    %1951 = vrot.lane.b32.xlu0 %v1841, 112
    %v1952 = vpop.permute.xlu0 %1951
    %1953 = vrot.lane.b32.xlu0 %v1844, 112
    %v1954 = vpop.permute.xlu0 %1953
    %v1959 = vsel %vm445, %v595, %v1852
    %v1960 = vsel %vm445, %v598, %v1854
    %v1961 = vsel %vm445, %v603, %v1856
    %v1962 = vsel %vm445, %v606, %v1858
    %v1963 = vsel %vm507, %v1959, %v1868
    %v1964 = vsel %vm507, %v1960, %v1870
    %v1965 = vsel %vm507, %v1961, %v1872
    %v1966 = vsel %vm507, %v1962, %v1874
    %vm1967 = vcmask 392192
    %v1968 = vsel %vm1967, %v1963, %v1884
    %v1969 = vsel %vm1967, %v1964, %v1886
    %v1970 = vsel %vm1967, %v1965, %v1888
    %v1971 = vsel %vm1967, %v1966, %v1890
    %vm1972 = vcmask 523264
    %v1973 = vsel %vm1972, %v1968, %v1900
    %v1974 = vsel %vm1972, %v1969, %v1902
    %v1975 = vsel %vm1972, %v1970, %v1904
    %v1976 = vsel %vm1972, %v1971, %v1906
    %vm1977 = vcmask 654336
    %v1978 = vsel %vm1977, %v1973, %v1916
    %v1979 = vsel %vm1977, %v1974, %v1918
    %v1980 = vsel %vm1977, %v1975, %v1920
    %v1981 = vsel %vm1977, %v1976, %v1922
    %vm1982 = vcmask 785408
    %v1983 = vsel %vm1982, %v1978, %v1932
    %v1984 = vsel %vm1982, %v1979, %v1934
    %v1985 = vsel %vm1982, %v1980, %v1936
    %v1986 = vsel %vm1982, %v1981, %v1938
    %vm1987 = vcmask 916480
    %v1988 = vsel %vm1987, %v1983, %v1948
    %v1989 = vsel %vm1987, %v1984, %v1950
    %v1990 = vsel %vm1987, %v1985, %v1952
    %v1991 = vsel %vm1987, %v1986, %v1954
    %v1992 = vpack.c.bf16 %v1989, %v1988
    %v1993 = vpack.c.bf16 %v1991, %v1990
    %v1994 = vld [vmem:[#allocation7 + $0xc] sm:$0xf]
    %v1995 = vld [vmem:[#allocation7 + $0x2c] sm:$0xf]
    %v1996 = vld [vmem:[#allocation7 + $0x4c] sm:$0xf]
    %v1997 = vld [vmem:[#allocation7 + $0x6c] sm:$0xf]
    %v1998 = vld [vmem:[#allocation7 + $0x8c] sm:$0xf]
    %v1999 = vld [vmem:[#allocation7 + $0xac] sm:$0xf]
    %v2000 = vld [vmem:[#allocation7 + $0xcc] sm:$0xf]
    %v2001 = vld [vmem:[#allocation7 + $0xec] sm:$0xf]
    %v2002 = vld [vmem:[#allocation7 + $0x10c] sm:$0xf]
    %v2003 = vld [vmem:[#allocation7 + $0x12c] sm:$0xf]
    %v2004 = vld [vmem:[#allocation7 + $0x14c] sm:$0xf]
    %v2005 = vld [vmem:[#allocation7 + $0x16c] sm:$0xf]
    %v2006 = vld [vmem:[#allocation7 + $0x18c] sm:$0xf]
    %v2007 = vld [vmem:[#allocation7 + $0x1ac] sm:$0xf]
    %v2008 = vld [vmem:[#allocation7 + $0x1cc] sm:$0xf]
    %v2009 = vld [vmem:[#allocation7 + $0x1ec] sm:$0xf]
    %v2010 = vld [vmem:[#allocation11 + $0x3] sm:$0x1]
    %v2012 = vlaneseq
    %v2013 = vshrl.u32 %v2012, 7
    %v2014 = vsub.s32 0, %v2013
    %v2015 = vrot.slane %v2010, %v2014
    %v2033 = vunpack.c.l.b16 %v1994
    %v2034 = vunpack.c.l.b16 %v1995
    %v2035 = vunpack.c.l.b16 %v1996
    %v2036 = vunpack.c.l.b16 %v1997
    %v2037 = vunpack.c.l.b16 %v1998
    %v2038 = vunpack.c.l.b16 %v1999
    %v2039 = vunpack.c.l.b16 %v2000
    %v2040 = vunpack.c.l.b16 %v2001
    %v2041 = vunpack.c.l.b16 %v2002
    %v2042 = vunpack.c.l.b16 %v2003
    %v2043 = vunpack.c.l.b16 %v2004
    %v2044 = vunpack.c.l.b16 %v2005
    %v2045 = vunpack.c.l.b16 %v2006
    %v2046 = vunpack.c.l.b16 %v2007
    %v2047 = vunpack.c.l.b16 %v2008
    %v2048 = vunpack.c.l.b16 %v2009
    %v2049 = vpack.c.b16 %v2034, %v2033
    %v2050 = vpack.c.b16 %v2036, %v2035
    %v2051 = vpack.c.b16 %v2038, %v2037
    %v2052 = vpack.c.b16 %v2040, %v2039
    %v2053 = vpack.c.b16 %v2042, %v2041
    %v2054 = vpack.c.b16 %v2044, %v2043
    %v2055 = vpack.c.b16 %v2046, %v2045
    %v2056 = vpack.c.b16 %v2048, %v2047
    %2065 = vmatprep.subr.bf16.mxu0 0
    %2066 = vmatpush1.bf16.msra.mxu0 %v2049
    %2067 = vmatprep.subr.bf16.mxu0 0
    %2068 = vmatpush1.bf16.msra.mxu0 %v2050
    %2069 = vmatprep.subr.bf16.mxu0 0
    %2070 = vmatpush1.bf16.msra.mxu0 %v2051
    %2071 = vmatprep.subr.bf16.mxu0 0
    %2072 = vmatpush1.bf16.msra.mxu0 %v2052
    %2073 = vmatprep.subr.bf16.mxu0 0
    %2074 = vmatpush1.bf16.msra.mxu0 %v2053
    %2075 = vmatprep.subr.bf16.mxu0 0
    %2076 = vmatpush1.bf16.msra.mxu0 %v2054
    %2077 = vmatprep.subr.bf16.mxu0 0
    %2078 = vmatpush1.bf16.msra.mxu0 %v2055
    %2079 = vmatprep.subr.bf16.mxu0 0
    %2080 = vmatpush1.bf16.msra.mxu0 %v2056
    %2081 = vmatprep.subr.bf16.mxu0 0
    %2082 = vmatpush1.bf16.msra.mxu0 0
    %2083 = vmatprep.subr.bf16.mxu0 0
    %2084 = vmatpush1.bf16.msra.mxu0 0
    %2085 = vmatprep.subr.bf16.mxu0 0
    %2086 = vmatpush1.bf16.msra.mxu0 0
    %2087 = vmatprep.subr.bf16.mxu0 0
    %2088 = vmatpush1.bf16.msra.mxu0 0
    %2089 = vmatprep.subr.bf16.mxu0 0
    %2090 = vmatpush1.bf16.msra.mxu0 0
    %2091 = vmatprep.subr.bf16.mxu0 0
    %2092 = vmatpush1.bf16.msra.mxu0 0
    %2093 = vmatprep.subr.bf16.mxu0 0
    %2094 = vmatpush1.bf16.msra.mxu0 0
    %2095 = vmatprep.subr.bf16.mxu0 0
    %2096 = vmatpush1.bf16.msra.mxu0 0
    %2097 = vmatprep.mubr.bf16.mxu0 0
    %2098 = vmatmul.mubr.bf16.gmra.mrb[0].mxu0 %v1992
    %v2099 = vpop.f32.mrb[0].mxu0
    %v2100 = vadd.f32 %v2015, %v2099
    %v2101 = vpop.f32.mrb[0].mxu0
    %v2102 = vpop.f32.mrb[0].mxu0
    %v2103 = vadd.f32 %v2015, %v2102
    %v2104 = vpop.f32.mrb[0].mxu0
    %2105 = vmatprep.mubr.bf16.mxu0 0
    %2106 = vmatmul.mubr.bf16.gmra.mrb[0].mxu0 %v1993
    %v2107 = vpop.f32.mrb[0].mxu0
    %v2108 = vadd.f32 %v2015, %v2107
    %v2109 = vpop.f32.mrb[0].mxu0
    %v2110 = vpop.f32.mrb[0].mxu0
    %v2111 = vadd.f32 %v2015, %v2110
    %v2112 = vpop.f32.mrb[0].mxu0
    %2113 = vdwg.mxu0
    %v2114 = vadd.f32 %v105, %v2100
    %v2115 = vadd.f32 %v106, %v2103
    %v2116 = vadd.f32 %v107, %v2108
    %v2117 = vadd.f32 %v108, %v2111
    %2118 = vadd.xlane.f32.xlu0 %v2114
    %v2119 = vpop.xlane.xlu0 %2118
    %2120 = vadd.xlane.f32.xlu0 %v2115
    %v2121 = vpop.xlane.xlu0 %2120
    %2122 = vadd.xlane.f32.xlu0 %v2116
    %v2123 = vpop.xlane.xlu0 %2122
    %2124 = vadd.xlane.f32.xlu0 %v2117
    %v2125 = vpop.xlane.xlu0 %2124
    %v2126 = vmul.f32 %v2119, %v121
    %v2127 = vmul.f32 %v2121, %v121
    %v2128 = vmul.f32 %v2123, %v121
    %v2129 = vmul.f32 %v2125, %v121
    %v2130 = vsub.f32 %v2114, %v2126
    %v2131 = vsub.f32 %v2115, %v2127
    %v2132 = vsub.f32 %v2116, %v2128
    %v2133 = vsub.f32 %v2117, %v2129
    %v2134 = vmul.f32 %v2130, %v2130
    %v2135 = vmul.f32 %v2131, %v2131
    %v2136 = vmul.f32 %v2132, %v2132
    %v2137 = vmul.f32 %v2133, %v2133
    %2138 = vadd.xlane.f32.xlu0 %v2134
    %v2139 = vpop.xlane.xlu0 %2138
    %2140 = vadd.xlane.f32.xlu0 %v2135
    %v2141 = vpop.xlane.xlu0 %2140
    %2142 = vadd.xlane.f32.xlu0 %v2136
    %v2143 = vpop.xlane.xlu0 %2142
    %2144 = vadd.xlane.f32.xlu0 %v2137
    %v2145 = vpop.xlane.xlu0 %2144
    %v2146 = vmul.f32 %v2139, %v121
    %v2147 = vmul.f32 %v2141, %v121
    %v2148 = vmul.f32 %v2143, %v121
    %v2149 = vmul.f32 %v2145, %v121
    %v2150 = vadd.f32 %v2146, 1e-05
    %v2151 = vadd.f32 %v2147, 1e-05
    %v2152 = vadd.f32 %v2148, 1e-05
    %v2153 = vadd.f32 %v2149, 1e-05
    %v2154 = vrsqrt.pop %v2150
    %v2155 = vrsqrt.pop %v2151
    %v2156 = vrsqrt.pop %v2152
    %v2157 = vrsqrt.pop %v2153
    %v2158 = vmul.f32 %v2130, %v2154
    %v2159 = vmul.f32 %v2131, %v2155
    %v2160 = vmul.f32 %v2132, %v2156
    %v2161 = vmul.f32 %v2133, %v2157
    %v2162 = vpack.c.bf16 %v2159, %v2158
    %v2163 = vpack.c.bf16 %v2161, %v2160
    %v2164 = vld [vmem:[#allocation7 + $0x10] sm:$0xff]
    %v2165 = vld [vmem:[#allocation7 + $0x18] sm:$0xff]
    %v2166 = vld [vmem:[#allocation7 + $0x30] sm:$0xff]
    %v2167 = vld [vmem:[#allocation7 + $0x38] sm:$0xff]
    %v2168 = vld [vmem:[#allocation7 + $0x50] sm:$0xff]
    %v2169 = vld [vmem:[#allocation7 + $0x58] sm:$0xff]
    %v2170 = vld [vmem:[#allocation7 + $0x70] sm:$0xff]
    %v2171 = vld [vmem:[#allocation7 + $0x78] sm:$0xff]
    %v2172 = vld [vmem:[#allocation7 + $0x90] sm:$0xff]
    %v2173 = vld [vmem:[#allocation7 + $0x98] sm:$0xff]
    %v2174 = vld [vmem:[#allocation7 + $0xb0] sm:$0xff]
    %v2175 = vld [vmem:[#allocation7 + $0xb8] sm:$0xff]
    %v2176 = vld [vmem:[#allocation7 + $0xd0] sm:$0xff]
    %v2177 = vld [vmem:[#allocation7 + $0xd8] sm:$0xff]
    %v2178 = vld [vmem:[#allocation7 + $0xf0] sm:$0xff]
    %v2179 = vld [vmem:[#allocation7 + $0xf8] sm:$0xff]
    %v2180 = vld [vmem:[#allocation7 + $0x110] sm:$0xff]
    %v2181 = vld [vmem:[#allocation7 + $0x118] sm:$0xff]
    %v2182 = vld [vmem:[#allocation7 + $0x130] sm:$0xff]
    %v2183 = vld [vmem:[#allocation7 + $0x138] sm:$0xff]
    %v2184 = vld [vmem:[#allocation7 + $0x150] sm:$0xff]
    %v2185 = vld [vmem:[#allocation7 + $0x158] sm:$0xff]
    %v2186 = vld [vmem:[#allocation7 + $0x170] sm:$0xff]
    %v2187 = vld [vmem:[#allocation7 + $0x178] sm:$0xff]
    %v2188 = vld [vmem:[#allocation7 + $0x190] sm:$0xff]
    %v2189 = vld [vmem:[#allocation7 + $0x198] sm:$0xff]
    %v2190 = vld [vmem:[#allocation7 + $0x1b0] sm:$0xff]
    %v2191 = vld [vmem:[#allocation7 + $0x1b8] sm:$0xff]
    %v2192 = vld [vmem:[#allocation7 + $0x1d0] sm:$0xff]
    %v2193 = vld [vmem:[#allocation7 + $0x1d8] sm:$0xff]
    %v2194 = vld [vmem:[#allocation7 + $0x1f0] sm:$0xff]
    %v2195 = vld [vmem:[#allocation7 + $0x1f8] sm:$0xff]
    %v2196 = vld [vmem:[#allocation11 + $0x4] sm:$0xf]
    %v2198 = vlaneseq
    %v2199 = vshrl.u32 %v2198, 7
    %v2200 = vsub.s32 0, %v2199
    %v2201 = vrot.slane %v2196, %v2200
    %v2202 = vlaneseq
    %v2203 = vshrl.u32 %v2202, 7
    %v2204 = vsub.s32 1, %v2203
    %v2205 = vrot.slane %v2196, %v2204
    %v2206 = vlaneseq
    %v2207 = vshrl.u32 %v2206, 7
    %v2208 = vsub.s32 2, %v2207
    %v2209 = vrot.slane %v2196, %v2208
    %v2210 = vlaneseq
    %v2211 = vshrl.u32 %v2210, 7
    %v2212 = vsub.s32 3, %v2211
    %v2213 = vrot.slane %v2196, %v2212
    %v2250 = vunpack.c.l.b16 %v2164
    %v2251 = vunpack.c.h.b16 %v2164
    %v2252 = vunpack.c.l.b16 %v2165
    %v2253 = vunpack.c.h.b16 %v2165
    %v2254 = vunpack.c.l.b16 %v2166
    %v2255 = vunpack.c.h.b16 %v2166
    %v2256 = vunpack.c.l.b16 %v2167
    %v2257 = vunpack.c.h.b16 %v2167
    %v2258 = vunpack.c.l.b16 %v2168
    %v2259 = vunpack.c.h.b16 %v2168
    %v2260 = vunpack.c.l.b16 %v2169
    %v2261 = vunpack.c.h.b16 %v2169
    %v2262 = vunpack.c.l.b16 %v2170
    %v2263 = vunpack.c.h.b16 %v2170
    %v2264 = vunpack.c.l.b16 %v2171
    %v2265 = vunpack.c.h.b16 %v2171
    %v2266 = vunpack.c.l.b16 %v2172
    %v2267 = vunpack.c.h.b16 %v2172
    %v2268 = vunpack.c.l.b16 %v2173
    %v2269 = vunpack.c.h.b16 %v2173
    %v2270 = vunpack.c.l.b16 %v2174
    %v2271 = vunpack.c.h.b16 %v2174
    %v2272 = vunpack.c.l.b16 %v2175
    %v2273 = vunpack.c.h.b16 %v2175
    %v2274 = vunpack.c.l.b16 %v2176
    %v2275 = vunpack.c.h.b16 %v2176
    %v2276 = vunpack.c.l.b16 %v2177
    %v2277 = vunpack.c.h.b16 %v2177
    %v2278 = vunpack.c.l.b16 %v2178
    %v2279 = vunpack.c.h.b16 %v2178
    %v2280 = vunpack.c.l.b16 %v2179
    %v2281 = vunpack.c.h.b16 %v2179
    %v2282 = vunpack.c.l.b16 %v2180
    %v2283 = vunpack.c.h.b16 %v2180
    %v2284 = vunpack.c.l.b16 %v2181
    %v2285 = vunpack.c.h.b16 %v2181
    %v2286 = vunpack.c.l.b16 %v2182
    %v2287 = vunpack.c.h.b16 %v2182
    %v2288 = vunpack.c.l.b16 %v2183
    %v2289 = vunpack.c.h.b16 %v2183
    %v2290 = vunpack.c.l.b16 %v2184
    %v2291 = vunpack.c.h.b16 %v2184
    %v2292 = vunpack.c.l.b16 %v2185
    %v2293 = vunpack.c.h.b16 %v2185
    %v2294 = vunpack.c.l.b16 %v2186
    %v2295 = vunpack.c.h.b16 %v2186
    %v2296 = vunpack.c.l.b16 %v2187
    %v2297 = vunpack.c.h.b16 %v2187
    %v2298 = vunpack.c.l.b16 %v2188
    %v2299 = vunpack.c.h.b16 %v2188
    %v2300 = vunpack.c.l.b16 %v2189
    %v2301 = vunpack.c.h.b16 %v2189
    %v2302 = vunpack.c.l.b16 %v2190
    %v2303 = vunpack.c.h.b16 %v2190
    %v2304 = vunpack.c.l.b16 %v2191
    %v2305 = vunpack.c.h.b16 %v2191
    %v2306 = vunpack.c.l.b16 %v2192
    %v2307 = vunpack.c.h.b16 %v2192
    %v2308 = vunpack.c.l.b16 %v2193
    %v2309 = vunpack.c.h.b16 %v2193
    %v2310 = vunpack.c.l.b16 %v2194
    %v2311 = vunpack.c.h.b16 %v2194
    %v2312 = vunpack.c.l.b16 %v2195
    %v2313 = vunpack.c.h.b16 %v2195
    %v2314 = vpack.c.b16 %v2254, %v2250
    %v2315 = vpack.c.b16 %v2255, %v2251
    %v2316 = vpack.c.b16 %v2256, %v2252
    %v2317 = vpack.c.b16 %v2257, %v2253
    %v2318 = vpack.c.b16 %v2262, %v2258
    %v2319 = vpack.c.b16 %v2263, %v2259
    %v2320 = vpack.c.b16 %v2264, %v2260
    %v2321 = vpack.c.b16 %v2265, %v2261
    %v2322 = vpack.c.b16 %v2270, %v2266
    %v2323 = vpack.c.b16 %v2271, %v2267
    %v2324 = vpack.c.b16 %v2272, %v2268
    %v2325 = vpack.c.b16 %v2273, %v2269
    %v2326 = vpack.c.b16 %v2278, %v2274
    %v2327 = vpack.c.b16 %v2279, %v2275
    %v2328 = vpack.c.b16 %v2280, %v2276
    %v2329 = vpack.c.b16 %v2281, %v2277
    %v2330 = vpack.c.b16 %v2286, %v2282
    %v2331 = vpack.c.b16 %v2287, %v2283
    %v2332 = vpack.c.b16 %v2288, %v2284
    %v2333 = vpack.c.b16 %v2289, %v2285
    %v2334 = vpack.c.b16 %v2294, %v2290
    %v2335 = vpack.c.b16 %v2295, %v2291
    %v2336 = vpack.c.b16 %v2296, %v2292
    %v2337 = vpack.c.b16 %v2297, %v2293
    %v2338 = vpack.c.b16 %v2302, %v2298
    %v2339 = vpack.c.b16 %v2303, %v2299
    %v2340 = vpack.c.b16 %v2304, %v2300
    %v2341 = vpack.c.b16 %v2305, %v2301
    %v2342 = vpack.c.b16 %v2310, %v2306
    %v2343 = vpack.c.b16 %v2311, %v2307
    %v2344 = vpack.c.b16 %v2312, %v2308
    %v2345 = vpack.c.b16 %v2313, %v2309
    %2378 = vmatprep.subr.bf16.mxu0 %v2315
    %2379 = vmatpush1.bf16.msra.mxu0 %v2314
    %2380 = vmatprep.subr.bf16.mxu0 %v2319
    %2381 = vmatpush1.bf16.msra.mxu0 %v2318
    %2382 = vmatprep.subr.bf16.mxu0 %v2323
    %2383 = vmatpush1.bf16.msra.mxu0 %v2322
    %2384 = vmatprep.subr.bf16.mxu0 %v2327
    %2385 = vmatpush1.bf16.msra.mxu0 %v2326
    %2386 = vmatprep.subr.bf16.mxu0 %v2331
    %2387 = vmatpush1.bf16.msra.mxu0 %v2330
    %2388 = vmatprep.subr.bf16.mxu0 %v2335
    %2389 = vmatpush1.bf16.msra.mxu0 %v2334
    %2390 = vmatprep.subr.bf16.mxu0 %v2339
    %2391 = vmatpush1.bf16.msra.mxu0 %v2338
    %2392 = vmatprep.subr.bf16.mxu0 %v2343
    %2393 = vmatpush1.bf16.msra.mxu0 %v2342
    %2394 = vmatprep.subr.bf16.mxu0 0
    %2395 = vmatpush1.bf16.msra.mxu0 0
    %2396 = vmatprep.subr.bf16.mxu0 0
    %2397 = vmatpush1.bf16.msra.mxu0 0
    %2398 = vmatprep.subr.bf16.mxu0 0
    %2399 = vmatpush1.bf16.msra.mxu0 0
    %2400 = vmatprep.subr.bf16.mxu0 0
    %2401 = vmatpush1.bf16.msra.mxu0 0
    %2402 = vmatprep.subr.bf16.mxu0 0
    %2403 = vmatpush1.bf16.msra.mxu0 0
    %2404 = vmatprep.subr.bf16.mxu0 0
    %2405 = vmatpush1.bf16.msra.mxu0 0
    %2406 = vmatprep.subr.bf16.mxu0 0
    %2407 = vmatpush1.bf16.msra.mxu0 0
    %2408 = vmatprep.subr.bf16.mxu0 0
    %2409 = vmatpush1.bf16.msra.mxu0 0
    %2410 = vmatprep.mubr.bf16.mxu0 0
    %2411 = vmatmul.mubr.bf16.gmra.mrb[0].mxu0 %v2162
    %v2412 = vpop.f32.mrb[0].mxu0
    %v2413 = vadd.f32 %v2201, %v2412
    %v2414 = vpop.f32.mrb[0].mxu0
    %v2415 = vadd.f32 %v2205, %v2414
    %v2416 = vpop.f32.mrb[0].mxu0
    %v2417 = vadd.f32 %v2201, %v2416
    %v2418 = vpop.f32.mrb[0].mxu0
    %v2419 = vadd.f32 %v2205, %v2418
    %2420 = vmatprep.mubr.bf16.mxu0 0
    %2421 = vmatmul.mubr.bf16.gmra.mrb[0].mxu0 %v2163
    %v2422 = vpop.f32.mrb[0].mxu0
    %v2423 = vadd.f32 %v2201, %v2422
    %v2424 = vpop.f32.mrb[0].mxu0
    %v2425 = vadd.f32 %v2205, %v2424
    %v2426 = vpop.f32.mrb[0].mxu0
    %v2427 = vadd.f32 %v2201, %v2426
    %v2428 = vpop.f32.mrb[0].mxu0
    %v2429 = vadd.f32 %v2205, %v2428
    %2430 = vdwg.mxu0
    %2431 = vmatprep.subr.bf16.mxu0 %v2317
    %2432 = vmatpush1.bf16.msra.mxu0 %v2316
    %2433 = vmatprep.subr.bf16.mxu0 %v2321
    %2434 = vmatpush1.bf16.msra.mxu0 %v2320
    %2435 = vmatprep.subr.bf16.mxu0 %v2325
    %2436 = vmatpush1.bf16.msra.mxu0 %v2324
    %2437 = vmatprep.subr.bf16.mxu0 %v2329
    %2438 = vmatpush1.bf16.msra.mxu0 %v2328
    %2439 = vmatprep.subr.bf16.mxu0 %v2333
    %2440 = vmatpush1.bf16.msra.mxu0 %v2332
    %2441 = vmatprep.subr.bf16.mxu0 %v2337
    %2442 = vmatpush1.bf16.msra.mxu0 %v2336
    %2443 = vmatprep.subr.bf16.mxu0 %v2341
    %2444 = vmatpush1.bf16.msra.mxu0 %v2340
    %2445 = vmatprep.subr.bf16.mxu0 %v2345
    %2446 = vmatpush1.bf16.msra.mxu0 %v2344
    %2447 = vmatprep.subr.bf16.mxu0 0
    %2448 = vmatpush1.bf16.msra.mxu0 0
    %2449 = vmatprep.subr.bf16.mxu0 0
    %2450 = vmatpush1.bf16.msra.mxu0 0
    %2451 = vmatprep.subr.bf16.mxu0 0
    %2452 = vmatpush1.bf16.msra.mxu0 0
    %2453 = vmatprep.subr.bf16.mxu0 0
    %2454 = vmatpush1.bf16.msra.mxu0 0
    %2455 = vmatprep.subr.bf16.mxu0 0
    %2456 = vmatpush1.bf16.msra.mxu0 0
    %2457 = vmatprep.subr.bf16.mxu0 0
    %2458 = vmatpush1.bf16.msra.mxu0 0
    %2459 = vmatprep.subr.bf16.mxu0 0
    %2460 = vmatpush1.bf16.msra.mxu0 0
    %2461 = vmatprep.subr.bf16.mxu0 0
    %2462 = vmatpush1.bf16.msra.mxu0 0
    %2463 = vmatprep.mubr.bf16.mxu0 0
    %2464 = vmatmul.mubr.bf16.gmra.mrb[0].mxu0 %v2162
    %v2465 = vpop.f32.mrb[0].mxu0
    %v2466 = vadd.f32 %v2209, %v2465
    %v2467 = vpop.f32.mrb[0].mxu0
    %v2468 = vadd.f32 %v2213, %v2467
    %v2469 = vpop.f32.mrb[0].mxu0
    %v2470 = vadd.f32 %v2209, %v2469
    %v2471 = vpop.f32.mrb[0].mxu0
    %v2472 = vadd.f32 %v2213, %v2471
    %2473 = vmatprep.mubr.bf16.mxu0 0
    %2474 = vmatmul.mubr.bf16.gmra.mrb[0].mxu0 %v2163
    %v2475 = vpop.f32.mrb[0].mxu0
    %v2476 = vadd.f32 %v2209, %v2475
    %v2477 = vpop.f32.mrb[0].mxu0
    %v2478 = vadd.f32 %v2213, %v2477
    %v2479 = vpop.f32.mrb[0].mxu0
    %v2480 = vadd.f32 %v2209, %v2479
    %v2481 = vpop.f32.mrb[0].mxu0
    %v2482 = vadd.f32 %v2213, %v2481
    %2483 = vdwg.mxu0
    %v2484 = vmax.f32 %v2413, 0.0
    %v2485 = vmax.f32 %v2415, 0.0
    %v2486 = vmax.f32 %v2466, 0.0
    %v2487 = vmax.f32 %v2468, 0.0
    %v2488 = vmax.f32 %v2417, 0.0
    %v2489 = vmax.f32 %v2419, 0.0
    %v2490 = vmax.f32 %v2470, 0.0
    %v2491 = vmax.f32 %v2472, 0.0
    %v2492 = vmax.f32 %v2423, 0.0
    %v2493 = vmax.f32 %v2425, 0.0
    %v2494 = vmax.f32 %v2476, 0.0
    %v2495 = vmax.f32 %v2478, 0.0
    %v2496 = vmax.f32 %v2427, 0.0
    %v2497 = vmax.f32 %v2429, 0.0
    %v2498 = vmax.f32 %v2480, 0.0
    %v2499 = vmax.f32 %v2482, 0.0
    %v2500 = vpack.c.bf16 %v2488, %v2484
    %v2501 = vpack.c.bf16 %v2489, %v2485
    %v2502 = vpack.c.bf16 %v2490, %v2486
    %v2503 = vpack.c.bf16 %v2491, %v2487
    %v2504 = vpack.c.bf16 %v2496, %v2492
    %v2505 = vpack.c.bf16 %v2497, %v2493
    %v2506 = vpack.c.bf16 %v2498, %v2494
    %v2507 = vpack.c.bf16 %v2499, %v2495
    %v2508 = vld [vmem:[#allocation8] sm:$0xf]
    %v2509 = vld [vmem:[#allocation8 + $0x4] sm:$0xf]
    %v2510 = vld [vmem:[#allocation8 + $0x8] sm:$0xf]
    %v2511 = vld [vmem:[#allocation8 + $0xc] sm:$0xf]
    %v2512 = vld [vmem:[#allocation8 + $0x10] sm:$0xf]
    %v2513 = vld [vmem:[#allocation8 + $0x14] sm:$0xf]
    %v2514 = vld [vmem:[#allocation8 + $0x18] sm:$0xf]
    %v2515 = vld [vmem:[#allocation8 + $0x1c] sm:$0xf]
    %v2516 = vld [vmem:[#allocation8 + $0x20] sm:$0xf]
    %v2517 = vld [vmem:[#allocation8 + $0x24] sm:$0xf]
    %v2518 = vld [vmem:[#allocation8 + $0x28] sm:$0xf]
    %v2519 = vld [vmem:[#allocation8 + $0x2c] sm:$0xf]
    %v2520 = vld [vmem:[#allocation8 + $0x30] sm:$0xf]
    %v2521 = vld [vmem:[#allocation8 + $0x34] sm:$0xf]
    %v2522 = vld [vmem:[#allocation8 + $0x38] sm:$0xf]
    %v2523 = vld [vmem:[#allocation8 + $0x3c] sm:$0xf]
    %v2524 = vld [vmem:[#allocation8 + $0x40] sm:$0xf]
    %v2525 = vld [vmem:[#allocation8 + $0x44] sm:$0xf]
    %v2526 = vld [vmem:[#allocation8 + $0x48] sm:$0xf]
    %v2527 = vld [vmem:[#allocation8 + $0x4c] sm:$0xf]
    %v2528 = vld [vmem:[#allocation8 + $0x50] sm:$0xf]
    %v2529 = vld [vmem:[#allocation8 + $0x54] sm:$0xf]
    %v2530 = vld [vmem:[#allocation8 + $0x58] sm:$0xf]
    %v2531 = vld [vmem:[#allocation8 + $0x5c] sm:$0xf]
    %v2532 = vld [vmem:[#allocation8 + $0x60] sm:$0xf]
    %v2533 = vld [vmem:[#allocation8 + $0x64] sm:$0xf]
    %v2534 = vld [vmem:[#allocation8 + $0x68] sm:$0xf]
    %v2535 = vld [vmem:[#allocation8 + $0x6c] sm:$0xf]
    %v2536 = vld [vmem:[#allocation8 + $0x70] sm:$0xf]
    %v2537 = vld [vmem:[#allocation8 + $0x74] sm:$0xf]
    %v2538 = vld [vmem:[#allocation8 + $0x78] sm:$0xf]
    %v2539 = vld [vmem:[#allocation8 + $0x7c] sm:$0xf]
    %v2540 = vld [vmem:[#allocation8 + $0x80] sm:$0xf]
    %v2541 = vld [vmem:[#allocation8 + $0x84] sm:$0xf]
    %v2542 = vld [vmem:[#allocation8 + $0x88] sm:$0xf]
    %v2543 = vld [vmem:[#allocation8 + $0x8c] sm:$0xf]
    %v2544 = vld [vmem:[#allocation8 + $0x90] sm:$0xf]
    %v2545 = vld [vmem:[#allocation8 + $0x94] sm:$0xf]
    %v2546 = vld [vmem:[#allocation8 + $0x98] sm:$0xf]
    %v2547 = vld [vmem:[#allocation8 + $0x9c] sm:$0xf]
    %v2548 = vld [vmem:[#allocation8 + $0xa0] sm:$0xf]
    %v2549 = vld [vmem:[#allocation8 + $0xa4] sm:$0xf]
    %v2550 = vld [vmem:[#allocation8 + $0xa8] sm:$0xf]
    %v2551 = vld [vmem:[#allocation8 + $0xac] sm:$0xf]
    %v2552 = vld [vmem:[#allocation8 + $0xb0] sm:$0xf]
    %v2553 = vld [vmem:[#allocation8 + $0xb4] sm:$0xf]
    %v2554 = vld [vmem:[#allocation8 + $0xb8] sm:$0xf]
    %v2555 = vld [vmem:[#allocation8 + $0xbc] sm:$0xf]
    %v2556 = vld [vmem:[#allocation8 + $0xc0] sm:$0xf]
    %v2557 = vld [vmem:[#allocation8 + $0xc4] sm:$0xf]
    %v2558 = vld [vmem:[#allocation8 + $0xc8] sm:$0xf]
    %v2559 = vld [vmem:[#allocation8 + $0xcc] sm:$0xf]
    %v2560 = vld [vmem:[#allocation8 + $0xd0] sm:$0xf]
    %v2561 = vld [vmem:[#allocation8 + $0xd4] sm:$0xf]
    %v2562 = vld [vmem:[#allocation8 + $0xd8] sm:$0xf]
    %v2563 = vld [vmem:[#allocation8 + $0xdc] sm:$0xf]
    %v2564 = vld [vmem:[#allocation8 + $0xe0] sm:$0xf]
    %v2565 = vld [vmem:[#allocation8 + $0xe4] sm:$0xf]
    %v2566 = vld [vmem:[#allocation8 + $0xe8] sm:$0xf]
    %v2567 = vld [vmem:[#allocation8 + $0xec] sm:$0xf]
    %v2568 = vld [vmem:[#allocation8 + $0xf0] sm:$0xf]
    %v2569 = vld [vmem:[#allocation8 + $0xf4] sm:$0xf]
    %v2570 = vld [vmem:[#allocation8 + $0xf8] sm:$0xf]
    %v2571 = vld [vmem:[#allocation8 + $0xfc] sm:$0xf]
    %v2572 = vld [vmem:[#allocation11 + $0x8] sm:$0x1]
    %v2574 = vlaneseq
    %v2575 = vshrl.u32 %v2574, 7
    %v2576 = vsub.s32 0, %v2575
    %v2577 = vrot.slane %v2572, %v2576
    %v2643 = vunpack.c.l.b16 %v2508
    %v2644 = vunpack.c.l.b16 %v2509
    %v2645 = vunpack.c.l.b16 %v2510
    %v2646 = vunpack.c.l.b16 %v2511
    %v2647 = vunpack.c.l.b16 %v2512
    %v2648 = vunpack.c.l.b16 %v2513
    %v2649 = vunpack.c.l.b16 %v2514
    %v2650 = vunpack.c.l.b16 %v2515
    %v2651 = vunpack.c.l.b16 %v2516
    %v2652 = vunpack.c.l.b16 %v2517
    %v2653 = vunpack.c.l.b16 %v2518
    %v2654 = vunpack.c.l.b16 %v2519
    %v2655 = vunpack.c.l.b16 %v2520
    %v2656 = vunpack.c.l.b16 %v2521
    %v2657 = vunpack.c.l.b16 %v2522
    %v2658 = vunpack.c.l.b16 %v2523
    %v2659 = vunpack.c.l.b16 %v2524
    %v2660 = vunpack.c.l.b16 %v2525
    %v2661 = vunpack.c.l.b16 %v2526
    %v2662 = vunpack.c.l.b16 %v2527
    %v2663 = vunpack.c.l.b16 %v2528
    %v2664 = vunpack.c.l.b16 %v2529
    %v2665 = vunpack.c.l.b16 %v2530
    %v2666 = vunpack.c.l.b16 %v2531
    %v2667 = vunpack.c.l.b16 %v2532
    %v2668 = vunpack.c.l.b16 %v2533
    %v2669 = vunpack.c.l.b16 %v2534
    %v2670 = vunpack.c.l.b16 %v2535
    %v2671 = vunpack.c.l.b16 %v2536
    %v2672 = vunpack.c.l.b16 %v2537
    %v2673 = vunpack.c.l.b16 %v2538
    %v2674 = vunpack.c.l.b16 %v2539
    %v2675 = vunpack.c.l.b16 %v2540
    %v2676 = vunpack.c.l.b16 %v2541
    %v2677 = vunpack.c.l.b16 %v2542
    %v2678 = vunpack.c.l.b16 %v2543
    %v2679 = vunpack.c.l.b16 %v2544
    %v2680 = vunpack.c.l.b16 %v2545
    %v2681 = vunpack.c.l.b16 %v2546
    %v2682 = vunpack.c.l.b16 %v2547
    %v2683 = vunpack.c.l.b16 %v2548
    %v2684 = vunpack.c.l.b16 %v2549
    %v2685 = vunpack.c.l.b16 %v2550
    %v2686 = vunpack.c.l.b16 %v2551
    %v2687 = vunpack.c.l.b16 %v2552
    %v2688 = vunpack.c.l.b16 %v2553
    %v2689 = vunpack.c.l.b16 %v2554
    %v2690 = vunpack.c.l.b16 %v2555
    %v2691 = vunpack.c.l.b16 %v2556
    %v2692 = vunpack.c.l.b16 %v2557
    %v2693 = vunpack.c.l.b16 %v2558
    %v2694 = vunpack.c.l.b16 %v2559
    %v2695 = vunpack.c.l.b16 %v2560
    %v2696 = vunpack.c.l.b16 %v2561
    %v2697 = vunpack.c.l.b16 %v2562
    %v2698 = vunpack.c.l.b16 %v2563
    %v2699 = vunpack.c.l.b16 %v2564
    %v2700 = vunpack.c.l.b16 %v2565
    %v2701 = vunpack.c.l.b16 %v2566
    %v2702 = vunpack.c.l.b16 %v2567
    %v2703 = vunpack.c.l.b16 %v2568
    %v2704 = vunpack.c.l.b16 %v2569
    %v2705 = vunpack.c.l.b16 %v2570
    %v2706 = vunpack.c.l.b16 %v2571
    %v2707 = vpack.c.b16 %v2644, %v2643
    %v2708 = vpack.c.b16 %v2646, %v2645
    %v2709 = vpack.c.b16 %v2648, %v2647
    %v2710 = vpack.c.b16 %v2650, %v2649
    %v2711 = vpack.c.b16 %v2652, %v2651
    %v2712 = vpack.c.b16 %v2654, %v2653
    %v2713 = vpack.c.b16 %v2656, %v2655
    %v2714 = vpack.c.b16 %v2658, %v2657
    %v2715 = vpack.c.b16 %v2660, %v2659
    %v2716 = vpack.c.b16 %v2662, %v2661
    %v2717 = vpack.c.b16 %v2664, %v2663
    %v2718 = vpack.c.b16 %v2666, %v2665
    %v2719 = vpack.c.b16 %v2668, %v2667
    %v2720 = vpack.c.b16 %v2670, %v2669
    %v2721 = vpack.c.b16 %v2672, %v2671
    %v2722 = vpack.c.b16 %v2674, %v2673
    %v2723 = vpack.c.b16 %v2676, %v2675
    %v2724 = vpack.c.b16 %v2678, %v2677
    %v2725 = vpack.c.b16 %v2680, %v2679
    %v2726 = vpack.c.b16 %v2682, %v2681
    %v2727 = vpack.c.b16 %v2684, %v2683
    %v2728 = vpack.c.b16 %v2686, %v2685
    %v2729 = vpack.c.b16 %v2688, %v2687
    %v2730 = vpack.c.b16 %v2690, %v2689
    %v2731 = vpack.c.b16 %v2692, %v2691
    %v2732 = vpack.c.b16 %v2694, %v2693
    %v2733 = vpack.c.b16 %v2696, %v2695
    %v2734 = vpack.c.b16 %v2698, %v2697
    %v2735 = vpack.c.b16 %v2700, %v2699
    %v2736 = vpack.c.b16 %v2702, %v2701
    %v2737 = vpack.c.b16 %v2704, %v2703
    %v2738 = vpack.c.b16 %v2706, %v2705
    %2771 = vmatprep.subr.bf16.mxu0 0
    %2772 = vmatpush1.bf16.msra.mxu0 %v2707
    %2773 = vmatprep.subr.bf16.mxu0 0
    %2774 = vmatpush1.bf16.msra.mxu0 %v2708
    %2775 = vmatprep.subr.bf16.mxu0 0
    %2776 = vmatpush1.bf16.msra.mxu0 %v2709
    %2777 = vmatprep.subr.bf16.mxu0 0
    %2778 = vmatpush1.bf16.msra.mxu0 %v2710
    %2779 = vmatprep.subr.bf16.mxu0 0
    %2780 = vmatpush1.bf16.msra.mxu0 %v2711
    %2781 = vmatprep.subr.bf16.mxu0 0
    %2782 = vmatpush1.bf16.msra.mxu0 %v2712
    %2783 = vmatprep.subr.bf16.mxu0 0
    %2784 = vmatpush1.bf16.msra.mxu0 %v2713
    %2785 = vmatprep.subr.bf16.mxu0 0
    %2786 = vmatpush1.bf16.msra.mxu0 %v2714
    %2787 = vmatprep.subr.bf16.mxu0 0
    %2788 = vmatpush1.bf16.msra.mxu0 %v2715
    %2789 = vmatprep.subr.bf16.mxu0 0
    %2790 = vmatpush1.bf16.msra.mxu0 %v2716
    %2791 = vmatprep.subr.bf16.mxu0 0
    %2792 = vmatpush1.bf16.msra.mxu0 %v2717
    %2793 = vmatprep.subr.bf16.mxu0 0
    %2794 = vmatpush1.bf16.msra.mxu0 %v2718
    %2795 = vmatprep.subr.bf16.mxu0 0
    %2796 = vmatpush1.bf16.msra.mxu0 %v2719
    %2797 = vmatprep.subr.bf16.mxu0 0
    %2798 = vmatpush1.bf16.msra.mxu0 %v2720
    %2799 = vmatprep.subr.bf16.mxu0 0
    %2800 = vmatpush1.bf16.msra.mxu0 %v2721
    %2801 = vmatprep.subr.bf16.mxu0 0
    %2802 = vmatpush1.bf16.msra.mxu0 %v2722
    %2803 = vmatprep.mubr.bf16.mxu0 %v2501
    %2804 = vmatmul.mubr.bf16.gmra.mrb[0].mxu0 %v2500
    %v2805 = vpop.f32.mrb[0].mxu0
    %v2806 = vadd.f32 %v2577, %v2805
    %v2807 = vpop.f32.mrb[0].mxu0
    %v2808 = vpop.f32.mrb[0].mxu0
    %v2809 = vadd.f32 %v2577, %v2808
    %v2810 = vpop.f32.mrb[0].mxu0
    %2811 = vmatprep.mubr.bf16.mxu0 %v2505
    %2812 = vmatmul.mubr.bf16.gmra.mrb[0].mxu0 %v2504
    %v2813 = vpop.f32.mrb[0].mxu0
    %v2814 = vadd.f32 %v2577, %v2813
    %v2815 = vpop.f32.mrb[0].mxu0
    %v2816 = vpop.f32.mrb[0].mxu0
    %v2817 = vadd.f32 %v2577, %v2816
    %v2818 = vpop.f32.mrb[0].mxu0
    %2819 = vdwg.mxu0
    %2820 = vmatprep.subr.bf16.mxu0 0
    %2821 = vmatpush1.bf16.msra.mxu0 %v2723
    %2822 = vmatprep.subr.bf16.mxu0 0
    %2823 = vmatpush1.bf16.msra.mxu0 %v2724
    %2824 = vmatprep.subr.bf16.mxu0 0
    %2825 = vmatpush1.bf16.msra.mxu0 %v2725
    %2826 = vmatprep.subr.bf16.mxu0 0
    %2827 = vmatpush1.bf16.msra.mxu0 %v2726
    %2828 = vmatprep.subr.bf16.mxu0 0
    %2829 = vmatpush1.bf16.msra.mxu0 %v2727
    %2830 = vmatprep.subr.bf16.mxu0 0
    %2831 = vmatpush1.bf16.msra.mxu0 %v2728
    %2832 = vmatprep.subr.bf16.mxu0 0
    %2833 = vmatpush1.bf16.msra.mxu0 %v2729
    %2834 = vmatprep.subr.bf16.mxu0 0
    %2835 = vmatpush1.bf16.msra.mxu0 %v2730
    %2836 = vmatprep.subr.bf16.mxu0 0
    %2837 = vmatpush1.bf16.msra.mxu0 %v2731
    %2838 = vmatprep.subr.bf16.mxu0 0
    %2839 = vmatpush1.bf16.msra.mxu0 %v2732
    %2840 = vmatprep.subr.bf16.mxu0 0
    %2841 = vmatpush1.bf16.msra.mxu0 %v2733
    %2842 = vmatprep.subr.bf16.mxu0 0
    %2843 = vmatpush1.bf16.msra.mxu0 %v2734
    %2844 = vmatprep.subr.bf16.mxu0 0
    %2845 = vmatpush1.bf16.msra.mxu0 %v2735
    %2846 = vmatprep.subr.bf16.mxu0 0
    %2847 = vmatpush1.bf16.msra.mxu0 %v2736
    %2848 = vmatprep.subr.bf16.mxu0 0
    %2849 = vmatpush1.bf16.msra.mxu0 %v2737
    %2850 = vmatprep.subr.bf16.mxu0 0
    %2851 = vmatpush1.bf16.msra.mxu0 %v2738
    %2852 = vmatprep.mubr.bf16.mxu0 %v2503
    %2853 = vmatmul.mubr.bf16.gmra.mrb[0].mxu0 %v2502
    %v2854 = vpop.f32.mrb[0].mxu0
    %v2855 = vadd.f32 %v2806, %v2854
    %v2856 = vpop.f32.mrb[0].mxu0
    %v2857 = vpop.f32.mrb[0].mxu0
    %v2858 = vadd.f32 %v2809, %v2857
    %v2859 = vpop.f32.mrb[0].mxu0
    %2860 = vmatprep.mubr.bf16.mxu0 %v2507
    %2861 = vmatmul.mubr.bf16.gmra.mrb[0].mxu0 %v2506
    %v2862 = vpop.f32.mrb[0].mxu0
    %v2863 = vadd.f32 %v2814, %v2862
    %v2864 = vpop.f32.mrb[0].mxu0
    %v2865 = vpop.f32.mrb[0].mxu0
    %v2866 = vadd.f32 %v2817, %v2865
    %v2867 = vpop.f32.mrb[0].mxu0
    %2868 = vdwg.mxu0
    %v2869 = vadd.f32 %v2114, %v2855
    %v2870 = vadd.f32 %v2115, %v2858
    %v2871 = vadd.f32 %v2116, %v2863
    %v2872 = vadd.f32 %v2117, %v2866
    %2873 = vadd.xlane.f32.xlu0 %v2869
    %v2874 = vpop.xlane.xlu0 %2873
    %2875 = vadd.xlane.f32.xlu0 %v2870
    %v2876 = vpop.xlane.xlu0 %2875
    %2877 = vadd.xlane.f32.xlu0 %v2871
    %v2878 = vpop.xlane.xlu0 %2877
    %2879 = vadd.xlane.f32.xlu0 %v2872
    %v2880 = vpop.xlane.xlu0 %2879
    %v2881 = vmul.f32 %v2874, %v121
    %v2882 = vmul.f32 %v2876, %v121
    %v2883 = vmul.f32 %v2878, %v121
    %v2884 = vmul.f32 %v2880, %v121
    %v2885 = vsub.f32 %v2869, %v2881
    %v2886 = vsub.f32 %v2870, %v2882
    %v2887 = vsub.f32 %v2871, %v2883
    %v2888 = vsub.f32 %v2872, %v2884
    %v2889 = vmul.f32 %v2885, %v2885
    %v2890 = vmul.f32 %v2886, %v2886
    %v2891 = vmul.f32 %v2887, %v2887
    %v2892 = vmul.f32 %v2888, %v2888
    %2893 = vadd.xlane.f32.xlu0 %v2889
    %v2894 = vpop.xlane.xlu0 %2893
    %2895 = vadd.xlane.f32.xlu0 %v2890
    %v2896 = vpop.xlane.xlu0 %2895
    %2897 = vadd.xlane.f32.xlu0 %v2891
    %v2898 = vpop.xlane.xlu0 %2897
    %2899 = vadd.xlane.f32.xlu0 %v2892
    %v2900 = vpop.xlane.xlu0 %2899
    %v2901 = vmul.f32 %v2894, %v121
    %v2902 = vmul.f32 %v2896, %v121
    %v2903 = vmul.f32 %v2898, %v121
    %v2904 = vmul.f32 %v2900, %v121
    %v2905 = vadd.f32 %v2901, 1e-05
    %v2906 = vadd.f32 %v2902, 1e-05
    %v2907 = vadd.f32 %v2903, 1e-05
    %v2908 = vadd.f32 %v2904, 1e-05
    %v2909 = vrsqrt.pop %v2905
    %v2910 = vrsqrt.pop %v2906
    %v2911 = vrsqrt.pop %v2907
    %v2912 = vrsqrt.pop %v2908
    %v2913 = vmul.f32 %v2885, %v2909
    %v2914 = vmul.f32 %v2886, %v2910
    %v2915 = vmul.f32 %v2887, %v2911
    %v2916 = vmul.f32 %v2888, %v2912
    %v2917 = vpack.c.bf16 %v2914, %v2913
    %v2918 = vpack.c.bf16 %v2916, %v2915
    %s2919 = scalar_lea.vmem [#allocation7], 512
    %v2920 = vld [vmem:[%s2919] sm:$0xff]
    %v2921 = vld [vmem:[%s2919 + $0x8] sm:$0xf]
    %v2922 = vld [vmem:[%s2919 + $0x20] sm:$0xff]
    %v2923 = vld [vmem:[%s2919 + $0x28] sm:$0xf]
    %v2924 = vld [vmem:[%s2919 + $0x40] sm:$0xff]
    %v2925 = vld [vmem:[%s2919 + $0x48] sm:$0xf]
    %v2926 = vld [vmem:[%s2919 + $0x60] sm:$0xff]
    %v2927 = vld [vmem:[%s2919 + $0x68] sm:$0xf]
    %v2928 = vld [vmem:[%s2919 + $0x80] sm:$0xff]
    %v2929 = vld [vmem:[%s2919 + $0x88] sm:$0xf]
    %v2930 = vld [vmem:[%s2919 + $0xa0] sm:$0xff]
    %v2931 = vld [vmem:[%s2919 + $0xa8] sm:$0xf]
    %v2932 = vld [vmem:[%s2919 + $0xc0] sm:$0xff]
    %v2933 = vld [vmem:[%s2919 + $0xc8] sm:$0xf]
    %v2934 = vld [vmem:[%s2919 + $0xe0] sm:$0xff]
    %v2935 = vld [vmem:[%s2919 + $0xe8] sm:$0xf]
    %v2936 = vld [vmem:[%s2919 + $0x100] sm:$0xff]
    %v2937 = vld [vmem:[%s2919 + $0x108] sm:$0xf]
    %v2938 = vld [vmem:[%s2919 + $0x120] sm:$0xff]
    %v2939 = vld [vmem:[%s2919 + $0x128] sm:$0xf]
    %v2940 = vld [vmem:[%s2919 + $0x140] sm:$0xff]
    %v2941 = vld [vmem:[%s2919 + $0x148] sm:$0xf]
    %v2942 = vld [vmem:[%s2919 + $0x160] sm:$0xff]
    %v2943 = vld [vmem:[%s2919 + $0x168] sm:$0xf]
    %v2944 = vld [vmem:[%s2919 + $0x180] sm:$0xff]
    %v2945 = vld [vmem:[%s2919 + $0x188] sm:$0xf]
    %v2946 = vld [vmem:[%s2919 + $0x1a0] sm:$0xff]
    %v2947 = vld [vmem:[%s2919 + $0x1a8] sm:$0xf]
    %v2948 = vld [vmem:[%s2919 + $0x1c0] sm:$0xff]
    %v2949 = vld [vmem:[%s2919 + $0x1c8] sm:$0xf]
    %v2950 = vld [vmem:[%s2919 + $0x1e0] sm:$0xff]
    %v2951 = vld [vmem:[%s2919 + $0x1e8] sm:$0xf]
    %v2952 = vld [vmem:[#allocation11 + $0x9] sm:$0x7]
    %v2954 = vlaneseq
    %v2955 = vshrl.u32 %v2954, 7
    %v2956 = vsub.s32 0, %v2955
    %v2957 = vrot.slane %v2952, %v2956
    %v2958 = vlaneseq
    %v2959 = vshrl.u32 %v2958, 7
    %v2960 = vsub.s32 1, %v2959
    %v2961 = vrot.slane %v2952, %v2960
    %v2962 = vlaneseq
    %v2963 = vshrl.u32 %v2962, 7
    %v2964 = vsub.s32 2, %v2963
    %v2965 = vrot.slane %v2952, %v2964
    %v3001 = vunpack.c.l.b16 %v2920
    %v3002 = vunpack.c.h.b16 %v2920
    %v3003 = vunpack.c.l.b16 %v2921
    %v3004 = vunpack.c.l.b16 %v2922
    %v3005 = vunpack.c.h.b16 %v2922
    %v3006 = vunpack.c.l.b16 %v2923
    %v3007 = vunpack.c.l.b16 %v2924
    %v3008 = vunpack.c.h.b16 %v2924
    %v3009 = vunpack.c.l.b16 %v2925
    %v3010 = vunpack.c.l.b16 %v2926
    %v3011 = vunpack.c.h.b16 %v2926
    %v3012 = vunpack.c.l.b16 %v2927
    %v3013 = vunpack.c.l.b16 %v2928
    %v3014 = vunpack.c.h.b16 %v2928
    %v3015 = vunpack.c.l.b16 %v2929
    %v3016 = vunpack.c.l.b16 %v2930
    %v3017 = vunpack.c.h.b16 %v2930
    %v3018 = vunpack.c.l.b16 %v2931
    %v3019 = vunpack.c.l.b16 %v2932
    %v3020 = vunpack.c.h.b16 %v2932
    %v3021 = vunpack.c.l.b16 %v2933
    %v3022 = vunpack.c.l.b16 %v2934
    %v3023 = vunpack.c.h.b16 %v2934
    %v3024 = vunpack.c.l.b16 %v2935
    %v3025 = vunpack.c.l.b16 %v2936
    %v3026 = vunpack.c.h.b16 %v2936
    %v3027 = vunpack.c.l.b16 %v2937
    %v3028 = vunpack.c.l.b16 %v2938
    %v3029 = vunpack.c.h.b16 %v2938
    %v3030 = vunpack.c.l.b16 %v2939
    %v3031 = vunpack.c.l.b16 %v2940
    %v3032 = vunpack.c.h.b16 %v2940
    %v3033 = vunpack.c.l.b16 %v2941
    %v3034 = vunpack.c.l.b16 %v2942
    %v3035 = vunpack.c.h.b16 %v2942
    %v3036 = vunpack.c.l.b16 %v2943
    %v3037 = vunpack.c.l.b16 %v2944
    %v3038 = vunpack.c.h.b16 %v2944
    %v3039 = vunpack.c.l.b16 %v2945
    %v3040 = vunpack.c.l.b16 %v2946
    %v3041 = vunpack.c.h.b16 %v2946
    %v3042 = vunpack.c.l.b16 %v2947
    %v3043 = vunpack.c.l.b16 %v2948
    %v3044 = vunpack.c.h.b16 %v2948
    %v3045 = vunpack.c.l.b16 %v2949
    %v3046 = vunpack.c.l.b16 %v2950
    %v3047 = vunpack.c.h.b16 %v2950
    %v3048 = vunpack.c.l.b16 %v2951
    %v3049 = vpack.c.b16 %v3004, %v3001
    %v3050 = vpack.c.b16 %v3005, %v3002
    %v3051 = vpack.c.b16 %v3006, %v3003
    %v3052 = vpack.c.b16 %v3010, %v3007
    %v3053 = vpack.c.b16 %v3011, %v3008
    %v3054 = vpack.c.b16 %v3012, %v3009
    %v3055 = vpack.c.b16 %v3016, %v3013
    %v3056 = vpack.c.b16 %v3017, %v3014
    %v3057 = vpack.c.b16 %v3018, %v3015
    %v3058 = vpack.c.b16 %v3022, %v3019
    %v3059 = vpack.c.b16 %v3023, %v3020
    %v3060 = vpack.c.b16 %v3024, %v3021
    %v3061 = vpack.c.b16 %v3028, %v3025
    %v3062 = vpack.c.b16 %v3029, %v3026
    %v3063 = vpack.c.b16 %v3030, %v3027
    %v3064 = vpack.c.b16 %v3034, %v3031
    %v3065 = vpack.c.b16 %v3035, %v3032
    %v3066 = vpack.c.b16 %v3036, %v3033
    %v3067 = vpack.c.b16 %v3040, %v3037
    %v3068 = vpack.c.b16 %v3041, %v3038
    %v3069 = vpack.c.b16 %v3042, %v3039
    %v3070 = vpack.c.b16 %v3046, %v3043
    %v3071 = vpack.c.b16 %v3047, %v3044
    %v3072 = vpack.c.b16 %v3048, %v3045
    %3097 = vmatprep.subr.bf16.mxu0 %v3050
    %3098 = vmatpush1.bf16.msra.mxu0 %v3049
    %3099 = vmatprep.subr.bf16.mxu0 %v3053
    %3100 = vmatpush1.bf16.msra.mxu0 %v3052
    %3101 = vmatprep.subr.bf16.mxu0 %v3056
    %3102 = vmatpush1.bf16.msra.mxu0 %v3055
    %3103 = vmatprep.subr.bf16.mxu0 %v3059
    %3104 = vmatpush1.bf16.msra.mxu0 %v3058
    %3105 = vmatprep.subr.bf16.mxu0 %v3062
    %3106 = vmatpush1.bf16.msra.mxu0 %v3061
    %3107 = vmatprep.subr.bf16.mxu0 %v3065
    %3108 = vmatpush1.bf16.msra.mxu0 %v3064
    %3109 = vmatprep.subr.bf16.mxu0 %v3068
    %3110 = vmatpush1.bf16.msra.mxu0 %v3067
    %3111 = vmatprep.subr.bf16.mxu0 %v3071
    %3112 = vmatpush1.bf16.msra.mxu0 %v3070
    %3113 = vmatprep.subr.bf16.mxu0 0
    %3114 = vmatpush1.bf16.msra.mxu0 0
    %3115 = vmatprep.subr.bf16.mxu0 0
    %3116 = vmatpush1.bf16.msra.mxu0 0
    %3117 = vmatprep.subr.bf16.mxu0 0
    %3118 = vmatpush1.bf16.msra.mxu0 0
    %3119 = vmatprep.subr.bf16.mxu0 0
    %3120 = vmatpush1.bf16.msra.mxu0 0
    %3121 = vmatprep.subr.bf16.mxu0 0
    %3122 = vmatpush1.bf16.msra.mxu0 0
    %3123 = vmatprep.subr.bf16.mxu0 0
    %3124 = vmatpush1.bf16.msra.mxu0 0
    %3125 = vmatprep.subr.bf16.mxu0 0
    %3126 = vmatpush1.bf16.msra.mxu0 0
    %3127 = vmatprep.subr.bf16.mxu0 0
    %3128 = vmatpush1.bf16.msra.mxu0 0
    %3129 = vmatprep.mubr.bf16.mxu0 0
    %3130 = vmatmul.mubr.bf16.gmra.mrb[0].mxu0 %v2917
    %v3131 = vpop.f32.mrb[0].mxu0
    %v3132 = vadd.f32 %v2957, %v3131
    %v3133 = vpop.f32.mrb[0].mxu0
    %v3134 = vadd.f32 %v2961, %v3133
    %v3135 = vpop.f32.mrb[0].mxu0
    %v3136 = vadd.f32 %v2957, %v3135
    %v3137 = vpop.f32.mrb[0].mxu0
    %v3138 = vadd.f32 %v2961, %v3137
    %3139 = vmatprep.mubr.bf16.mxu0 0
    %3140 = vmatmul.mubr.bf16.gmra.mrb[0].mxu0 %v2918
    %v3141 = vpop.f32.mrb[0].mxu0
    %v3142 = vadd.f32 %v2957, %v3141
    %v3143 = vpop.f32.mrb[0].mxu0
    %v3144 = vadd.f32 %v2961, %v3143
    %v3145 = vpop.f32.mrb[0].mxu0
    %v3146 = vadd.f32 %v2957, %v3145
    %v3147 = vpop.f32.mrb[0].mxu0
    %v3148 = vadd.f32 %v2961, %v3147
    %3149 = vdwg.mxu0
    %3150 = vmatprep.subr.bf16.mxu0 0
    %3151 = vmatpush1.bf16.msra.mxu0 %v3051
    %3152 = vmatprep.subr.bf16.mxu0 0
    %3153 = vmatpush1.bf16.msra.mxu0 %v3054
    %3154 = vmatprep.subr.bf16.mxu0 0
    %3155 = vmatpush1.bf16.msra.mxu0 %v3057
    %3156 = vmatprep.subr.bf16.mxu0 0
    %3157 = vmatpush1.bf16.msra.mxu0 %v3060
    %3158 = vmatprep.subr.bf16.mxu0 0
    %3159 = vmatpush1.bf16.msra.mxu0 %v3063
    %3160 = vmatprep.subr.bf16.mxu0 0
    %3161 = vmatpush1.bf16.msra.mxu0 %v3066
    %3162 = vmatprep.subr.bf16.mxu0 0
    %3163 = vmatpush1.bf16.msra.mxu0 %v3069
    %3164 = vmatprep.subr.bf16.mxu0 0
    %3165 = vmatpush1.bf16.msra.mxu0 %v3072
    %3166 = vmatprep.subr.bf16.mxu0 0
    %3167 = vmatpush1.bf16.msra.mxu0 0
    %3168 = vmatprep.subr.bf16.mxu0 0
    %3169 = vmatpush1.bf16.msra.mxu0 0
    %3170 = vmatprep.subr.bf16.mxu0 0
    %3171 = vmatpush1.bf16.msra.mxu0 0
    %3172 = vmatprep.subr.bf16.mxu0 0
    %3173 = vmatpush1.bf16.msra.mxu0 0
    %3174 = vmatprep.subr.bf16.mxu0 0
    %3175 = vmatpush1.bf16.msra.mxu0 0
    %3176 = vmatprep.subr.bf16.mxu0 0
    %3177 = vmatpush1.bf16.msra.mxu0 0
    %3178 = vmatprep.subr.bf16.mxu0 0
    %3179 = vmatpush1.bf16.msra.mxu0 0
    %3180 = vmatprep.subr.bf16.mxu0 0
    %3181 = vmatpush1.bf16.msra.mxu0 0
    %3182 = vmatprep.mubr.bf16.mxu0 0
    %3183 = vmatmul.mubr.bf16.gmra.mrb[0].mxu0 %v2917
    %v3184 = vpop.f32.mrb[0].mxu0
    %v3185 = vadd.f32 %v2965, %v3184
    %v3186 = vpop.f32.mrb[0].mxu0
    %v3187 = vpop.f32.mrb[0].mxu0
    %v3188 = vadd.f32 %v2965, %v3187
    %v3189 = vpop.f32.mrb[0].mxu0
    %3190 = vmatprep.mubr.bf16.mxu0 0
    %3191 = vmatmul.mubr.bf16.gmra.mrb[0].mxu0 %v2918
    %v3192 = vpop.f32.mrb[0].mxu0
    %v3193 = vadd.f32 %v2965, %v3192
    %v3194 = vpop.f32.mrb[0].mxu0
    %v3195 = vpop.f32.mrb[0].mxu0
    %v3196 = vadd.f32 %v2965, %v3195
    %v3197 = vpop.f32.mrb[0].mxu0
    %3198 = vdwg.mxu0
    %v3199 = vpack.c.bf16 %v3136, %v3132
    %v3200 = vpack.c.bf16 %v3138, %v3134
    %v3201 = vpack.c.bf16 %v3188, %v3185
    %v3202 = vpack.c.bf16 %v3146, %v3142
    %v3203 = vpack.c.bf16 %v3148, %v3144
    %v3204 = vpack.c.bf16 %v3196, %v3193
    %v3206 = vsel %vm445, %v3199, 0
    %v3209 = vsel %vm445, %v3202, 0
    %v3212 = vsel %vm445, %v3200, 0
    %v3215 = vsel %vm445, %v3203, 0
    %3217 = vmatprep.subr.bf16.mxu0 0
    %3218 = vmatpush1.bf16.xpose.msra.mxu0 %v3212
    %3219 = vmatprep.subr.bf16.mxu0 0
    %3220 = vmatpush1.bf16.xpose.msra.mxu0 %v3215
    %3221 = vmatprep.subr.bf16.mxu0 0
    %3222 = vmatpush1.bf16.xpose.msra.mxu0 0
    %3223 = vmatprep.subr.bf16.mxu0 0
    %3224 = vmatpush1.bf16.xpose.msra.mxu0 0
    %3225 = vmatprep.subr.bf16.mxu0 0
    %3226 = vmatpush1.bf16.xpose.msra.mxu0 0
    %3227 = vmatprep.subr.bf16.mxu0 0
    %3228 = vmatpush1.bf16.xpose.msra.mxu0 0
    %3229 = vmatprep.subr.bf16.mxu0 0
    %3230 = vmatpush1.bf16.xpose.msra.mxu0 0
    %3231 = vmatprep.subr.bf16.mxu0 0
    %3232 = vmatpush1.bf16.xpose.msra.mxu0 0
    %3233 = vmatprep.subr.bf16.mxu0 0
    %3234 = vmatpush1.bf16.xpose.msra.mxu0 0
    %3235 = vmatprep.subr.bf16.mxu0 0
    %3236 = vmatpush1.bf16.xpose.msra.mxu0 0
    %3237 = vmatprep.subr.bf16.mxu0 0
    %3238 = vmatpush1.bf16.xpose.msra.mxu0 0
    %3239 = vmatprep.subr.bf16.mxu0 0
    %3240 = vmatpush1.bf16.xpose.msra.mxu0 0
    %3241 = vmatprep.subr.bf16.mxu0 0
    %3242 = vmatpush1.bf16.xpose.msra.mxu0 0
    %3243 = vmatprep.subr.bf16.mxu0 0
    %3244 = vmatpush1.bf16.xpose.msra.mxu0 0
    %3245 = vmatprep.subr.bf16.mxu0 0
    %3246 = vmatpush1.bf16.xpose.msra.mxu0 0
    %3247 = vmatprep.subr.bf16.mxu0 0
    %3248 = vmatpush1.bf16.xpose.msra.mxu0 0
    %3249 = vmatprep.mubr.bf16.mxu0 0
    %3250 = vmatmul.mubr.bf16.gmra.mrb[0].mxu0 %v3206
    %v3251 = vpop.f32.mrb[0].mxu0
    %v3252 = vadd.f32 %v109, %v3251
    %v3253 = vpop.f32.mrb[0].mxu0
    %v3254 = vpop.f32.mrb[0].mxu0
    %v3255 = vadd.f32 %v110, %v3254
    %v3256 = vpop.f32.mrb[0].mxu0
    %3257 = vmatprep.mubr.bf16.mxu0 0
    %3258 = vmatmul.mubr.bf16.gmra.mrb[0].mxu0 %v3209
    %v3259 = vpop.f32.mrb[0].mxu0
    %v3260 = vadd.f32 %v111, %v3259
    %v3261 = vpop.f32.mrb[0].mxu0
    %v3262 = vpop.f32.mrb[0].mxu0
    %v3263 = vadd.f32 %v112, %v3262
    %v3264 = vpop.f32.mrb[0].mxu0
    %3265 = vdwg.mxu0
    %v3266 = vsel %vm507, %v3252, -inf
    %3267 = vmax.xlane.f32.xlu0 %v3266
    %v3268 = vpop.xlane.xlu0 %3267
    %v3269 = vsel %vm507, %v3255, -inf
    %3270 = vmax.xlane.f32.xlu0 %v3269
    %v3271 = vpop.xlane.xlu0 %3270
    %v3272 = vsel %vm507, %v3260, -inf
    %3273 = vmax.xlane.f32.xlu0 %v3272
    %v3274 = vpop.xlane.xlu0 %3273
    %v3275 = vsel %vm507, %v3263, -inf
    %3276 = vmax.xlane.f32.xlu0 %v3275
    %v3277 = vpop.xlane.xlu0 %3276
    %v3278 = vsub.f32 %v3252, %v3268
    %v3279 = vsub.f32 %v3255, %v3271
    %v3280 = vsub.f32 %v3260, %v3274
    %v3281 = vsub.f32 %v3263, %v3277
    %v3282 = vmul.f32 %v3278, 1.442695
    %v3283 = vpow.pop %v3282
    %v3284 = vmul.f32 %v3279, 1.442695
    %v3285 = vpow.pop %v3284
    %v3286 = vmul.f32 %v3280, 1.442695
    %v3287 = vpow.pop %v3286
    %v3288 = vmul.f32 %v3281, 1.442695
    %v3289 = vpow.pop %v3288
    %v3290 = vsel %vm507, %v3283, 0.0
    %3291 = vadd.xlane.f32.xlu0 %v3290
    %v3292 = vpop.xlane.xlu0 %3291
    %v3293 = vsel %vm507, %v3285, 0.0
    %3294 = vadd.xlane.f32.xlu0 %v3293
    %v3295 = vpop.xlane.xlu0 %3294
    %v3296 = vsel %vm507, %v3287, 0.0
    %3297 = vadd.xlane.f32.xlu0 %v3296
    %v3298 = vpop.xlane.xlu0 %3297
    %v3299 = vsel %vm507, %v3289, 0.0
    %3300 = vadd.xlane.f32.xlu0 %v3299
    %v3301 = vpop.xlane.xlu0 %3300
    %v3302 = vrcp.pop %v3292
    %v3303 = vrcp.pop %v3295
    %v3304 = vrcp.pop %v3298
    %v3305 = vrcp.pop %v3301
    %v3306 = vmul.f32 %v3283, %v3302
    %v3307 = vmul.f32 %v3285, %v3303
    %v3308 = vmul.f32 %v3287, %v3304
    %v3309 = vmul.f32 %v3289, %v3305
    %v3310 = vpack.c.bf16 %v3307, %v3306
    %v3311 = vpack.c.bf16 %v3309, %v3308
    %v3313 = vsel %vm507, %v3310, 0
    %v3316 = vsel %vm507, %v3311, 0
    %3318 = vmatprep.subr.bf16.mxu0 0
    %3319 = vmatpush1.bf16.msra.mxu0 %v3201
    %3320 = vmatprep.subr.bf16.mxu0 0
    %3321 = vmatpush1.bf16.msra.mxu0 %v3204
    %3322 = vmatprep.subr.bf16.mxu0 0
    %3323 = vmatpush1.bf16.msra.mxu0 0
    %3324 = vmatprep.subr.bf16.mxu0 0
    %3325 = vmatpush1.bf16.msra.mxu0 0
    %3326 = vmatprep.subr.bf16.mxu0 0
    %3327 = vmatpush1.bf16.msra.mxu0 0
    %3328 = vmatprep.subr.bf16.mxu0 0
    %3329 = vmatpush1.bf16.msra.mxu0 0
    %3330 = vmatprep.subr.bf16.mxu0 0
    %3331 = vmatpush1.bf16.msra.mxu0 0
    %3332 = vmatprep.subr.bf16.mxu0 0
    %3333 = vmatpush1.bf16.msra.mxu0 0
    %3334 = vmatprep.subr.bf16.mxu0 0
    %3335 = vmatpush1.bf16.msra.mxu0 0
    %3336 = vmatprep.subr.bf16.mxu0 0
    %3337 = vmatpush1.bf16.msra.mxu0 0
    %3338 = vmatprep.subr.bf16.mxu0 0
    %3339 = vmatpush1.bf16.msra.mxu0 0
    %3340 = vmatprep.subr.bf16.mxu0 0
    %3341 = vmatpush1.bf16.msra.mxu0 0
    %3342 = vmatprep.subr.bf16.mxu0 0
    %3343 = vmatpush1.bf16.msra.mxu0 0
    %3344 = vmatprep.subr.bf16.mxu0 0
    %3345 = vmatpush1.bf16.msra.mxu0 0
    %3346 = vmatprep.subr.bf16.mxu0 0
    %3347 = vmatpush1.bf16.msra.mxu0 0
    %3348 = vmatprep.subr.bf16.mxu0 0
    %3349 = vmatpush1.bf16.msra.mxu0 0
    %3350 = vmatprep.mubr.bf16.mxu0 0
    %3351 = vmatmul.mubr.bf16.gmra.mrb[0].mxu0 %v3313
    %v3352 = vpop.f32.mrb[0].mxu0
    %v3353 = vadd.f32 0.0, %v3352
    %v3354 = vpop.f32.mrb[0].mxu0
    %v3355 = vpop.f32.mrb[0].mxu0
    %v3356 = vadd.f32 0.0, %v3355
    %v3357 = vpop.f32.mrb[0].mxu0
    %3358 = vmatprep.mubr.bf16.mxu0 0
    %3359 = vmatmul.mubr.bf16.gmra.mrb[0].mxu0 %v3316
    %v3360 = vpop.f32.mrb[0].mxu0
    %v3361 = vadd.f32 0.0, %v3360
    %v3362 = vpop.f32.mrb[0].mxu0
    %v3363 = vpop.f32.mrb[0].mxu0
    %v3364 = vadd.f32 0.0, %v3363
    %v3365 = vpop.f32.mrb[0].mxu0
    %3366 = vdwg.mxu0
    %3369 = vrot.lane.b32.xlu0 %v3199, 112
    %v3370 = vpop.permute.xlu0 %3369
    %3371 = vrot.lane.b32.xlu0 %v3202, 112
    %v3372 = vpop.permute.xlu0 %3371
    %3375 = vrot.lane.b32.xlu0 %v3200, 112
    %v3376 = vpop.permute.xlu0 %3375
    %3377 = vrot.lane.b32.xlu0 %v3203, 112
    %v3378 = vpop.permute.xlu0 %3377
    %v3380 = vsel %vm445, %v3370, 0
    %v3383 = vsel %vm445, %v3372, 0
    %v3386 = vsel %vm445, %v3376, 0
    %v3389 = vsel %vm445, %v3378, 0
    %3391 = vmatprep.subr.bf16.mxu0 0
    %3392 = vmatpush1.bf16.xpose.msra.mxu0 %v3386
    %3393 = vmatprep.subr.bf16.mxu0 0
    %3394 = vmatpush1.bf16.xpose.msra.mxu0 %v3389
    %3395 = vmatprep.subr.bf16.mxu0 0
    %3396 = vmatpush1.bf16.xpose.msra.mxu0 0
    %3397 = vmatprep.subr.bf16.mxu0 0
    %3398 = vmatpush1.bf16.xpose.msra.mxu0 0
    %3399 = vmatprep.subr.bf16.mxu0 0
    %3400 = vmatpush1.bf16.xpose.msra.mxu0 0
    %3401 = vmatprep.subr.bf16.mxu0 0
    %3402 = vmatpush1.bf16.xpose.msra.mxu0 0
    %3403 = vmatprep.subr.bf16.mxu0 0
    %3404 = vmatpush1.bf16.xpose.msra.mxu0 0
    %3405 = vmatprep.subr.bf16.mxu0 0
    %3406 = vmatpush1.bf16.xpose.msra.mxu0 0
    %3407 = vmatprep.subr.bf16.mxu0 0
    %3408 = vmatpush1.bf16.xpose.msra.mxu0 0
    %3409 = vmatprep.subr.bf16.mxu0 0
    %3410 = vmatpush1.bf16.xpose.msra.mxu0 0
    %3411 = vmatprep.subr.bf16.mxu0 0
    %3412 = vmatpush1.bf16.xpose.msra.mxu0 0
    %3413 = vmatprep.subr.bf16.mxu0 0
    %3414 = vmatpush1.bf16.xpose.msra.mxu0 0
    %3415 = vmatprep.subr.bf16.mxu0 0
    %3416 = vmatpush1.bf16.xpose.msra.mxu0 0
    %3417 = vmatprep.subr.bf16.mxu0 0
    %3418 = vmatpush1.bf16.xpose.msra.mxu0 0
    %3419 = vmatprep.subr.bf16.mxu0 0
    %3420 = vmatpush1.bf16.xpose.msra.mxu0 0
    %3421 = vmatprep.subr.bf16.mxu0 0
    %3422 = vmatpush1.bf16.xpose.msra.mxu0 0
    %3423 = vmatprep.mubr.bf16.mxu0 0
    %3424 = vmatmul.mubr.bf16.gmra.mrb[0].mxu0 %v3380
    %v3425 = vpop.f32.mrb[0].mxu0
    %v3426 = vadd.f32 %v109, %v3425
    %v3427 = vpop.f32.mrb[0].mxu0
    %v3428 = vpop.f32.mrb[0].mxu0
    %v3429 = vadd.f32 %v110, %v3428
    %v3430 = vpop.f32.mrb[0].mxu0
    %3431 = vmatprep.mubr.bf16.mxu0 0
    %3432 = vmatmul.mubr.bf16.gmra.mrb[0].mxu0 %v3383
    %v3433 = vpop.f32.mrb[0].mxu0
    %v3434 = vadd.f32 %v111, %v3433
    %v3435 = vpop.f32.mrb[0].mxu0
    %v3436 = vpop.f32.mrb[0].mxu0
    %v3437 = vadd.f32 %v112, %v3436
    %v3438 = vpop.f32.mrb[0].mxu0
    %3439 = vdwg.mxu0
    %v3440 = vsel %vm507, %v3426, -inf
    %3441 = vmax.xlane.f32.xlu0 %v3440
    %v3442 = vpop.xlane.xlu0 %3441
    %v3443 = vsel %vm507, %v3429, -inf
    %3444 = vmax.xlane.f32.xlu0 %v3443
    %v3445 = vpop.xlane.xlu0 %3444
    %v3446 = vsel %vm507, %v3434, -inf
    %3447 = vmax.xlane.f32.xlu0 %v3446
    %v3448 = vpop.xlane.xlu0 %3447
    %v3449 = vsel %vm507, %v3437, -inf
    %3450 = vmax.xlane.f32.xlu0 %v3449
    %v3451 = vpop.xlane.xlu0 %3450
    %v3452 = vsub.f32 %v3426, %v3442
    %v3453 = vsub.f32 %v3429, %v3445
    %v3454 = vsub.f32 %v3434, %v3448
    %v3455 = vsub.f32 %v3437, %v3451
    %v3456 = vmul.f32 %v3452, 1.442695
    %v3457 = vpow.pop %v3456
    %v3458 = vmul.f32 %v3453, 1.442695
    %v3459 = vpow.pop %v3458
    %v3460 = vmul.f32 %v3454, 1.442695
    %v3461 = vpow.pop %v3460
    %v3462 = vmul.f32 %v3455, 1.442695
    %v3463 = vpow.pop %v3462
    %v3464 = vsel %vm507, %v3457, 0.0
    %3465 = vadd.xlane.f32.xlu0 %v3464
    %v3466 = vpop.xlane.xlu0 %3465
    %v3467 = vsel %vm507, %v3459, 0.0
    %3468 = vadd.xlane.f32.xlu0 %v3467
    %v3469 = vpop.xlane.xlu0 %3468
    %v3470 = vsel %vm507, %v3461, 0.0
    %3471 = vadd.xlane.f32.xlu0 %v3470
    %v3472 = vpop.xlane.xlu0 %3471
    %v3473 = vsel %vm507, %v3463, 0.0
    %3474 = vadd.xlane.f32.xlu0 %v3473
    %v3475 = vpop.xlane.xlu0 %3474
    %v3476 = vrcp.pop %v3466
    %v3477 = vrcp.pop %v3469
    %v3478 = vrcp.pop %v3472
    %v3479 = vrcp.pop %v3475
    %v3480 = vmul.f32 %v3457, %v3476
    %v3481 = vmul.f32 %v3459, %v3477
    %v3482 = vmul.f32 %v3461, %v3478
    %v3483 = vmul.f32 %v3463, %v3479
    %v3484 = vpack.c.bf16 %v3481, %v3480
    %v3485 = vpack.c.bf16 %v3483, %v3482
    %3488 = vrot.lane.b32.xlu0 %v3201, 112
    %v3489 = vpop.permute.xlu0 %3488
    %3490 = vrot.lane.b32.xlu0 %v3204, 112
    %v3491 = vpop.permute.xlu0 %3490
    %v3495 = vsel %vm507, %v3484, 0
    %v3498 = vsel %vm507, %v3485, 0
    %3500 = vmatprep.subr.bf16.mxu0 0
    %3501 = vmatpush1.bf16.msra.mxu0 %v3489
    %3502 = vmatprep.subr.bf16.mxu0 0
    %3503 = vmatpush1.bf16.msra.mxu0 %v3491
    %3504 = vmatprep.subr.bf16.mxu0 0
    %3505 = vmatpush1.bf16.msra.mxu0 0
    %3506 = vmatprep.subr.bf16.mxu0 0
    %3507 = vmatpush1.bf16.msra.mxu0 0
    %3508 = vmatprep.subr.bf16.mxu0 0
    %3509 = vmatpush1.bf16.msra.mxu0 0
    %3510 = vmatprep.subr.bf16.mxu0 0
    %3511 = vmatpush1.bf16.msra.mxu0 0
    %3512 = vmatprep.subr.bf16.mxu0 0
    %3513 = vmatpush1.bf16.msra.mxu0 0
    %3514 = vmatprep.subr.bf16.mxu0 0
    %3515 = vmatpush1.bf16.msra.mxu0 0
    %3516 = vmatprep.subr.bf16.mxu0 0
    %3517 = vmatpush1.bf16.msra.mxu0 0
    %3518 = vmatprep.subr.bf16.mxu0 0
    %3519 = vmatpush1.bf16.msra.mxu0 0
    %3520 = vmatprep.subr.bf16.mxu0 0
    %3521 = vmatpush1.bf16.msra.mxu0 0
    %3522 = vmatprep.subr.bf16.mxu0 0
    %3523 = vmatpush1.bf16.msra.mxu0 0
    %3524 = vmatprep.subr.bf16.mxu0 0
    %3525 = vmatpush1.bf16.msra.mxu0 0
    %3526 = vmatprep.subr.bf16.mxu0 0
    %3527 = vmatpush1.bf16.msra.mxu0 0
    %3528 = vmatprep.subr.bf16.mxu0 0
    %3529 = vmatpush1.bf16.msra.mxu0 0
    %3530 = vmatprep.subr.bf16.mxu0 0
    %3531 = vmatpush1.bf16.msra.mxu0 0
    %3532 = vmatprep.mubr.bf16.mxu0 0
    %3533 = vmatmul.mubr.bf16.gmra.mrb[0].mxu0 %v3495
    %v3534 = vpop.f32.mrb[0].mxu0
    %v3535 = vadd.f32 0.0, %v3534
    %v3536 = vpop.f32.mrb[0].mxu0
    %v3537 = vpop.f32.mrb[0].mxu0
    %v3538 = vadd.f32 0.0, %v3537
    %v3539 = vpop.f32.mrb[0].mxu0
    %3540 = vmatprep.mubr.bf16.mxu0 0
    %3541 = vmatmul.mubr.bf16.gmra.mrb[0].mxu0 %v3498
    %v3542 = vpop.f32.mrb[0].mxu0
    %v3543 = vadd.f32 0.0, %v3542
    %v3544 = vpop.f32.mrb[0].mxu0
    %v3545 = vpop.f32.mrb[0].mxu0
    %v3546 = vadd.f32 0.0, %v3545
    %v3547 = vpop.f32.mrb[0].mxu0
    %3548 = vdwg.mxu0
    %3549 = vrot.lane.b32.xlu0 %v3199, 96
    %v3550 = vpop.permute.xlu0 %3549
    %3551 = vrot.lane.b32.xlu0 %v3202, 96
    %v3552 = vpop.permute.xlu0 %3551
    %3553 = vrot.lane.b32.xlu0 %v3200, 96
    %v3554 = vpop.permute.xlu0 %3553
    %3555 = vrot.lane.b32.xlu0 %v3203, 96
    %v3556 = vpop.permute.xlu0 %3555
    %v3558 = vsel %vm445, %v3550, 0
    %v3561 = vsel %vm445, %v3552, 0
    %v3564 = vsel %vm445, %v3554, 0
    %v3567 = vsel %vm445, %v3556, 0
    %3569 = vmatprep.subr.bf16.mxu0 0
    %3570 = vmatpush1.bf16.xpose.msra.mxu0 %v3564
    %3571 = vmatprep.subr.bf16.mxu0 0
    %3572 = vmatpush1.bf16.xpose.msra.mxu0 %v3567
    %3573 = vmatprep.subr.bf16.mxu0 0
    %3574 = vmatpush1.bf16.xpose.msra.mxu0 0
    %3575 = vmatprep.subr.bf16.mxu0 0
    %3576 = vmatpush1.bf16.xpose.msra.mxu0 0
    %3577 = vmatprep.subr.bf16.mxu0 0
    %3578 = vmatpush1.bf16.xpose.msra.mxu0 0
    %3579 = vmatprep.subr.bf16.mxu0 0
    %3580 = vmatpush1.bf16.xpose.msra.mxu0 0
    %3581 = vmatprep.subr.bf16.mxu0 0
    %3582 = vmatpush1.bf16.xpose.msra.mxu0 0
    %3583 = vmatprep.subr.bf16.mxu0 0
    %3584 = vmatpush1.bf16.xpose.msra.mxu0 0
    %3585 = vmatprep.subr.bf16.mxu0 0
    %3586 = vmatpush1.bf16.xpose.msra.mxu0 0
    %3587 = vmatprep.subr.bf16.mxu0 0
    %3588 = vmatpush1.bf16.xpose.msra.mxu0 0
    %3589 = vmatprep.subr.bf16.mxu0 0
    %3590 = vmatpush1.bf16.xpose.msra.mxu0 0
    %3591 = vmatprep.subr.bf16.mxu0 0
    %3592 = vmatpush1.bf16.xpose.msra.mxu0 0
    %3593 = vmatprep.subr.bf16.mxu0 0
    %3594 = vmatpush1.bf16.xpose.msra.mxu0 0
    %3595 = vmatprep.subr.bf16.mxu0 0
    %3596 = vmatpush1.bf16.xpose.msra.mxu0 0
    %3597 = vmatprep.subr.bf16.mxu0 0
    %3598 = vmatpush1.bf16.xpose.msra.mxu0 0
    %3599 = vmatprep.subr.bf16.mxu0 0
    %3600 = vmatpush1.bf16.xpose.msra.mxu0 0
    %3601 = vmatprep.mubr.bf16.mxu0 0
    %3602 = vmatmul.mubr.bf16.gmra.mrb[0].mxu0 %v3558
    %v3603 = vpop.f32.mrb[0].mxu0
    %v3604 = vadd.f32 %v109, %v3603
    %v3605 = vpop.f32.mrb[0].mxu0
    %v3606 = vpop.f32.mrb[0].mxu0
    %v3607 = vadd.f32 %v110, %v3606
    %v3608 = vpop.f32.mrb[0].mxu0
    %3609 = vmatprep.mubr.bf16.mxu0 0
    %3610 = vmatmul.mubr.bf16.gmra.mrb[0].mxu0 %v3561
    %v3611 = vpop.f32.mrb[0].mxu0
    %v3612 = vadd.f32 %v111, %v3611
    %v3613 = vpop.f32.mrb[0].mxu0
    %v3614 = vpop.f32.mrb[0].mxu0
    %v3615 = vadd.f32 %v112, %v3614
    %v3616 = vpop.f32.mrb[0].mxu0
    %3617 = vdwg.mxu0
    %v3618 = vsel %vm507, %v3604, -inf
    %3619 = vmax.xlane.f32.xlu0 %v3618
    %v3620 = vpop.xlane.xlu0 %3619
    %v3621 = vsel %vm507, %v3607, -inf
    %3622 = vmax.xlane.f32.xlu0 %v3621
    %v3623 = vpop.xlane.xlu0 %3622
    %v3624 = vsel %vm507, %v3612, -inf
    %3625 = vmax.xlane.f32.xlu0 %v3624
    %v3626 = vpop.xlane.xlu0 %3625
    %v3627 = vsel %vm507, %v3615, -inf
    %3628 = vmax.xlane.f32.xlu0 %v3627
    %v3629 = vpop.xlane.xlu0 %3628
    %v3630 = vsub.f32 %v3604, %v3620
    %v3631 = vsub.f32 %v3607, %v3623
    %v3632 = vsub.f32 %v3612, %v3626
    %v3633 = vsub.f32 %v3615, %v3629
    %v3634 = vmul.f32 %v3630, 1.442695
    %v3635 = vpow.pop %v3634
    %v3636 = vmul.f32 %v3631, 1.442695
    %v3637 = vpow.pop %v3636
    %v3638 = vmul.f32 %v3632, 1.442695
    %v3639 = vpow.pop %v3638
    %v3640 = vmul.f32 %v3633, 1.442695
    %v3641 = vpow.pop %v3640
    %v3642 = vsel %vm507, %v3635, 0.0
    %3643 = vadd.xlane.f32.xlu0 %v3642
    %v3644 = vpop.xlane.xlu0 %3643
    %v3645 = vsel %vm507, %v3637, 0.0
    %3646 = vadd.xlane.f32.xlu0 %v3645
    %v3647 = vpop.xlane.xlu0 %3646
    %v3648 = vsel %vm507, %v3639, 0.0
    %3649 = vadd.xlane.f32.xlu0 %v3648
    %v3650 = vpop.xlane.xlu0 %3649
    %v3651 = vsel %vm507, %v3641, 0.0
    %3652 = vadd.xlane.f32.xlu0 %v3651
    %v3653 = vpop.xlane.xlu0 %3652
    %v3654 = vrcp.pop %v3644
    %v3655 = vrcp.pop %v3647
    %v3656 = vrcp.pop %v3650
    %v3657 = vrcp.pop %v3653
    %v3658 = vmul.f32 %v3635, %v3654
    %v3659 = vmul.f32 %v3637, %v3655
    %v3660 = vmul.f32 %v3639, %v3656
    %v3661 = vmul.f32 %v3641, %v3657
    %v3662 = vpack.c.bf16 %v3659, %v3658
    %v3663 = vpack.c.bf16 %v3661, %v3660
    %3664 = vrot.lane.b32.xlu0 %v3201, 96
    %v3665 = vpop.permute.xlu0 %3664
    %3666 = vrot.lane.b32.xlu0 %v3204, 96
    %v3667 = vpop.permute.xlu0 %3666
    %v3671 = vsel %vm507, %v3662, 0
    %v3674 = vsel %vm507, %v3663, 0
    %3676 = vmatprep.subr.bf16.mxu0 0
    %3677 = vmatpush1.bf16.msra.mxu0 %v3665
    %3678 = vmatprep.subr.bf16.mxu0 0
    %3679 = vmatpush1.bf16.msra.mxu0 %v3667
    %3680 = vmatprep.subr.bf16.mxu0 0
    %3681 = vmatpush1.bf16.msra.mxu0 0
    %3682 = vmatprep.subr.bf16.mxu0 0
    %3683 = vmatpush1.bf16.msra.mxu0 0
    %3684 = vmatprep.subr.bf16.mxu0 0
    %3685 = vmatpush1.bf16.msra.mxu0 0
    %3686 = vmatprep.subr.bf16.mxu0 0
    %3687 = vmatpush1.bf16.msra.mxu0 0
    %3688 = vmatprep.subr.bf16.mxu0 0
    %3689 = vmatpush1.bf16.msra.mxu0 0
    %3690 = vmatprep.subr.bf16.mxu0 0
    %3691 = vmatpush1.bf16.msra.mxu0 0
    %3692 = vmatprep.subr.bf16.mxu0 0
    %3693 = vmatpush1.bf16.msra.mxu0 0
    %3694 = vmatprep.subr.bf16.mxu0 0
    %3695 = vmatpush1.bf16.msra.mxu0 0
    %3696 = vmatprep.subr.bf16.mxu0 0
    %3697 = vmatpush1.bf16.msra.mxu0 0
    %3698 = vmatprep.subr.bf16.mxu0 0
    %3699 = vmatpush1.bf16.msra.mxu0 0
    %3700 = vmatprep.subr.bf16.mxu0 0
    %3701 = vmatpush1.bf16.msra.mxu0 0
    %3702 = vmatprep.subr.bf16.mxu0 0
    %3703 = vmatpush1.bf16.msra.mxu0 0
    %3704 = vmatprep.subr.bf16.mxu0 0
    %3705 = vmatpush1.bf16.msra.mxu0 0
    %3706 = vmatprep.subr.bf16.mxu0 0
    %3707 = vmatpush1.bf16.msra.mxu0 0
    %3708 = vmatprep.mubr.bf16.mxu0 0
    %3709 = vmatmul.mubr.bf16.gmra.mrb[0].mxu0 %v3671
    %v3710 = vpop.f32.mrb[0].mxu0
    %v3711 = vadd.f32 0.0, %v3710
    %v3712 = vpop.f32.mrb[0].mxu0
    %v3713 = vpop.f32.mrb[0].mxu0
    %v3714 = vadd.f32 0.0, %v3713
    %v3715 = vpop.f32.mrb[0].mxu0
    %3716 = vmatprep.mubr.bf16.mxu0 0
    %3717 = vmatmul.mubr.bf16.gmra.mrb[0].mxu0 %v3674
    %v3718 = vpop.f32.mrb[0].mxu0
    %v3719 = vadd.f32 0.0, %v3718
    %v3720 = vpop.f32.mrb[0].mxu0
    %v3721 = vpop.f32.mrb[0].mxu0
    %v3722 = vadd.f32 0.0, %v3721
    %v3723 = vpop.f32.mrb[0].mxu0
    %3724 = vdwg.mxu0
    %3725 = vrot.lane.b32.xlu0 %v3199, 80
    %v3726 = vpop.permute.xlu0 %3725
    %3727 = vrot.lane.b32.xlu0 %v3202, 80
    %v3728 = vpop.permute.xlu0 %3727
    %3729 = vrot.lane.b32.xlu0 %v3200, 80
    %v3730 = vpop.permute.xlu0 %3729
    %3731 = vrot.lane.b32.xlu0 %v3203, 80
    %v3732 = vpop.permute.xlu0 %3731
    %v3734 = vsel %vm445, %v3726, 0
    %v3737 = vsel %vm445, %v3728, 0
    %v3740 = vsel %vm445, %v3730, 0
    %v3743 = vsel %vm445, %v3732, 0
    %3745 = vmatprep.subr.bf16.mxu0 0
    %3746 = vmatpush1.bf16.xpose.msra.mxu0 %v3740
    %3747 = vmatprep.subr.bf16.mxu0 0
    %3748 = vmatpush1.bf16.xpose.msra.mxu0 %v3743
    %3749 = vmatprep.subr.bf16.mxu0 0
    %3750 = vmatpush1.bf16.xpose.msra.mxu0 0
    %3751 = vmatprep.subr.bf16.mxu0 0
    %3752 = vmatpush1.bf16.xpose.msra.mxu0 0
    %3753 = vmatprep.subr.bf16.mxu0 0
    %3754 = vmatpush1.bf16.xpose.msra.mxu0 0
    %3755 = vmatprep.subr.bf16.mxu0 0
    %3756 = vmatpush1.bf16.xpose.msra.mxu0 0
    %3757 = vmatprep.subr.bf16.mxu0 0
    %3758 = vmatpush1.bf16.xpose.msra.mxu0 0
    %3759 = vmatprep.subr.bf16.mxu0 0
    %3760 = vmatpush1.bf16.xpose.msra.mxu0 0
    %3761 = vmatprep.subr.bf16.mxu0 0
    %3762 = vmatpush1.bf16.xpose.msra.mxu0 0
    %3763 = vmatprep.subr.bf16.mxu0 0
    %3764 = vmatpush1.bf16.xpose.msra.mxu0 0
    %3765 = vmatprep.subr.bf16.mxu0 0
    %3766 = vmatpush1.bf16.xpose.msra.mxu0 0
    %3767 = vmatprep.subr.bf16.mxu0 0
    %3768 = vmatpush1.bf16.xpose.msra.mxu0 0
    %3769 = vmatprep.subr.bf16.mxu0 0
    %3770 = vmatpush1.bf16.xpose.msra.mxu0 0
    %3771 = vmatprep.subr.bf16.mxu0 0
    %3772 = vmatpush1.bf16.xpose.msra.mxu0 0
    %3773 = vmatprep.subr.bf16.mxu0 0
    %3774 = vmatpush1.bf16.xpose.msra.mxu0 0
    %3775 = vmatprep.subr.bf16.mxu0 0
    %3776 = vmatpush1.bf16.xpose.msra.mxu0 0
    %3777 = vmatprep.mubr.bf16.mxu0 0
    %3778 = vmatmul.mubr.bf16.gmra.mrb[0].mxu0 %v3734
    %v3779 = vpop.f32.mrb[0].mxu0
    %v3780 = vadd.f32 %v109, %v3779
    %v3781 = vpop.f32.mrb[0].mxu0
    %v3782 = vpop.f32.mrb[0].mxu0
    %v3783 = vadd.f32 %v110, %v3782
    %v3784 = vpop.f32.mrb[0].mxu0
    %3785 = vmatprep.mubr.bf16.mxu0 0
    %3786 = vmatmul.mubr.bf16.gmra.mrb[0].mxu0 %v3737
    %v3787 = vpop.f32.mrb[0].mxu0
    %v3788 = vadd.f32 %v111, %v3787
    %v3789 = vpop.f32.mrb[0].mxu0
    %v3790 = vpop.f32.mrb[0].mxu0
    %v3791 = vadd.f32 %v112, %v3790
    %v3792 = vpop.f32.mrb[0].mxu0
    %3793 = vdwg.mxu0
    %v3794 = vsel %vm507, %v3780, -inf
    %3795 = vmax.xlane.f32.xlu0 %v3794
    %v3796 = vpop.xlane.xlu0 %3795
    %v3797 = vsel %vm507, %v3783, -inf
    %3798 = vmax.xlane.f32.xlu0 %v3797
    %v3799 = vpop.xlane.xlu0 %3798
    %v3800 = vsel %vm507, %v3788, -inf
    %3801 = vmax.xlane.f32.xlu0 %v3800
    %v3802 = vpop.xlane.xlu0 %3801
    %v3803 = vsel %vm507, %v3791, -inf
    %3804 = vmax.xlane.f32.xlu0 %v3803
    %v3805 = vpop.xlane.xlu0 %3804
    %v3806 = vsub.f32 %v3780, %v3796
    %v3807 = vsub.f32 %v3783, %v3799
    %v3808 = vsub.f32 %v3788, %v3802
    %v3809 = vsub.f32 %v3791, %v3805
    %v3810 = vmul.f32 %v3806, 1.442695
    %v3811 = vpow.pop %v3810
    %v3812 = vmul.f32 %v3807, 1.442695
    %v3813 = vpow.pop %v3812
    %v3814 = vmul.f32 %v3808, 1.442695
    %v3815 = vpow.pop %v3814
    %v3816 = vmul.f32 %v3809, 1.442695
    %v3817 = vpow.pop %v3816
    %v3818 = vsel %vm507, %v3811, 0.0
    %3819 = vadd.xlane.f32.xlu0 %v3818
    %v3820 = vpop.xlane.xlu0 %3819
    %v3821 = vsel %vm507, %v3813, 0.0
    %3822 = vadd.xlane.f32.xlu0 %v3821
    %v3823 = vpop.xlane.xlu0 %3822
    %v3824 = vsel %vm507, %v3815, 0.0
    %3825 = vadd.xlane.f32.xlu0 %v3824
    %v3826 = vpop.xlane.xlu0 %3825
    %v3827 = vsel %vm507, %v3817, 0.0
    %3828 = vadd.xlane.f32.xlu0 %v3827
    %v3829 = vpop.xlane.xlu0 %3828
    %v3830 = vrcp.pop %v3820
    %v3831 = vrcp.pop %v3823
    %v3832 = vrcp.pop %v3826
    %v3833 = vrcp.pop %v3829
    %v3834 = vmul.f32 %v3811, %v3830
    %v3835 = vmul.f32 %v3813, %v3831
    %v3836 = vmul.f32 %v3815, %v3832
    %v3837 = vmul.f32 %v3817, %v3833
    %v3838 = vpack.c.bf16 %v3835, %v3834
    %v3839 = vpack.c.bf16 %v3837, %v3836
    %3840 = vrot.lane.b32.xlu0 %v3201, 80
    %v3841 = vpop.permute.xlu0 %3840
    %3842 = vrot.lane.b32.xlu0 %v3204, 80
    %v3843 = vpop.permute.xlu0 %3842
    %v3847 = vsel %vm507, %v3838, 0
    %v3850 = vsel %vm507, %v3839, 0
    %3852 = vmatprep.subr.bf16.mxu0 0
    %3853 = vmatpush1.bf16.msra.mxu0 %v3841
    %3854 = vmatprep.subr.bf16.mxu0 0
    %3855 = vmatpush1.bf16.msra.mxu0 %v3843
    %3856 = vmatprep.subr.bf16.mxu0 0
    %3857 = vmatpush1.bf16.msra.mxu0 0
    %3858 = vmatprep.subr.bf16.mxu0 0
    %3859 = vmatpush1.bf16.msra.mxu0 0
    %3860 = vmatprep.subr.bf16.mxu0 0
    %3861 = vmatpush1.bf16.msra.mxu0 0
    %3862 = vmatprep.subr.bf16.mxu0 0
    %3863 = vmatpush1.bf16.msra.mxu0 0
    %3864 = vmatprep.subr.bf16.mxu0 0
    %3865 = vmatpush1.bf16.msra.mxu0 0
    %3866 = vmatprep.subr.bf16.mxu0 0
    %3867 = vmatpush1.bf16.msra.mxu0 0
    %3868 = vmatprep.subr.bf16.mxu0 0
    %3869 = vmatpush1.bf16.msra.mxu0 0
    %3870 = vmatprep.subr.bf16.mxu0 0
    %3871 = vmatpush1.bf16.msra.mxu0 0
    %3872 = vmatprep.subr.bf16.mxu0 0
    %3873 = vmatpush1.bf16.msra.mxu0 0
    %3874 = vmatprep.subr.bf16.mxu0 0
    %3875 = vmatpush1.bf16.msra.mxu0 0
    %3876 = vmatprep.subr.bf16.mxu0 0
    %3877 = vmatpush1.bf16.msra.mxu0 0
    %3878 = vmatprep.subr.bf16.mxu0 0
    %3879 = vmatpush1.bf16.msra.mxu0 0
    %3880 = vmatprep.subr.bf16.mxu0 0
    %3881 = vmatpush1.bf16.msra.mxu0 0
    %3882 = vmatprep.subr.bf16.mxu0 0
    %3883 = vmatpush1.bf16.msra.mxu0 0
    %3884 = vmatprep.mubr.bf16.mxu0 0
    %3885 = vmatmul.mubr.bf16.gmra.mrb[0].mxu0 %v3847
    %v3886 = vpop.f32.mrb[0].mxu0
    %v3887 = vadd.f32 0.0, %v3886
    %v3888 = vpop.f32.mrb[0].mxu0
    %v3889 = vpop.f32.mrb[0].mxu0
    %v3890 = vadd.f32 0.0, %v3889
    %v3891 = vpop.f32.mrb[0].mxu0
    %3892 = vmatprep.mubr.bf16.mxu0 0
    %3893 = vmatmul.mubr.bf16.gmra.mrb[0].mxu0 %v3850
    %v3894 = vpop.f32.mrb[0].mxu0
    %v3895 = vadd.f32 0.0, %v3894
    %v3896 = vpop.f32.mrb[0].mxu0
    %v3897 = vpop.f32.mrb[0].mxu0
    %v3898 = vadd.f32 0.0, %v3897
    %v3899 = vpop.f32.mrb[0].mxu0
    %3900 = vdwg.mxu0
    %3901 = vrot.lane.b32.xlu0 %v3199, 64
    %v3902 = vpop.permute.xlu0 %3901
    %3903 = vrot.lane.b32.xlu0 %v3202, 64
    %v3904 = vpop.permute.xlu0 %3903
    %3905 = vrot.lane.b32.xlu0 %v3200, 64
    %v3906 = vpop.permute.xlu0 %3905
    %3907 = vrot.lane.b32.xlu0 %v3203, 64
    %v3908 = vpop.permute.xlu0 %3907
    %v3910 = vsel %vm445, %v3902, 0
    %v3913 = vsel %vm445, %v3904, 0
    %v3916 = vsel %vm445, %v3906, 0
    %v3919 = vsel %vm445, %v3908, 0
    %3921 = vmatprep.subr.bf16.mxu0 0
    %3922 = vmatpush1.bf16.xpose.msra.mxu0 %v3916
    %3923 = vmatprep.subr.bf16.mxu0 0
    %3924 = vmatpush1.bf16.xpose.msra.mxu0 %v3919
    %3925 = vmatprep.subr.bf16.mxu0 0
    %3926 = vmatpush1.bf16.xpose.msra.mxu0 0
    %3927 = vmatprep.subr.bf16.mxu0 0
    %3928 = vmatpush1.bf16.xpose.msra.mxu0 0
    %3929 = vmatprep.subr.bf16.mxu0 0
    %3930 = vmatpush1.bf16.xpose.msra.mxu0 0
    %3931 = vmatprep.subr.bf16.mxu0 0
    %3932 = vmatpush1.bf16.xpose.msra.mxu0 0
    %3933 = vmatprep.subr.bf16.mxu0 0
    %3934 = vmatpush1.bf16.xpose.msra.mxu0 0
    %3935 = vmatprep.subr.bf16.mxu0 0
    %3936 = vmatpush1.bf16.xpose.msra.mxu0 0
    %3937 = vmatprep.subr.bf16.mxu0 0
    %3938 = vmatpush1.bf16.xpose.msra.mxu0 0
    %3939 = vmatprep.subr.bf16.mxu0 0
    %3940 = vmatpush1.bf16.xpose.msra.mxu0 0
    %3941 = vmatprep.subr.bf16.mxu0 0
    %3942 = vmatpush1.bf16.xpose.msra.mxu0 0
    %3943 = vmatprep.subr.bf16.mxu0 0
    %3944 = vmatpush1.bf16.xpose.msra.mxu0 0
    %3945 = vmatprep.subr.bf16.mxu0 0
    %3946 = vmatpush1.bf16.xpose.msra.mxu0 0
    %3947 = vmatprep.subr.bf16.mxu0 0
    %3948 = vmatpush1.bf16.xpose.msra.mxu0 0
    %3949 = vmatprep.subr.bf16.mxu0 0
    %3950 = vmatpush1.bf16.xpose.msra.mxu0 0
    %3951 = vmatprep.subr.bf16.mxu0 0
    %3952 = vmatpush1.bf16.xpose.msra.mxu0 0
    %3953 = vmatprep.mubr.bf16.mxu0 0
    %3954 = vmatmul.mubr.bf16.gmra.mrb[0].mxu0 %v3910
    %v3955 = vpop.f32.mrb[0].mxu0
    %v3956 = vadd.f32 %v109, %v3955
    %v3957 = vpop.f32.mrb[0].mxu0
    %v3958 = vpop.f32.mrb[0].mxu0
    %v3959 = vadd.f32 %v110, %v3958
    %v3960 = vpop.f32.mrb[0].mxu0
    %3961 = vmatprep.mubr.bf16.mxu0 0
    %3962 = vmatmul.mubr.bf16.gmra.mrb[0].mxu0 %v3913
    %v3963 = vpop.f32.mrb[0].mxu0
    %v3964 = vadd.f32 %v111, %v3963
    %v3965 = vpop.f32.mrb[0].mxu0
    %v3966 = vpop.f32.mrb[0].mxu0
    %v3967 = vadd.f32 %v112, %v3966
    %v3968 = vpop.f32.mrb[0].mxu0
    %3969 = vdwg.mxu0
    %v3970 = vsel %vm507, %v3956, -inf
    %3971 = vmax.xlane.f32.xlu0 %v3970
    %v3972 = vpop.xlane.xlu0 %3971
    %v3973 = vsel %vm507, %v3959, -inf
    %3974 = vmax.xlane.f32.xlu0 %v3973
    %v3975 = vpop.xlane.xlu0 %3974
    %v3976 = vsel %vm507, %v3964, -inf
    %3977 = vmax.xlane.f32.xlu0 %v3976
    %v3978 = vpop.xlane.xlu0 %3977
    %v3979 = vsel %vm507, %v3967, -inf
    %3980 = vmax.xlane.f32.xlu0 %v3979
    %v3981 = vpop.xlane.xlu0 %3980
    %v3982 = vsub.f32 %v3956, %v3972
    %v3983 = vsub.f32 %v3959, %v3975
    %v3984 = vsub.f32 %v3964, %v3978
    %v3985 = vsub.f32 %v3967, %v3981
    %v3986 = vmul.f32 %v3982, 1.442695
    %v3987 = vpow.pop %v3986
    %v3988 = vmul.f32 %v3983, 1.442695
    %v3989 = vpow.pop %v3988
    %v3990 = vmul.f32 %v3984, 1.442695
    %v3991 = vpow.pop %v3990
    %v3992 = vmul.f32 %v3985, 1.442695
    %v3993 = vpow.pop %v3992
    %v3994 = vsel %vm507, %v3987, 0.0
    %3995 = vadd.xlane.f32.xlu0 %v3994
    %v3996 = vpop.xlane.xlu0 %3995
    %v3997 = vsel %vm507, %v3989, 0.0
    %3998 = vadd.xlane.f32.xlu0 %v3997
    %v3999 = vpop.xlane.xlu0 %3998
    %v4000 = vsel %vm507, %v3991, 0.0
    %4001 = vadd.xlane.f32.xlu0 %v4000
    %v4002 = vpop.xlane.xlu0 %4001
    %v4003 = vsel %vm507, %v3993, 0.0
    %4004 = vadd.xlane.f32.xlu0 %v4003
    %v4005 = vpop.xlane.xlu0 %4004
    %v4006 = vrcp.pop %v3996
    %v4007 = vrcp.pop %v3999
    %v4008 = vrcp.pop %v4002
    %v4009 = vrcp.pop %v4005
    %v4010 = vmul.f32 %v3987, %v4006
    %v4011 = vmul.f32 %v3989, %v4007
    %v4012 = vmul.f32 %v3991, %v4008
    %v4013 = vmul.f32 %v3993, %v4009
    %v4014 = vpack.c.bf16 %v4011, %v4010
    %v4015 = vpack.c.bf16 %v4013, %v4012
    %4016 = vrot.lane.b32.xlu0 %v3201, 64
    %v4017 = vpop.permute.xlu0 %4016
    %4018 = vrot.lane.b32.xlu0 %v3204, 64
    %v4019 = vpop.permute.xlu0 %4018
    %v4023 = vsel %vm507, %v4014, 0
    %v4026 = vsel %vm507, %v4015, 0
    %4028 = vmatprep.subr.bf16.mxu0 0
    %4029 = vmatpush1.bf16.msra.mxu0 %v4017
    %4030 = vmatprep.subr.bf16.mxu0 0
    %4031 = vmatpush1.bf16.msra.mxu0 %v4019
    %4032 = vmatprep.subr.bf16.mxu0 0
    %4033 = vmatpush1.bf16.msra.mxu0 0
    %4034 = vmatprep.subr.bf16.mxu0 0
    %4035 = vmatpush1.bf16.msra.mxu0 0
    %4036 = vmatprep.subr.bf16.mxu0 0
    %4037 = vmatpush1.bf16.msra.mxu0 0
    %4038 = vmatprep.subr.bf16.mxu0 0
    %4039 = vmatpush1.bf16.msra.mxu0 0
    %4040 = vmatprep.subr.bf16.mxu0 0
    %4041 = vmatpush1.bf16.msra.mxu0 0
    %4042 = vmatprep.subr.bf16.mxu0 0
    %4043 = vmatpush1.bf16.msra.mxu0 0
    %4044 = vmatprep.subr.bf16.mxu0 0
    %4045 = vmatpush1.bf16.msra.mxu0 0
    %4046 = vmatprep.subr.bf16.mxu0 0
    %4047 = vmatpush1.bf16.msra.mxu0 0
    %4048 = vmatprep.subr.bf16.mxu0 0
    %4049 = vmatpush1.bf16.msra.mxu0 0
    %4050 = vmatprep.subr.bf16.mxu0 0
    %4051 = vmatpush1.bf16.msra.mxu0 0
    %4052 = vmatprep.subr.bf16.mxu0 0
    %4053 = vmatpush1.bf16.msra.mxu0 0
    %4054 = vmatprep.subr.bf16.mxu0 0
    %4055 = vmatpush1.bf16.msra.mxu0 0
    %4056 = vmatprep.subr.bf16.mxu0 0
    %4057 = vmatpush1.bf16.msra.mxu0 0
    %4058 = vmatprep.subr.bf16.mxu0 0
    %4059 = vmatpush1.bf16.msra.mxu0 0
    %4060 = vmatprep.mubr.bf16.mxu0 0
    %4061 = vmatmul.mubr.bf16.gmra.mrb[0].mxu0 %v4023
    %v4062 = vpop.f32.mrb[0].mxu0
    %v4063 = vadd.f32 0.0, %v4062
    %v4064 = vpop.f32.mrb[0].mxu0
    %v4065 = vpop.f32.mrb[0].mxu0
    %v4066 = vadd.f32 0.0, %v4065
    %v4067 = vpop.f32.mrb[0].mxu0
    %4068 = vmatprep.mubr.bf16.mxu0 0
    %4069 = vmatmul.mubr.bf16.gmra.mrb[0].mxu0 %v4026
    %v4070 = vpop.f32.mrb[0].mxu0
    %v4071 = vadd.f32 0.0, %v4070
    %v4072 = vpop.f32.mrb[0].mxu0
    %v4073 = vpop.f32.mrb[0].mxu0
    %v4074 = vadd.f32 0.0, %v4073
    %v4075 = vpop.f32.mrb[0].mxu0
    %4076 = vdwg.mxu0
    %4077 = vrot.lane.b32.xlu0 %v3199, 48
    %v4078 = vpop.permute.xlu0 %4077
    %4079 = vrot.lane.b32.xlu0 %v3202, 48
    %v4080 = vpop.permute.xlu0 %4079
    %4081 = vrot.lane.b32.xlu0 %v3200, 48
    %v4082 = vpop.permute.xlu0 %4081
    %4083 = vrot.lane.b32.xlu0 %v3203, 48
    %v4084 = vpop.permute.xlu0 %4083
    %v4086 = vsel %vm445, %v4078, 0
    %v4089 = vsel %vm445, %v4080, 0
    %v4092 = vsel %vm445, %v4082, 0
    %v4095 = vsel %vm445, %v4084, 0
    %4097 = vmatprep.subr.bf16.mxu0 0
    %4098 = vmatpush1.bf16.xpose.msra.mxu0 %v4092
    %4099 = vmatprep.subr.bf16.mxu0 0
    %4100 = vmatpush1.bf16.xpose.msra.mxu0 %v4095
    %4101 = vmatprep.subr.bf16.mxu0 0
    %4102 = vmatpush1.bf16.xpose.msra.mxu0 0
    %4103 = vmatprep.subr.bf16.mxu0 0
    %4104 = vmatpush1.bf16.xpose.msra.mxu0 0
    %4105 = vmatprep.subr.bf16.mxu0 0
    %4106 = vmatpush1.bf16.xpose.msra.mxu0 0
    %4107 = vmatprep.subr.bf16.mxu0 0
    %4108 = vmatpush1.bf16.xpose.msra.mxu0 0
    %4109 = vmatprep.subr.bf16.mxu0 0
    %4110 = vmatpush1.bf16.xpose.msra.mxu0 0
    %4111 = vmatprep.subr.bf16.mxu0 0
    %4112 = vmatpush1.bf16.xpose.msra.mxu0 0
    %4113 = vmatprep.subr.bf16.mxu0 0
    %4114 = vmatpush1.bf16.xpose.msra.mxu0 0
    %4115 = vmatprep.subr.bf16.mxu0 0
    %4116 = vmatpush1.bf16.xpose.msra.mxu0 0
    %4117 = vmatprep.subr.bf16.mxu0 0
    %4118 = vmatpush1.bf16.xpose.msra.mxu0 0
    %4119 = vmatprep.subr.bf16.mxu0 0
    %4120 = vmatpush1.bf16.xpose.msra.mxu0 0
    %4121 = vmatprep.subr.bf16.mxu0 0
    %4122 = vmatpush1.bf16.xpose.msra.mxu0 0
    %4123 = vmatprep.subr.bf16.mxu0 0
    %4124 = vmatpush1.bf16.xpose.msra.mxu0 0
    %4125 = vmatprep.subr.bf16.mxu0 0
    %4126 = vmatpush1.bf16.xpose.msra.mxu0 0
    %4127 = vmatprep.subr.bf16.mxu0 0
    %4128 = vmatpush1.bf16.xpose.msra.mxu0 0
    %4129 = vmatprep.mubr.bf16.mxu0 0
    %4130 = vmatmul.mubr.bf16.gmra.mrb[0].mxu0 %v4086
    %v4131 = vpop.f32.mrb[0].mxu0
    %v4132 = vadd.f32 %v109, %v4131
    %v4133 = vpop.f32.mrb[0].mxu0
    %v4134 = vpop.f32.mrb[0].mxu0
    %v4135 = vadd.f32 %v110, %v4134
    %v4136 = vpop.f32.mrb[0].mxu0
    %4137 = vmatprep.mubr.bf16.mxu0 0
    %4138 = vmatmul.mubr.bf16.gmra.mrb[0].mxu0 %v4089
    %v4139 = vpop.f32.mrb[0].mxu0
    %v4140 = vadd.f32 %v111, %v4139
    %v4141 = vpop.f32.mrb[0].mxu0
    %v4142 = vpop.f32.mrb[0].mxu0
    %v4143 = vadd.f32 %v112, %v4142
    %v4144 = vpop.f32.mrb[0].mxu0
    %4145 = vdwg.mxu0
    %v4146 = vsel %vm507, %v4132, -inf
    %4147 = vmax.xlane.f32.xlu0 %v4146
    %v4148 = vpop.xlane.xlu0 %4147
    %v4149 = vsel %vm507, %v4135, -inf
    %4150 = vmax.xlane.f32.xlu0 %v4149
    %v4151 = vpop.xlane.xlu0 %4150
    %v4152 = vsel %vm507, %v4140, -inf
    %4153 = vmax.xlane.f32.xlu0 %v4152
    %v4154 = vpop.xlane.xlu0 %4153
    %v4155 = vsel %vm507, %v4143, -inf
    %4156 = vmax.xlane.f32.xlu0 %v4155
    %v4157 = vpop.xlane.xlu0 %4156
    %v4158 = vsub.f32 %v4132, %v4148
    %v4159 = vsub.f32 %v4135, %v4151
    %v4160 = vsub.f32 %v4140, %v4154
    %v4161 = vsub.f32 %v4143, %v4157
    %v4162 = vmul.f32 %v4158, 1.442695
    %v4163 = vpow.pop %v4162
    %v4164 = vmul.f32 %v4159, 1.442695
    %v4165 = vpow.pop %v4164
    %v4166 = vmul.f32 %v4160, 1.442695
    %v4167 = vpow.pop %v4166
    %v4168 = vmul.f32 %v4161, 1.442695
    %v4169 = vpow.pop %v4168
    %v4170 = vsel %vm507, %v4163, 0.0
    %4171 = vadd.xlane.f32.xlu0 %v4170
    %v4172 = vpop.xlane.xlu0 %4171
    %v4173 = vsel %vm507, %v4165, 0.0
    %4174 = vadd.xlane.f32.xlu0 %v4173
    %v4175 = vpop.xlane.xlu0 %4174
    %v4176 = vsel %vm507, %v4167, 0.0
    %4177 = vadd.xlane.f32.xlu0 %v4176
    %v4178 = vpop.xlane.xlu0 %4177
    %v4179 = vsel %vm507, %v4169, 0.0
    %4180 = vadd.xlane.f32.xlu0 %v4179
    %v4181 = vpop.xlane.xlu0 %4180
    %v4182 = vrcp.pop %v4172
    %v4183 = vrcp.pop %v4175
    %v4184 = vrcp.pop %v4178
    %v4185 = vrcp.pop %v4181
    %v4186 = vmul.f32 %v4163, %v4182
    %v4187 = vmul.f32 %v4165, %v4183
    %v4188 = vmul.f32 %v4167, %v4184
    %v4189 = vmul.f32 %v4169, %v4185
    %v4190 = vpack.c.bf16 %v4187, %v4186
    %v4191 = vpack.c.bf16 %v4189, %v4188
    %4192 = vrot.lane.b32.xlu0 %v3201, 48
    %v4193 = vpop.permute.xlu0 %4192
    %4194 = vrot.lane.b32.xlu0 %v3204, 48
    %v4195 = vpop.permute.xlu0 %4194
    %v4199 = vsel %vm507, %v4190, 0
    %v4202 = vsel %vm507, %v4191, 0
    %4204 = vmatprep.subr.bf16.mxu0 0
    %4205 = vmatpush1.bf16.msra.mxu0 %v4193
    %4206 = vmatprep.subr.bf16.mxu0 0
    %4207 = vmatpush1.bf16.msra.mxu0 %v4195
    %4208 = vmatprep.subr.bf16.mxu0 0
    %4209 = vmatpush1.bf16.msra.mxu0 0
    %4210 = vmatprep.subr.bf16.mxu0 0
    %4211 = vmatpush1.bf16.msra.mxu0 0
    %4212 = vmatprep.subr.bf16.mxu0 0
    %4213 = vmatpush1.bf16.msra.mxu0 0
    %4214 = vmatprep.subr.bf16.mxu0 0
    %4215 = vmatpush1.bf16.msra.mxu0 0
    %4216 = vmatprep.subr.bf16.mxu0 0
    %4217 = vmatpush1.bf16.msra.mxu0 0
    %4218 = vmatprep.subr.bf16.mxu0 0
    %4219 = vmatpush1.bf16.msra.mxu0 0
    %4220 = vmatprep.subr.bf16.mxu0 0
    %4221 = vmatpush1.bf16.msra.mxu0 0
    %4222 = vmatprep.subr.bf16.mxu0 0
    %4223 = vmatpush1.bf16.msra.mxu0 0
    %4224 = vmatprep.subr.bf16.mxu0 0
    %4225 = vmatpush1.bf16.msra.mxu0 0
    %4226 = vmatprep.subr.bf16.mxu0 0
    %4227 = vmatpush1.bf16.msra.mxu0 0
    %4228 = vmatprep.subr.bf16.mxu0 0
    %4229 = vmatpush1.bf16.msra.mxu0 0
    %4230 = vmatprep.subr.bf16.mxu0 0
    %4231 = vmatpush1.bf16.msra.mxu0 0
    %4232 = vmatprep.subr.bf16.mxu0 0
    %4233 = vmatpush1.bf16.msra.mxu0 0
    %4234 = vmatprep.subr.bf16.mxu0 0
    %4235 = vmatpush1.bf16.msra.mxu0 0
    %4236 = vmatprep.mubr.bf16.mxu0 0
    %4237 = vmatmul.mubr.bf16.gmra.mrb[0].mxu0 %v4199
    %v4238 = vpop.f32.mrb[0].mxu0
    %v4239 = vadd.f32 0.0, %v4238
    %v4240 = vpop.f32.mrb[0].mxu0
    %v4241 = vpop.f32.mrb[0].mxu0
    %v4242 = vadd.f32 0.0, %v4241
    %v4243 = vpop.f32.mrb[0].mxu0
    %4244 = vmatprep.mubr.bf16.mxu0 0
    %4245 = vmatmul.mubr.bf16.gmra.mrb[0].mxu0 %v4202
    %v4246 = vpop.f32.mrb[0].mxu0
    %v4247 = vadd.f32 0.0, %v4246
    %v4248 = vpop.f32.mrb[0].mxu0
    %v4249 = vpop.f32.mrb[0].mxu0
    %v4250 = vadd.f32 0.0, %v4249
    %v4251 = vpop.f32.mrb[0].mxu0
    %4252 = vdwg.mxu0
    %4253 = vrot.lane.b32.xlu0 %v3199, 32
    %v4254 = vpop.permute.xlu0 %4253
    %4255 = vrot.lane.b32.xlu0 %v3202, 32
    %v4256 = vpop.permute.xlu0 %4255
    %4257 = vrot.lane.b32.xlu0 %v3200, 32
    %v4258 = vpop.permute.xlu0 %4257
    %4259 = vrot.lane.b32.xlu0 %v3203, 32
    %v4260 = vpop.permute.xlu0 %4259
    %v4262 = vsel %vm445, %v4254, 0
    %v4265 = vsel %vm445, %v4256, 0
    %v4268 = vsel %vm445, %v4258, 0
    %v4271 = vsel %vm445, %v4260, 0
    %4273 = vmatprep.subr.bf16.mxu0 0
    %4274 = vmatpush1.bf16.xpose.msra.mxu0 %v4268
    %4275 = vmatprep.subr.bf16.mxu0 0
    %4276 = vmatpush1.bf16.xpose.msra.mxu0 %v4271
    %4277 = vmatprep.subr.bf16.mxu0 0
    %4278 = vmatpush1.bf16.xpose.msra.mxu0 0
    %4279 = vmatprep.subr.bf16.mxu0 0
    %4280 = vmatpush1.bf16.xpose.msra.mxu0 0
    %4281 = vmatprep.subr.bf16.mxu0 0
    %4282 = vmatpush1.bf16.xpose.msra.mxu0 0
    %4283 = vmatprep.subr.bf16.mxu0 0
    %4284 = vmatpush1.bf16.xpose.msra.mxu0 0
    %4285 = vmatprep.subr.bf16.mxu0 0
    %4286 = vmatpush1.bf16.xpose.msra.mxu0 0
    %4287 = vmatprep.subr.bf16.mxu0 0
    %4288 = vmatpush1.bf16.xpose.msra.mxu0 0
    %4289 = vmatprep.subr.bf16.mxu0 0
    %4290 = vmatpush1.bf16.xpose.msra.mxu0 0
    %4291 = vmatprep.subr.bf16.mxu0 0
    %4292 = vmatpush1.bf16.xpose.msra.mxu0 0
    %4293 = vmatprep.subr.bf16.mxu0 0
    %4294 = vmatpush1.bf16.xpose.msra.mxu0 0
    %4295 = vmatprep.subr.bf16.mxu0 0
    %4296 = vmatpush1.bf16.xpose.msra.mxu0 0
    %4297 = vmatprep.subr.bf16.mxu0 0
    %4298 = vmatpush1.bf16.xpose.msra.mxu0 0
    %4299 = vmatprep.subr.bf16.mxu0 0
    %4300 = vmatpush1.bf16.xpose.msra.mxu0 0
    %4301 = vmatprep.subr.bf16.mxu0 0
    %4302 = vmatpush1.bf16.xpose.msra.mxu0 0
    %4303 = vmatprep.subr.bf16.mxu0 0
    %4304 = vmatpush1.bf16.xpose.msra.mxu0 0
    %4305 = vmatprep.mubr.bf16.mxu0 0
    %4306 = vmatmul.mubr.bf16.gmra.mrb[0].mxu0 %v4262
    %v4307 = vpop.f32.mrb[0].mxu0
    %v4308 = vadd.f32 %v109, %v4307
    %v4309 = vpop.f32.mrb[0].mxu0
    %v4310 = vpop.f32.mrb[0].mxu0
    %v4311 = vadd.f32 %v110, %v4310
    %v4312 = vpop.f32.mrb[0].mxu0
    %4313 = vmatprep.mubr.bf16.mxu0 0
    %4314 = vmatmul.mubr.bf16.gmra.mrb[0].mxu0 %v4265
    %v4315 = vpop.f32.mrb[0].mxu0
    %v4316 = vadd.f32 %v111, %v4315
    %v4317 = vpop.f32.mrb[0].mxu0
    %v4318 = vpop.f32.mrb[0].mxu0
    %v4319 = vadd.f32 %v112, %v4318
    %v4320 = vpop.f32.mrb[0].mxu0
    %4321 = vdwg.mxu0
    %v4322 = vsel %vm507, %v4308, -inf
    %4323 = vmax.xlane.f32.xlu0 %v4322
    %v4324 = vpop.xlane.xlu0 %4323
    %v4325 = vsel %vm507, %v4311, -inf
    %4326 = vmax.xlane.f32.xlu0 %v4325
    %v4327 = vpop.xlane.xlu0 %4326
    %v4328 = vsel %vm507, %v4316, -inf
    %4329 = vmax.xlane.f32.xlu0 %v4328
    %v4330 = vpop.xlane.xlu0 %4329
    %v4331 = vsel %vm507, %v4319, -inf
    %4332 = vmax.xlane.f32.xlu0 %v4331
    %v4333 = vpop.xlane.xlu0 %4332
    %v4334 = vsub.f32 %v4308, %v4324
    %v4335 = vsub.f32 %v4311, %v4327
    %v4336 = vsub.f32 %v4316, %v4330
    %v4337 = vsub.f32 %v4319, %v4333
    %v4338 = vmul.f32 %v4334, 1.442695
    %v4339 = vpow.pop %v4338
    %v4340 = vmul.f32 %v4335, 1.442695
    %v4341 = vpow.pop %v4340
    %v4342 = vmul.f32 %v4336, 1.442695
    %v4343 = vpow.pop %v4342
    %v4344 = vmul.f32 %v4337, 1.442695
    %v4345 = vpow.pop %v4344
    %v4346 = vsel %vm507, %v4339, 0.0
    %4347 = vadd.xlane.f32.xlu0 %v4346
    %v4348 = vpop.xlane.xlu0 %4347
    %v4349 = vsel %vm507, %v4341, 0.0
    %4350 = vadd.xlane.f32.xlu0 %v4349
    %v4351 = vpop.xlane.xlu0 %4350
    %v4352 = vsel %vm507, %v4343, 0.0
    %4353 = vadd.xlane.f32.xlu0 %v4352
    %v4354 = vpop.xlane.xlu0 %4353
    %v4355 = vsel %vm507, %v4345, 0.0
    %4356 = vadd.xlane.f32.xlu0 %v4355
    %v4357 = vpop.xlane.xlu0 %4356
    %v4358 = vrcp.pop %v4348
    %v4359 = vrcp.pop %v4351
    %v4360 = vrcp.pop %v4354
    %v4361 = vrcp.pop %v4357
    %v4362 = vmul.f32 %v4339, %v4358
    %v4363 = vmul.f32 %v4341, %v4359
    %v4364 = vmul.f32 %v4343, %v4360
    %v4365 = vmul.f32 %v4345, %v4361
    %v4366 = vpack.c.bf16 %v4363, %v4362
    %v4367 = vpack.c.bf16 %v4365, %v4364
    %4368 = vrot.lane.b32.xlu0 %v3201, 32
    %v4369 = vpop.permute.xlu0 %4368
    %4370 = vrot.lane.b32.xlu0 %v3204, 32
    %v4371 = vpop.permute.xlu0 %4370
    %v4375 = vsel %vm507, %v4366, 0
    %v4378 = vsel %vm507, %v4367, 0
    %4380 = vmatprep.subr.bf16.mxu0 0
    %4381 = vmatpush1.bf16.msra.mxu0 %v4369
    %4382 = vmatprep.subr.bf16.mxu0 0
    %4383 = vmatpush1.bf16.msra.mxu0 %v4371
    %4384 = vmatprep.subr.bf16.mxu0 0
    %4385 = vmatpush1.bf16.msra.mxu0 0
    %4386 = vmatprep.subr.bf16.mxu0 0
    %4387 = vmatpush1.bf16.msra.mxu0 0
    %4388 = vmatprep.subr.bf16.mxu0 0
    %4389 = vmatpush1.bf16.msra.mxu0 0
    %4390 = vmatprep.subr.bf16.mxu0 0
    %4391 = vmatpush1.bf16.msra.mxu0 0
    %4392 = vmatprep.subr.bf16.mxu0 0
    %4393 = vmatpush1.bf16.msra.mxu0 0
    %4394 = vmatprep.subr.bf16.mxu0 0
    %4395 = vmatpush1.bf16.msra.mxu0 0
    %4396 = vmatprep.subr.bf16.mxu0 0
    %4397 = vmatpush1.bf16.msra.mxu0 0
    %4398 = vmatprep.subr.bf16.mxu0 0
    %4399 = vmatpush1.bf16.msra.mxu0 0
    %4400 = vmatprep.subr.bf16.mxu0 0
    %4401 = vmatpush1.bf16.msra.mxu0 0
    %4402 = vmatprep.subr.bf16.mxu0 0
    %4403 = vmatpush1.bf16.msra.mxu0 0
    %4404 = vmatprep.subr.bf16.mxu0 0
    %4405 = vmatpush1.bf16.msra.mxu0 0
    %4406 = vmatprep.subr.bf16.mxu0 0
    %4407 = vmatpush1.bf16.msra.mxu0 0
    %4408 = vmatprep.subr.bf16.mxu0 0
    %4409 = vmatpush1.bf16.msra.mxu0 0
    %4410 = vmatprep.subr.bf16.mxu0 0
    %4411 = vmatpush1.bf16.msra.mxu0 0
    %4412 = vmatprep.mubr.bf16.mxu0 0
    %4413 = vmatmul.mubr.bf16.gmra.mrb[0].mxu0 %v4375
    %v4414 = vpop.f32.mrb[0].mxu0
    %v4415 = vadd.f32 0.0, %v4414
    %v4416 = vpop.f32.mrb[0].mxu0
    %v4417 = vpop.f32.mrb[0].mxu0
    %v4418 = vadd.f32 0.0, %v4417
    %v4419 = vpop.f32.mrb[0].mxu0
    %4420 = vmatprep.mubr.bf16.mxu0 0
    %4421 = vmatmul.mubr.bf16.gmra.mrb[0].mxu0 %v4378
    %v4422 = vpop.f32.mrb[0].mxu0
    %v4423 = vadd.f32 0.0, %v4422
    %v4424 = vpop.f32.mrb[0].mxu0
    %v4425 = vpop.f32.mrb[0].mxu0
    %v4426 = vadd.f32 0.0, %v4425
    %v4427 = vpop.f32.mrb[0].mxu0
    %4428 = vdwg.mxu0
    %4429 = vrot.lane.b32.xlu0 %v3199, 16
    %v4430 = vpop.permute.xlu0 %4429
    %4431 = vrot.lane.b32.xlu0 %v3202, 16
    %v4432 = vpop.permute.xlu0 %4431
    %4433 = vrot.lane.b32.xlu0 %v3200, 16
    %v4434 = vpop.permute.xlu0 %4433
    %4435 = vrot.lane.b32.xlu0 %v3203, 16
    %v4436 = vpop.permute.xlu0 %4435
    %v4438 = vsel %vm445, %v4430, 0
    %v4441 = vsel %vm445, %v4432, 0
    %v4444 = vsel %vm445, %v4434, 0
    %v4447 = vsel %vm445, %v4436, 0
    %4449 = vmatprep.subr.bf16.mxu0 0
    %4450 = vmatpush1.bf16.xpose.msra.mxu0 %v4444
    %4451 = vmatprep.subr.bf16.mxu0 0
    %4452 = vmatpush1.bf16.xpose.msra.mxu0 %v4447
    %4453 = vmatprep.subr.bf16.mxu0 0
    %4454 = vmatpush1.bf16.xpose.msra.mxu0 0
    %4455 = vmatprep.subr.bf16.mxu0 0
    %4456 = vmatpush1.bf16.xpose.msra.mxu0 0
    %4457 = vmatprep.subr.bf16.mxu0 0
    %4458 = vmatpush1.bf16.xpose.msra.mxu0 0
    %4459 = vmatprep.subr.bf16.mxu0 0
    %4460 = vmatpush1.bf16.xpose.msra.mxu0 0
    %4461 = vmatprep.subr.bf16.mxu0 0
    %4462 = vmatpush1.bf16.xpose.msra.mxu0 0
    %4463 = vmatprep.subr.bf16.mxu0 0
    %4464 = vmatpush1.bf16.xpose.msra.mxu0 0
    %4465 = vmatprep.subr.bf16.mxu0 0
    %4466 = vmatpush1.bf16.xpose.msra.mxu0 0
    %4467 = vmatprep.subr.bf16.mxu0 0
    %4468 = vmatpush1.bf16.xpose.msra.mxu0 0
    %4469 = vmatprep.subr.bf16.mxu0 0
    %4470 = vmatpush1.bf16.xpose.msra.mxu0 0
    %4471 = vmatprep.subr.bf16.mxu0 0
    %4472 = vmatpush1.bf16.xpose.msra.mxu0 0
    %4473 = vmatprep.subr.bf16.mxu0 0
    %4474 = vmatpush1.bf16.xpose.msra.mxu0 0
    %4475 = vmatprep.subr.bf16.mxu0 0
    %4476 = vmatpush1.bf16.xpose.msra.mxu0 0
    %4477 = vmatprep.subr.bf16.mxu0 0
    %4478 = vmatpush1.bf16.xpose.msra.mxu0 0
    %4479 = vmatprep.subr.bf16.mxu0 0
    %4480 = vmatpush1.bf16.xpose.msra.mxu0 0
    %4481 = vmatprep.mubr.bf16.mxu0 0
    %4482 = vmatmul.mubr.bf16.gmra.mrb[0].mxu0 %v4438
    %v4483 = vpop.f32.mrb[0].mxu0
    %v4484 = vadd.f32 %v109, %v4483
    %v4485 = vpop.f32.mrb[0].mxu0
    %v4486 = vpop.f32.mrb[0].mxu0
    %v4487 = vadd.f32 %v110, %v4486
    %v4488 = vpop.f32.mrb[0].mxu0
    %4489 = vmatprep.mubr.bf16.mxu0 0
    %4490 = vmatmul.mubr.bf16.gmra.mrb[0].mxu0 %v4441
    %v4491 = vpop.f32.mrb[0].mxu0
    %v4492 = vadd.f32 %v111, %v4491
    %v4493 = vpop.f32.mrb[0].mxu0
    %v4494 = vpop.f32.mrb[0].mxu0
    %v4495 = vadd.f32 %v112, %v4494
    %v4496 = vpop.f32.mrb[0].mxu0
    %4497 = vdwg.mxu0
    %v4498 = vsel %vm507, %v4484, -inf
    %4499 = vmax.xlane.f32.xlu0 %v4498
    %v4500 = vpop.xlane.xlu0 %4499
    %v4501 = vsel %vm507, %v4487, -inf
    %4502 = vmax.xlane.f32.xlu0 %v4501
    %v4503 = vpop.xlane.xlu0 %4502
    %v4504 = vsel %vm507, %v4492, -inf
    %4505 = vmax.xlane.f32.xlu0 %v4504
    %v4506 = vpop.xlane.xlu0 %4505
    %v4507 = vsel %vm507, %v4495, -inf
    %4508 = vmax.xlane.f32.xlu0 %v4507
    %v4509 = vpop.xlane.xlu0 %4508
    %v4510 = vsub.f32 %v4484, %v4500
    %v4511 = vsub.f32 %v4487, %v4503
    %v4512 = vsub.f32 %v4492, %v4506
    %v4513 = vsub.f32 %v4495, %v4509
    %v4514 = vmul.f32 %v4510, 1.442695
    %v4515 = vpow.pop %v4514
    %v4516 = vmul.f32 %v4511, 1.442695
    %v4517 = vpow.pop %v4516
    %v4518 = vmul.f32 %v4512, 1.442695
    %v4519 = vpow.pop %v4518
    %v4520 = vmul.f32 %v4513, 1.442695
    %v4521 = vpow.pop %v4520
    %v4522 = vsel %vm507, %v4515, 0.0
    %4523 = vadd.xlane.f32.xlu0 %v4522
    %v4524 = vpop.xlane.xlu0 %4523
    %v4525 = vsel %vm507, %v4517, 0.0
    %4526 = vadd.xlane.f32.xlu0 %v4525
    %v4527 = vpop.xlane.xlu0 %4526
    %v4528 = vsel %vm507, %v4519, 0.0
    %4529 = vadd.xlane.f32.xlu0 %v4528
    %v4530 = vpop.xlane.xlu0 %4529
    %v4531 = vsel %vm507, %v4521, 0.0
    %4532 = vadd.xlane.f32.xlu0 %v4531
    %v4533 = vpop.xlane.xlu0 %4532
    %v4534 = vrcp.pop %v4524
    %v4535 = vrcp.pop %v4527
    %v4536 = vrcp.pop %v4530
    %v4537 = vrcp.pop %v4533
    %v4538 = vmul.f32 %v4515, %v4534
    %v4539 = vmul.f32 %v4517, %v4535
    %v4540 = vmul.f32 %v4519, %v4536
    %v4541 = vmul.f32 %v4521, %v4537
    %v4542 = vpack.c.bf16 %v4539, %v4538
    %v4543 = vpack.c.bf16 %v4541, %v4540
    %4544 = vrot.lane.b32.xlu0 %v3201, 16
    %v4545 = vpop.permute.xlu0 %4544
    %4546 = vrot.lane.b32.xlu0 %v3204, 16
    %v4547 = vpop.permute.xlu0 %4546
    %v4551 = vsel %vm507, %v4542, 0
    %v4554 = vsel %vm507, %v4543, 0
    %4556 = vmatprep.subr.bf16.mxu0 0
    %4557 = vmatpush1.bf16.msra.mxu0 %v4545
    %4558 = vmatprep.subr.bf16.mxu0 0
    %4559 = vmatpush1.bf16.msra.mxu0 %v4547
    %4560 = vmatprep.subr.bf16.mxu0 0
    %4561 = vmatpush1.bf16.msra.mxu0 0
    %4562 = vmatprep.subr.bf16.mxu0 0
    %4563 = vmatpush1.bf16.msra.mxu0 0
    %4564 = vmatprep.subr.bf16.mxu0 0
    %4565 = vmatpush1.bf16.msra.mxu0 0
    %4566 = vmatprep.subr.bf16.mxu0 0
    %4567 = vmatpush1.bf16.msra.mxu0 0
    %4568 = vmatprep.subr.bf16.mxu0 0
    %4569 = vmatpush1.bf16.msra.mxu0 0
    %4570 = vmatprep.subr.bf16.mxu0 0
    %4571 = vmatpush1.bf16.msra.mxu0 0
    %4572 = vmatprep.subr.bf16.mxu0 0
    %4573 = vmatpush1.bf16.msra.mxu0 0
    %4574 = vmatprep.subr.bf16.mxu0 0
    %4575 = vmatpush1.bf16.msra.mxu0 0
    %4576 = vmatprep.subr.bf16.mxu0 0
    %4577 = vmatpush1.bf16.msra.mxu0 0
    %4578 = vmatprep.subr.bf16.mxu0 0
    %4579 = vmatpush1.bf16.msra.mxu0 0
    %4580 = vmatprep.subr.bf16.mxu0 0
    %4581 = vmatpush1.bf16.msra.mxu0 0
    %4582 = vmatprep.subr.bf16.mxu0 0
    %4583 = vmatpush1.bf16.msra.mxu0 0
    %4584 = vmatprep.subr.bf16.mxu0 0
    %4585 = vmatpush1.bf16.msra.mxu0 0
    %4586 = vmatprep.subr.bf16.mxu0 0
    %4587 = vmatpush1.bf16.msra.mxu0 0
    %4588 = vmatprep.mubr.bf16.mxu0 0
    %4589 = vmatmul.mubr.bf16.gmra.mrb[0].mxu0 %v4551
    %v4590 = vpop.f32.mrb[0].mxu0
    %v4591 = vadd.f32 0.0, %v4590
    %v4592 = vpop.f32.mrb[0].mxu0
    %v4593 = vpop.f32.mrb[0].mxu0
    %v4594 = vadd.f32 0.0, %v4593
    %v4595 = vpop.f32.mrb[0].mxu0
    %4596 = vmatprep.mubr.bf16.mxu0 0
    %4597 = vmatmul.mubr.bf16.gmra.mrb[0].mxu0 %v4554
    %v4598 = vpop.f32.mrb[0].mxu0
    %v4599 = vadd.f32 0.0, %v4598
    %v4600 = vpop.f32.mrb[0].mxu0
    %v4601 = vpop.f32.mrb[0].mxu0
    %v4602 = vadd.f32 0.0, %v4601
    %v4603 = vpop.f32.mrb[0].mxu0
    %4604 = vdwg.mxu0
    %4609 = vrot.lane.b32.xlu0 %v3535, 16
    %v4610 = vpop.permute.xlu0 %4609
    %4611 = vrot.lane.b32.xlu0 %v3538, 16
    %v4612 = vpop.permute.xlu0 %4611
    %4613 = vrot.lane.b32.xlu0 %v3543, 16
    %v4614 = vpop.permute.xlu0 %4613
    %4615 = vrot.lane.b32.xlu0 %v3546, 16
    %v4616 = vpop.permute.xlu0 %4615
    %4625 = vrot.lane.b32.xlu0 %v3711, 32
    %v4626 = vpop.permute.xlu0 %4625
    %4627 = vrot.lane.b32.xlu0 %v3714, 32
    %v4628 = vpop.permute.xlu0 %4627
    %4629 = vrot.lane.b32.xlu0 %v3719, 32
    %v4630 = vpop.permute.xlu0 %4629
    %4631 = vrot.lane.b32.xlu0 %v3722, 32
    %v4632 = vpop.permute.xlu0 %4631
    %4641 = vrot.lane.b32.xlu0 %v3887, 48
    %v4642 = vpop.permute.xlu0 %4641
    %4643 = vrot.lane.b32.xlu0 %v3890, 48
    %v4644 = vpop.permute.xlu0 %4643
    %4645 = vrot.lane.b32.xlu0 %v3895, 48
    %v4646 = vpop.permute.xlu0 %4645
    %4647 = vrot.lane.b32.xlu0 %v3898, 48
    %v4648 = vpop.permute.xlu0 %4647
    %4657 = vrot.lane.b32.xlu0 %v4063, 64
    %v4658 = vpop.permute.xlu0 %4657
    %4659 = vrot.lane.b32.xlu0 %v4066, 64
    %v4660 = vpop.permute.xlu0 %4659
    %4661 = vrot.lane.b32.xlu0 %v4071, 64
    %v4662 = vpop.permute.xlu0 %4661
    %4663 = vrot.lane.b32.xlu0 %v4074, 64
    %v4664 = vpop.permute.xlu0 %4663
    %4673 = vrot.lane.b32.xlu0 %v4239, 80
    %v4674 = vpop.permute.xlu0 %4673
    %4675 = vrot.lane.b32.xlu0 %v4242, 80
    %v4676 = vpop.permute.xlu0 %4675
    %4677 = vrot.lane.b32.xlu0 %v4247, 80
    %v4678 = vpop.permute.xlu0 %4677
    %4679 = vrot.lane.b32.xlu0 %v4250, 80
    %v4680 = vpop.permute.xlu0 %4679
    %4689 = vrot.lane.b32.xlu0 %v4415, 96
    %v4690 = vpop.permute.xlu0 %4689
    %4691 = vrot.lane.b32.xlu0 %v4418, 96
    %v4692 = vpop.permute.xlu0 %4691
    %4693 = vrot.lane.b32.xlu0 %v4423, 96
    %v4694 = vpop.permute.xlu0 %4693
    %4695 = vrot.lane.b32.xlu0 %v4426, 96
    %v4696 = vpop.permute.xlu0 %4695
    %4705 = vrot.lane.b32.xlu0 %v4591, 112
    %v4706 = vpop.permute.xlu0 %4705
    %4707 = vrot.lane.b32.xlu0 %v4594, 112
    %v4708 = vpop.permute.xlu0 %4707
    %4709 = vrot.lane.b32.xlu0 %v4599, 112
    %v4710 = vpop.permute.xlu0 %4709
    %4711 = vrot.lane.b32.xlu0 %v4602, 112
    %v4712 = vpop.permute.xlu0 %4711
    %v4717 = vsel %vm445, %v3353, %v4610
    %v4718 = vsel %vm445, %v3356, %v4612
    %v4719 = vsel %vm445, %v3361, %v4614
    %v4720 = vsel %vm445, %v3364, %v4616
    %v4721 = vsel %vm507, %v4717, %v4626
    %v4722 = vsel %vm507, %v4718, %v4628
    %v4723 = vsel %vm507, %v4719, %v4630
    %v4724 = vsel %vm507, %v4720, %v4632
    %v4725 = vsel %vm1967, %v4721, %v4642
    %v4726 = vsel %vm1967, %v4722, %v4644
    %v4727 = vsel %vm1967, %v4723, %v4646
    %v4728 = vsel %vm1967, %v4724, %v4648
    %v4729 = vsel %vm1972, %v4725, %v4658
    %v4730 = vsel %vm1972, %v4726, %v4660
    %v4731 = vsel %vm1972, %v4727, %v4662
    %v4732 = vsel %vm1972, %v4728, %v4664
    %v4733 = vsel %vm1977, %v4729, %v4674
    %v4734 = vsel %vm1977, %v4730, %v4676
    %v4735 = vsel %vm1977, %v4731, %v4678
    %v4736 = vsel %vm1977, %v4732, %v4680
    %v4737 = vsel %vm1982, %v4733, %v4690
    %v4738 = vsel %vm1982, %v4734, %v4692
    %v4739 = vsel %vm1982, %v4735, %v4694
    %v4740 = vsel %vm1982, %v4736, %v4696
    %v4741 = vsel %vm1987, %v4737, %v4706
    %v4742 = vsel %vm1987, %v4738, %v4708
    %v4743 = vsel %vm1987, %v4739, %v4710
    %v4744 = vsel %vm1987, %v4740, %v4712
    %v4745 = vpack.c.bf16 %v4742, %v4741
    %v4746 = vpack.c.bf16 %v4744, %v4743
    %v4747 = vld [vmem:[%s2919 + $0xc] sm:$0xf]
    %v4748 = vld [vmem:[%s2919 + $0x2c] sm:$0xf]
    %v4749 = vld [vmem:[%s2919 + $0x4c] sm:$0xf]
    %v4750 = vld [vmem:[%s2919 + $0x6c] sm:$0xf]
    %v4751 = vld [vmem:[%s2919 + $0x8c] sm:$0xf]
    %v4752 = vld [vmem:[%s2919 + $0xac] sm:$0xf]
    %v4753 = vld [vmem:[%s2919 + $0xcc] sm:$0xf]
    %v4754 = vld [vmem:[%s2919 + $0xec] sm:$0xf]
    %v4755 = vld [vmem:[%s2919 + $0x10c] sm:$0xf]
    %v4756 = vld [vmem:[%s2919 + $0x12c] sm:$0xf]
    %v4757 = vld [vmem:[%s2919 + $0x14c] sm:$0xf]
    %v4758 = vld [vmem:[%s2919 + $0x16c] sm:$0xf]
    %v4759 = vld [vmem:[%s2919 + $0x18c] sm:$0xf]
    %v4760 = vld [vmem:[%s2919 + $0x1ac] sm:$0xf]
    %v4761 = vld [vmem:[%s2919 + $0x1cc] sm:$0xf]
    %v4762 = vld [vmem:[%s2919 + $0x1ec] sm:$0xf]
    %v4763 = vld [vmem:[#allocation11 + $0xc] sm:$0x1]
    %v4765 = vlaneseq
    %v4766 = vshrl.u32 %v4765, 7
    %v4767 = vsub.s32 0, %v4766
    %v4768 = vrot.slane %v4763, %v4767
    %v4786 = vunpack.c.l.b16 %v4747
    %v4787 = vunpack.c.l.b16 %v4748
    %v4788 = vunpack.c.l.b16 %v4749
    %v4789 = vunpack.c.l.b16 %v4750
    %v4790 = vunpack.c.l.b16 %v4751
    %v4791 = vunpack.c.l.b16 %v4752
    %v4792 = vunpack.c.l.b16 %v4753
    %v4793 = vunpack.c.l.b16 %v4754
    %v4794 = vunpack.c.l.b16 %v4755
    %v4795 = vunpack.c.l.b16 %v4756
    %v4796 = vunpack.c.l.b16 %v4757
    %v4797 = vunpack.c.l.b16 %v4758
    %v4798 = vunpack.c.l.b16 %v4759
    %v4799 = vunpack.c.l.b16 %v4760
    %v4800 = vunpack.c.l.b16 %v4761
    %v4801 = vunpack.c.l.b16 %v4762
    %v4802 = vpack.c.b16 %v4787, %v4786
    %v4803 = vpack.c.b16 %v4789, %v4788
    %v4804 = vpack.c.b16 %v4791, %v4790
    %v4805 = vpack.c.b16 %v4793, %v4792
    %v4806 = vpack.c.b16 %v4795, %v4794
    %v4807 = vpack.c.b16 %v4797, %v4796
    %v4808 = vpack.c.b16 %v4799, %v4798
    %v4809 = vpack.c.b16 %v4801, %v4800
    %4818 = vmatprep.subr.bf16.mxu0 0
    %4819 = vmatpush1.bf16.msra.mxu0 %v4802
    %4820 = vmatprep.subr.bf16.mxu0 0
    %4821 = vmatpush1.bf16.msra.mxu0 %v4803
    %4822 = vmatprep.subr.bf16.mxu0 0
    %4823 = vmatpush1.bf16.msra.mxu0 %v4804
    %4824 = vmatprep.subr.bf16.mxu0 0
    %4825 = vmatpush1.bf16.msra.mxu0 %v4805
    %4826 = vmatprep.subr.bf16.mxu0 0
    %4827 = vmatpush1.bf16.msra.mxu0 %v4806
    %4828 = vmatprep.subr.bf16.mxu0 0
    %4829 = vmatpush1.bf16.msra.mxu0 %v4807
    %4830 = vmatprep.subr.bf16.mxu0 0
    %4831 = vmatpush1.bf16.msra.mxu0 %v4808
    %4832 = vmatprep.subr.bf16.mxu0 0
    %4833 = vmatpush1.bf16.msra.mxu0 %v4809
    %4834 = vmatprep.subr.bf16.mxu0 0
    %4835 = vmatpush1.bf16.msra.mxu0 0
    %4836 = vmatprep.subr.bf16.mxu0 0
    %4837 = vmatpush1.bf16.msra.mxu0 0
    %4838 = vmatprep.subr.bf16.mxu0 0
    %4839 = vmatpush1.bf16.msra.mxu0 0
    %4840 = vmatprep.subr.bf16.mxu0 0
    %4841 = vmatpush1.bf16.msra.mxu0 0
    %4842 = vmatprep.subr.bf16.mxu0 0
    %4843 = vmatpush1.bf16.msra.mxu0 0
    %4844 = vmatprep.subr.bf16.mxu0 0
    %4845 = vmatpush1.bf16.msra.mxu0 0
    %4846 = vmatprep.subr.bf16.mxu0 0
    %4847 = vmatpush1.bf16.msra.mxu0 0
    %4848 = vmatprep.subr.bf16.mxu0 0
    %4849 = vmatpush1.bf16.msra.mxu0 0
    %4850 = vmatprep.mubr.bf16.mxu0 0
    %4851 = vmatmul.mubr.bf16.gmra.mrb[0].mxu0 %v4745
    %v4852 = vpop.f32.mrb[0].mxu0
    %v4853 = vadd.f32 %v4768, %v4852
    %v4854 = vpop.f32.mrb[0].mxu0
    %v4855 = vpop.f32.mrb[0].mxu0
    %v4856 = vadd.f32 %v4768, %v4855
    %v4857 = vpop.f32.mrb[0].mxu0
    %4858 = vmatprep.mubr.bf16.mxu0 0
    %4859 = vmatmul.mubr.bf16.gmra.mrb[0].mxu0 %v4746
    %v4860 = vpop.f32.mrb[0].mxu0
    %v4861 = vadd.f32 %v4768, %v4860
    %v4862 = vpop.f32.mrb[0].mxu0
    %v4863 = vpop.f32.mrb[0].mxu0
    %v4864 = vadd.f32 %v4768, %v4863
    %v4865 = vpop.f32.mrb[0].mxu0
    %4866 = vdwg.mxu0
    %v4867 = vadd.f32 %v2869, %v4853
    %v4868 = vadd.f32 %v2870, %v4856
    %v4869 = vadd.f32 %v2871, %v4861
    %v4870 = vadd.f32 %v2872, %v4864
    %4871 = vadd.xlane.f32.xlu0 %v4867
    %v4872 = vpop.xlane.xlu0 %4871
    %4873 = vadd.xlane.f32.xlu0 %v4868
    %v4874 = vpop.xlane.xlu0 %4873
    %4875 = vadd.xlane.f32.xlu0 %v4869
    %v4876 = vpop.xlane.xlu0 %4875
    %4877 = vadd.xlane.f32.xlu0 %v4870
    %v4878 = vpop.xlane.xlu0 %4877
    %v4879 = vmul.f32 %v4872, %v121
    %v4880 = vmul.f32 %v4874, %v121
    %v4881 = vmul.f32 %v4876, %v121
    %v4882 = vmul.f32 %v4878, %v121
    %v4883 = vsub.f32 %v4867, %v4879
    %v4884 = vsub.f32 %v4868, %v4880
    %v4885 = vsub.f32 %v4869, %v4881
    %v4886 = vsub.f32 %v4870, %v4882
    %v4887 = vmul.f32 %v4883, %v4883
    %v4888 = vmul.f32 %v4884, %v4884
    %v4889 = vmul.f32 %v4885, %v4885
    %v4890 = vmul.f32 %v4886, %v4886
    %4891 = vadd.xlane.f32.xlu0 %v4887
    %v4892 = vpop.xlane.xlu0 %4891
    %4893 = vadd.xlane.f32.xlu0 %v4888
    %v4894 = vpop.xlane.xlu0 %4893
    %4895 = vadd.xlane.f32.xlu0 %v4889
    %v4896 = vpop.xlane.xlu0 %4895
    %4897 = vadd.xlane.f32.xlu0 %v4890
    %v4898 = vpop.xlane.xlu0 %4897
    %v4899 = vmul.f32 %v4892, %v121
    %v4900 = vmul.f32 %v4894, %v121
    %v4901 = vmul.f32 %v4896, %v121
    %v4902 = vmul.f32 %v4898, %v121
    %v4903 = vadd.f32 %v4899, 1e-05
    %v4904 = vadd.f32 %v4900, 1e-05
    %v4905 = vadd.f32 %v4901, 1e-05
    %v4906 = vadd.f32 %v4902, 1e-05
    %v4907 = vrsqrt.pop %v4903
    %v4908 = vrsqrt.pop %v4904
    %v4909 = vrsqrt.pop %v4905
    %v4910 = vrsqrt.pop %v4906
    %v4911 = vmul.f32 %v4883, %v4907
    %v4912 = vmul.f32 %v4884, %v4908
    %v4913 = vmul.f32 %v4885, %v4909
    %v4914 = vmul.f32 %v4886, %v4910
    %v4915 = vpack.c.bf16 %v4912, %v4911
    %v4916 = vpack.c.bf16 %v4914, %v4913
    %v4917 = vld [vmem:[%s2919 + $0x10] sm:$0xff]
    %v4918 = vld [vmem:[%s2919 + $0x18] sm:$0xff]
    %v4919 = vld [vmem:[%s2919 + $0x30] sm:$0xff]
    %v4920 = vld [vmem:[%s2919 + $0x38] sm:$0xff]
    %v4921 = vld [vmem:[%s2919 + $0x50] sm:$0xff]
    %v4922 = vld [vmem:[%s2919 + $0x58] sm:$0xff]
    %v4923 = vld [vmem:[%s2919 + $0x70] sm:$0xff]
    %v4924 = vld [vmem:[%s2919 + $0x78] sm:$0xff]
    %v4925 = vld [vmem:[%s2919 + $0x90] sm:$0xff]
    %v4926 = vld [vmem:[%s2919 + $0x98] sm:$0xff]
    %v4927 = vld [vmem:[%s2919 + $0xb0] sm:$0xff]
    %v4928 = vld [vmem:[%s2919 + $0xb8] sm:$0xff]
    %v4929 = vld [vmem:[%s2919 + $0xd0] sm:$0xff]
    %v4930 = vld [vmem:[%s2919 + $0xd8] sm:$0xff]
    %v4931 = vld [vmem:[%s2919 + $0xf0] sm:$0xff]
    %v4932 = vld [vmem:[%s2919 + $0xf8] sm:$0xff]
    %v4933 = vld [vmem:[%s2919 + $0x110] sm:$0xff]
    %v4934 = vld [vmem:[%s2919 + $0x118] sm:$0xff]
    %v4935 = vld [vmem:[%s2919 + $0x130] sm:$0xff]
    %v4936 = vld [vmem:[%s2919 + $0x138] sm:$0xff]
    %v4937 = vld [vmem:[%s2919 + $0x150] sm:$0xff]
    %v4938 = vld [vmem:[%s2919 + $0x158] sm:$0xff]
    %v4939 = vld [vmem:[%s2919 + $0x170] sm:$0xff]
    %v4940 = vld [vmem:[%s2919 + $0x178] sm:$0xff]
    %v4941 = vld [vmem:[%s2919 + $0x190] sm:$0xff]
    %v4942 = vld [vmem:[%s2919 + $0x198] sm:$0xff]
    %v4943 = vld [vmem:[%s2919 + $0x1b0] sm:$0xff]
    %v4944 = vld [vmem:[%s2919 + $0x1b8] sm:$0xff]
    %v4945 = vld [vmem:[%s2919 + $0x1d0] sm:$0xff]
    %v4946 = vld [vmem:[%s2919 + $0x1d8] sm:$0xff]
    %v4947 = vld [vmem:[%s2919 + $0x1f0] sm:$0xff]
    %v4948 = vld [vmem:[%s2919 + $0x1f8] sm:$0xff]
    %v4949 = vld [vmem:[#allocation11 + $0xd] sm:$0xf]
    %v4951 = vlaneseq
    %v4952 = vshrl.u32 %v4951, 7
    %v4953 = vsub.s32 0, %v4952
    %v4954 = vrot.slane %v4949, %v4953
    %v4955 = vlaneseq
    %v4956 = vshrl.u32 %v4955, 7
    %v4957 = vsub.s32 1, %v4956
    %v4958 = vrot.slane %v4949, %v4957
    %v4959 = vlaneseq
    %v4960 = vshrl.u32 %v4959, 7
    %v4961 = vsub.s32 2, %v4960
    %v4962 = vrot.slane %v4949, %v4961
    %v4963 = vlaneseq
    %v4964 = vshrl.u32 %v4963, 7
    %v4965 = vsub.s32 3, %v4964
    %v4966 = vrot.slane %v4949, %v4965
    %v5003 = vunpack.c.l.b16 %v4917
    %v5004 = vunpack.c.h.b16 %v4917
    %v5005 = vunpack.c.l.b16 %v4918
    %v5006 = vunpack.c.h.b16 %v4918
    %v5007 = vunpack.c.l.b16 %v4919
    %v5008 = vunpack.c.h.b16 %v4919
    %v5009 = vunpack.c.l.b16 %v4920
    %v5010 = vunpack.c.h.b16 %v4920
    %v5011 = vunpack.c.l.b16 %v4921
    %v5012 = vunpack.c.h.b16 %v4921
    %v5013 = vunpack.c.l.b16 %v4922
    %v5014 = vunpack.c.h.b16 %v4922
    %v5015 = vunpack.c.l.b16 %v4923
    %v5016 = vunpack.c.h.b16 %v4923
    %v5017 = vunpack.c.l.b16 %v4924
    %v5018 = vunpack.c.h.b16 %v4924
    %v5019 = vunpack.c.l.b16 %v4925
    %v5020 = vunpack.c.h.b16 %v4925
    %v5021 = vunpack.c.l.b16 %v4926
    %v5022 = vunpack.c.h.b16 %v4926
    %v5023 = vunpack.c.l.b16 %v4927
    %v5024 = vunpack.c.h.b16 %v4927
    %v5025 = vunpack.c.l.b16 %v4928
    %v5026 = vunpack.c.h.b16 %v4928
    %v5027 = vunpack.c.l.b16 %v4929
    %v5028 = vunpack.c.h.b16 %v4929
    %v5029 = vunpack.c.l.b16 %v4930
    %v5030 = vunpack.c.h.b16 %v4930
    %v5031 = vunpack.c.l.b16 %v4931
    %v5032 = vunpack.c.h.b16 %v4931
    %v5033 = vunpack.c.l.b16 %v4932
    %v5034 = vunpack.c.h.b16 %v4932
    %v5035 = vunpack.c.l.b16 %v4933
    %v5036 = vunpack.c.h.b16 %v4933
    %v5037 = vunpack.c.l.b16 %v4934
    %v5038 = vunpack.c.h.b16 %v4934
    %v5039 = vunpack.c.l.b16 %v4935
    %v5040 = vunpack.c.h.b16 %v4935
    %v5041 = vunpack.c.l.b16 %v4936
    %v5042 = vunpack.c.h.b16 %v4936
    %v5043 = vunpack.c.l.b16 %v4937
    %v5044 = vunpack.c.h.b16 %v4937
    %v5045 = vunpack.c.l.b16 %v4938
    %v5046 = vunpack.c.h.b16 %v4938
    %v5047 = vunpack.c.l.b16 %v4939
    %v5048 = vunpack.c.h.b16 %v4939
    %v5049 = vunpack.c.l.b16 %v4940
    %v5050 = vunpack.c.h.b16 %v4940
    %v5051 = vunpack.c.l.b16 %v4941
    %v5052 = vunpack.c.h.b16 %v4941
    %v5053 = vunpack.c.l.b16 %v4942
    %v5054 = vunpack.c.h.b16 %v4942
    %v5055 = vunpack.c.l.b16 %v4943
    %v5056 = vunpack.c.h.b16 %v4943
    %v5057 = vunpack.c.l.b16 %v4944
    %v5058 = vunpack.c.h.b16 %v4944
    %v5059 = vunpack.c.l.b16 %v4945
    %v5060 = vunpack.c.h.b16 %v4945
    %v5061 = vunpack.c.l.b16 %v4946
    %v5062 = vunpack.c.h.b16 %v4946
    %v5063 = vunpack.c.l.b16 %v4947
    %v5064 = vunpack.c.h.b16 %v4947
    %v5065 = vunpack.c.l.b16 %v4948
    %v5066 = vunpack.c.h.b16 %v4948
    %v5067 = vpack.c.b16 %v5007, %v5003
    %v5068 = vpack.c.b16 %v5008, %v5004
    %v5069 = vpack.c.b16 %v5009, %v5005
    %v5070 = vpack.c.b16 %v5010, %v5006
    %v5071 = vpack.c.b16 %v5015, %v5011
    %v5072 = vpack.c.b16 %v5016, %v5012
    %v5073 = vpack.c.b16 %v5017, %v5013
    %v5074 = vpack.c.b16 %v5018, %v5014
    %v5075 = vpack.c.b16 %v5023, %v5019
    %v5076 = vpack.c.b16 %v5024, %v5020
    %v5077 = vpack.c.b16 %v5025, %v5021
    %v5078 = vpack.c.b16 %v5026, %v5022
    %v5079 = vpack.c.b16 %v5031, %v5027
    %v5080 = vpack.c.b16 %v5032, %v5028
    %v5081 = vpack.c.b16 %v5033, %v5029
    %v5082 = vpack.c.b16 %v5034, %v5030
    %v5083 = vpack.c.b16 %v5039, %v5035
    %v5084 = vpack.c.b16 %v5040, %v5036
    %v5085 = vpack.c.b16 %v5041, %v5037
    %v5086 = vpack.c.b16 %v5042, %v5038
    %v5087 = vpack.c.b16 %v5047, %v5043
    %v5088 = vpack.c.b16 %v5048, %v5044
    %v5089 = vpack.c.b16 %v5049, %v5045
    %v5090 = vpack.c.b16 %v5050, %v5046
    %v5091 = vpack.c.b16 %v5055, %v5051
    %v5092 = vpack.c.b16 %v5056, %v5052
    %v5093 = vpack.c.b16 %v5057, %v5053
    %v5094 = vpack.c.b16 %v5058, %v5054
    %v5095 = vpack.c.b16 %v5063, %v5059
    %v5096 = vpack.c.b16 %v5064, %v5060
    %v5097 = vpack.c.b16 %v5065, %v5061
    %v5098 = vpack.c.b16 %v5066, %v5062
    %5131 = vmatprep.subr.bf16.mxu0 %v5068
    %5132 = vmatpush1.bf16.msra.mxu0 %v5067
    %5133 = vmatprep.subr.bf16.mxu0 %v5072
    %5134 = vmatpush1.bf16.msra.mxu0 %v5071
    %5135 = vmatprep.subr.bf16.mxu0 %v5076
    %5136 = vmatpush1.bf16.msra.mxu0 %v5075
    %5137 = vmatprep.subr.bf16.mxu0 %v5080
    %5138 = vmatpush1.bf16.msra.mxu0 %v5079
    %5139 = vmatprep.subr.bf16.mxu0 %v5084
    %5140 = vmatpush1.bf16.msra.mxu0 %v5083
    %5141 = vmatprep.subr.bf16.mxu0 %v5088
    %5142 = vmatpush1.bf16.msra.mxu0 %v5087
    %5143 = vmatprep.subr.bf16.mxu0 %v5092
    %5144 = vmatpush1.bf16.msra.mxu0 %v5091
    %5145 = vmatprep.subr.bf16.mxu0 %v5096
    %5146 = vmatpush1.bf16.msra.mxu0 %v5095
    %5147 = vmatprep.subr.bf16.mxu0 0
    %5148 = vmatpush1.bf16.msra.mxu0 0
    %5149 = vmatprep.subr.bf16.mxu0 0
    %5150 = vmatpush1.bf16.msra.mxu0 0
    %5151 = vmatprep.subr.bf16.mxu0 0
    %5152 = vmatpush1.bf16.msra.mxu0 0
    %5153 = vmatprep.subr.bf16.mxu0 0
    %5154 = vmatpush1.bf16.msra.mxu0 0
    %5155 = vmatprep.subr.bf16.mxu0 0
    %5156 = vmatpush1.bf16.msra.mxu0 0
    %5157 = vmatprep.subr.bf16.mxu0 0
    %5158 = vmatpush1.bf16.msra.mxu0 0
    %5159 = vmatprep.subr.bf16.mxu0 0
    %5160 = vmatpush1.bf16.msra.mxu0 0
    %5161 = vmatprep.subr.bf16.mxu0 0
    %5162 = vmatpush1.bf16.msra.mxu0 0
    %5163 = vmatprep.mubr.bf16.mxu0 0
    %5164 = vmatmul.mubr.bf16.gmra.mrb[0].mxu0 %v4915
    %v5165 = vpop.f32.mrb[0].mxu0
    %v5166 = vadd.f32 %v4954, %v5165
    %v5167 = vpop.f32.mrb[0].mxu0
    %v5168 = vadd.f32 %v4958, %v5167
    %v5169 = vpop.f32.mrb[0].mxu0
    %v5170 = vadd.f32 %v4954, %v5169
    %v5171 = vpop.f32.mrb[0].mxu0
    %v5172 = vadd.f32 %v4958, %v5171
    %5173 = vmatprep.mubr.bf16.mxu0 0
    %5174 = vmatmul.mubr.bf16.gmra.mrb[0].mxu0 %v4916
    %v5175 = vpop.f32.mrb[0].mxu0
    %v5176 = vadd.f32 %v4954, %v5175
    %v5177 = vpop.f32.mrb[0].mxu0
    %v5178 = vadd.f32 %v4958, %v5177
    %v5179 = vpop.f32.mrb[0].mxu0
    %v5180 = vadd.f32 %v4954, %v5179
    %v5181 = vpop.f32.mrb[0].mxu0
    %v5182 = vadd.f32 %v4958, %v5181
    %5183 = vdwg.mxu0
    %5184 = vmatprep.subr.bf16.mxu0 %v5070
    %5185 = vmatpush1.bf16.msra.mxu0 %v5069
    %5186 = vmatprep.subr.bf16.mxu0 %v5074
    %5187 = vmatpush1.bf16.msra.mxu0 %v5073
    %5188 = vmatprep.subr.bf16.mxu0 %v5078
    %5189 = vmatpush1.bf16.msra.mxu0 %v5077
    %5190 = vmatprep.subr.bf16.mxu0 %v5082
    %5191 = vmatpush1.bf16.msra.mxu0 %v5081
    %5192 = vmatprep.subr.bf16.mxu0 %v5086
    %5193 = vmatpush1.bf16.msra.mxu0 %v5085
    %5194 = vmatprep.subr.bf16.mxu0 %v5090
    %5195 = vmatpush1.bf16.msra.mxu0 %v5089
    %5196 = vmatprep.subr.bf16.mxu0 %v5094
    %5197 = vmatpush1.bf16.msra.mxu0 %v5093
    %5198 = vmatprep.subr.bf16.mxu0 %v5098
    %5199 = vmatpush1.bf16.msra.mxu0 %v5097
    %5200 = vmatprep.subr.bf16.mxu0 0
    %5201 = vmatpush1.bf16.msra.mxu0 0
    %5202 = vmatprep.subr.bf16.mxu0 0
    %5203 = vmatpush1.bf16.msra.mxu0 0
    %5204 = vmatprep.subr.bf16.mxu0 0
    %5205 = vmatpush1.bf16.msra.mxu0 0
    %5206 = vmatprep.subr.bf16.mxu0 0
    %5207 = vmatpush1.bf16.msra.mxu0 0
    %5208 = vmatprep.subr.bf16.mxu0 0
    %5209 = vmatpush1.bf16.msra.mxu0 0
    %5210 = vmatprep.subr.bf16.mxu0 0
    %5211 = vmatpush1.bf16.msra.mxu0 0
    %5212 = vmatprep.subr.bf16.mxu0 0
    %5213 = vmatpush1.bf16.msra.mxu0 0
    %5214 = vmatprep.subr.bf16.mxu0 0
    %5215 = vmatpush1.bf16.msra.mxu0 0
    %5216 = vmatprep.mubr.bf16.mxu0 0
    %5217 = vmatmul.mubr.bf16.gmra.mrb[0].mxu0 %v4915
    %v5218 = vpop.f32.mrb[0].mxu0
    %v5219 = vadd.f32 %v4962, %v5218
    %v5220 = vpop.f32.mrb[0].mxu0
    %v5221 = vadd.f32 %v4966, %v5220
    %v5222 = vpop.f32.mrb[0].mxu0
    %v5223 = vadd.f32 %v4962, %v5222
    %v5224 = vpop.f32.mrb[0].mxu0
    %v5225 = vadd.f32 %v4966, %v5224
    %5226 = vmatprep.mubr.bf16.mxu0 0
    %5227 = vmatmul.mubr.bf16.gmra.mrb[0].mxu0 %v4916
    %v5228 = vpop.f32.mrb[0].mxu0
    %v5229 = vadd.f32 %v4962, %v5228
    %v5230 = vpop.f32.mrb[0].mxu0
    %v5231 = vadd.f32 %v4966, %v5230
    %v5232 = vpop.f32.mrb[0].mxu0
    %v5233 = vadd.f32 %v4962, %v5232
    %v5234 = vpop.f32.mrb[0].mxu0
    %v5235 = vadd.f32 %v4966, %v5234
    %5236 = vdwg.mxu0
    %v5237 = vmax.f32 %v5166, 0.0
    %v5238 = vmax.f32 %v5168, 0.0
    %v5239 = vmax.f32 %v5219, 0.0
    %v5240 = vmax.f32 %v5221, 0.0
    %v5241 = vmax.f32 %v5170, 0.0
    %v5242 = vmax.f32 %v5172, 0.0
    %v5243 = vmax.f32 %v5223, 0.0
    %v5244 = vmax.f32 %v5225, 0.0
    %v5245 = vmax.f32 %v5176, 0.0
    %v5246 = vmax.f32 %v5178, 0.0
    %v5247 = vmax.f32 %v5229, 0.0
    %v5248 = vmax.f32 %v5231, 0.0
    %v5249 = vmax.f32 %v5180, 0.0
    %v5250 = vmax.f32 %v5182, 0.0
    %v5251 = vmax.f32 %v5233, 0.0
    %v5252 = vmax.f32 %v5235, 0.0
    %v5253 = vpack.c.bf16 %v5241, %v5237
    %v5254 = vpack.c.bf16 %v5242, %v5238
    %v5255 = vpack.c.bf16 %v5243, %v5239
    %v5256 = vpack.c.bf16 %v5244, %v5240
    %v5257 = vpack.c.bf16 %v5249, %v5245
    %v5258 = vpack.c.bf16 %v5250, %v5246
    %v5259 = vpack.c.bf16 %v5251, %v5247
    %v5260 = vpack.c.bf16 %v5252, %v5248
    %s5261 = scalar_lea.vmem [#allocation8], 256
    %v5262 = vld [vmem:[%s5261] sm:$0xf]
    %v5263 = vld [vmem:[%s5261 + $0x4] sm:$0xf]
    %v5264 = vld [vmem:[%s5261 + $0x8] sm:$0xf]
    %v5265 = vld [vmem:[%s5261 + $0xc] sm:$0xf]
    %v5266 = vld [vmem:[%s5261 + $0x10] sm:$0xf]
    %v5267 = vld [vmem:[%s5261 + $0x14] sm:$0xf]
    %v5268 = vld [vmem:[%s5261 + $0x18] sm:$0xf]
    %v5269 = vld [vmem:[%s5261 + $0x1c] sm:$0xf]
    %v5270 = vld [vmem:[%s5261 + $0x20] sm:$0xf]
    %v5271 = vld [vmem:[%s5261 + $0x24] sm:$0xf]
    %v5272 = vld [vmem:[%s5261 + $0x28] sm:$0xf]
    %v5273 = vld [vmem:[%s5261 + $0x2c] sm:$0xf]
    %v5274 = vld [vmem:[%s5261 + $0x30] sm:$0xf]
    %v5275 = vld [vmem:[%s5261 + $0x34] sm:$0xf]
    %v5276 = vld [vmem:[%s5261 + $0x38] sm:$0xf]
    %v5277 = vld [vmem:[%s5261 + $0x3c] sm:$0xf]
    %v5278 = vld [vmem:[%s5261 + $0x40] sm:$0xf]
    %v5279 = vld [vmem:[%s5261 + $0x44] sm:$0xf]
    %v5280 = vld [vmem:[%s5261 + $0x48] sm:$0xf]
    %v5281 = vld [vmem:[%s5261 + $0x4c] sm:$0xf]
    %v5282 = vld [vmem:[%s5261 + $0x50] sm:$0xf]
    %v5283 = vld [vmem:[%s5261 + $0x54] sm:$0xf]
    %v5284 = vld [vmem:[%s5261 + $0x58] sm:$0xf]
    %v5285 = vld [vmem:[%s5261 + $0x5c] sm:$0xf]
    %v5286 = vld [vmem:[%s5261 + $0x60] sm:$0xf]
    %v5287 = vld [vmem:[%s5261 + $0x64] sm:$0xf]
    %v5288 = vld [vmem:[%s5261 + $0x68] sm:$0xf]
    %v5289 = vld [vmem:[%s5261 + $0x6c] sm:$0xf]
    %v5290 = vld [vmem:[%s5261 + $0x70] sm:$0xf]
    %v5291 = vld [vmem:[%s5261 + $0x74] sm:$0xf]
    %v5292 = vld [vmem:[%s5261 + $0x78] sm:$0xf]
    %v5293 = vld [vmem:[%s5261 + $0x7c] sm:$0xf]
    %v5294 = vld [vmem:[%s5261 + $0x80] sm:$0xf]
    %v5295 = vld [vmem:[%s5261 + $0x84] sm:$0xf]
    %v5296 = vld [vmem:[%s5261 + $0x88] sm:$0xf]
    %v5297 = vld [vmem:[%s5261 + $0x8c] sm:$0xf]
    %v5298 = vld [vmem:[%s5261 + $0x90] sm:$0xf]
    %v5299 = vld [vmem:[%s5261 + $0x94] sm:$0xf]
    %v5300 = vld [vmem:[%s5261 + $0x98] sm:$0xf]
    %v5301 = vld [vmem:[%s5261 + $0x9c] sm:$0xf]
    %v5302 = vld [vmem:[%s5261 + $0xa0] sm:$0xf]
    %v5303 = vld [vmem:[%s5261 + $0xa4] sm:$0xf]
    %v5304 = vld [vmem:[%s5261 + $0xa8] sm:$0xf]
    %v5305 = vld [vmem:[%s5261 + $0xac] sm:$0xf]
    %v5306 = vld [vmem:[%s5261 + $0xb0] sm:$0xf]
    %v5307 = vld [vmem:[%s5261 + $0xb4] sm:$0xf]
    %v5308 = vld [vmem:[%s5261 + $0xb8] sm:$0xf]
    %v5309 = vld [vmem:[%s5261 + $0xbc] sm:$0xf]
    %v5310 = vld [vmem:[%s5261 + $0xc0] sm:$0xf]
    %v5311 = vld [vmem:[%s5261 + $0xc4] sm:$0xf]
    %v5312 = vld [vmem:[%s5261 + $0xc8] sm:$0xf]
    %v5313 = vld [vmem:[%s5261 + $0xcc] sm:$0xf]
    %v5314 = vld [vmem:[%s5261 + $0xd0] sm:$0xf]
    %v5315 = vld [vmem:[%s5261 + $0xd4] sm:$0xf]
    %v5316 = vld [vmem:[%s5261 + $0xd8] sm:$0xf]
    %v5317 = vld [vmem:[%s5261 + $0xdc] sm:$0xf]
    %v5318 = vld [vmem:[%s5261 + $0xe0] sm:$0xf]
    %v5319 = vld [vmem:[%s5261 + $0xe4] sm:$0xf]
    %v5320 = vld [vmem:[%s5261 + $0xe8] sm:$0xf]
    %v5321 = vld [vmem:[%s5261 + $0xec] sm:$0xf]
    %v5322 = vld [vmem:[%s5261 + $0xf0] sm:$0xf]
    %v5323 = vld [vmem:[%s5261 + $0xf4] sm:$0xf]
    %v5324 = vld [vmem:[%s5261 + $0xf8] sm:$0xf]
    %v5325 = vld [vmem:[%s5261 + $0xfc] sm:$0xf]
    %v5326 = vld [vmem:[#allocation11 + $0x11] sm:$0x1]
    %v5328 = vlaneseq
    %v5329 = vshrl.u32 %v5328, 7
    %v5330 = vsub.s32 0, %v5329
    %v5331 = vrot.slane %v5326, %v5330
    %v5397 = vunpack.c.l.b16 %v5262
    %v5398 = vunpack.c.l.b16 %v5263
    %v5399 = vunpack.c.l.b16 %v5264
    %v5400 = vunpack.c.l.b16 %v5265
    %v5401 = vunpack.c.l.b16 %v5266
    %v5402 = vunpack.c.l.b16 %v5267
    %v5403 = vunpack.c.l.b16 %v5268
    %v5404 = vunpack.c.l.b16 %v5269
    %v5405 = vunpack.c.l.b16 %v5270
    %v5406 = vunpack.c.l.b16 %v5271
    %v5407 = vunpack.c.l.b16 %v5272
    %v5408 = vunpack.c.l.b16 %v5273
    %v5409 = vunpack.c.l.b16 %v5274
    %v5410 = vunpack.c.l.b16 %v5275
    %v5411 = vunpack.c.l.b16 %v5276
    %v5412 = vunpack.c.l.b16 %v5277
    %v5413 = vunpack.c.l.b16 %v5278
    %v5414 = vunpack.c.l.b16 %v5279
    %v5415 = vunpack.c.l.b16 %v5280
    %v5416 = vunpack.c.l.b16 %v5281
    %v5417 = vunpack.c.l.b16 %v5282
    %v5418 = vunpack.c.l.b16 %v5283
    %v5419 = vunpack.c.l.b16 %v5284
    %v5420 = vunpack.c.l.b16 %v5285
    %v5421 = vunpack.c.l.b16 %v5286
    %v5422 = vunpack.c.l.b16 %v5287
    %v5423 = vunpack.c.l.b16 %v5288
    %v5424 = vunpack.c.l.b16 %v5289
    %v5425 = vunpack.c.l.b16 %v5290
    %v5426 = vunpack.c.l.b16 %v5291
    %v5427 = vunpack.c.l.b16 %v5292
    %v5428 = vunpack.c.l.b16 %v5293
    %v5429 = vunpack.c.l.b16 %v5294
    %v5430 = vunpack.c.l.b16 %v5295
    %v5431 = vunpack.c.l.b16 %v5296
    %v5432 = vunpack.c.l.b16 %v5297
    %v5433 = vunpack.c.l.b16 %v5298
    %v5434 = vunpack.c.l.b16 %v5299
    %v5435 = vunpack.c.l.b16 %v5300
    %v5436 = vunpack.c.l.b16 %v5301
    %v5437 = vunpack.c.l.b16 %v5302
    %v5438 = vunpack.c.l.b16 %v5303
    %v5439 = vunpack.c.l.b16 %v5304
    %v5440 = vunpack.c.l.b16 %v5305
    %v5441 = vunpack.c.l.b16 %v5306
    %v5442 = vunpack.c.l.b16 %v5307
    %v5443 = vunpack.c.l.b16 %v5308
    %v5444 = vunpack.c.l.b16 %v5309
    %v5445 = vunpack.c.l.b16 %v5310
    %v5446 = vunpack.c.l.b16 %v5311
    %v5447 = vunpack.c.l.b16 %v5312
    %v5448 = vunpack.c.l.b16 %v5313
    %v5449 = vunpack.c.l.b16 %v5314
    %v5450 = vunpack.c.l.b16 %v5315
    %v5451 = vunpack.c.l.b16 %v5316
    %v5452 = vunpack.c.l.b16 %v5317
    %v5453 = vunpack.c.l.b16 %v5318
    %v5454 = vunpack.c.l.b16 %v5319
    %v5455 = vunpack.c.l.b16 %v5320
    %v5456 = vunpack.c.l.b16 %v5321
    %v5457 = vunpack.c.l.b16 %v5322
    %v5458 = vunpack.c.l.b16 %v5323
    %v5459 = vunpack.c.l.b16 %v5324
    %v5460 = vunpack.c.l.b16 %v5325
    %v5461 = vpack.c.b16 %v5398, %v5397
    %v5462 = vpack.c.b16 %v5400, %v5399
    %v5463 = vpack.c.b16 %v5402, %v5401
    %v5464 = vpack.c.b16 %v5404, %v5403
    %v5465 = vpack.c.b16 %v5406, %v5405
    %v5466 = vpack.c.b16 %v5408, %v5407
    %v5467 = vpack.c.b16 %v5410, %v5409
    %v5468 = vpack.c.b16 %v5412, %v5411
    %v5469 = vpack.c.b16 %v5414, %v5413
    %v5470 = vpack.c.b16 %v5416, %v5415
    %v5471 = vpack.c.b16 %v5418, %v5417
    %v5472 = vpack.c.b16 %v5420, %v5419
    %v5473 = vpack.c.b16 %v5422, %v5421
    %v5474 = vpack.c.b16 %v5424, %v5423
    %v5475 = vpack.c.b16 %v5426, %v5425
    %v5476 = vpack.c.b16 %v5428, %v5427
    %v5477 = vpack.c.b16 %v5430, %v5429
    %v5478 = vpack.c.b16 %v5432, %v5431
    %v5479 = vpack.c.b16 %v5434, %v5433
    %v5480 = vpack.c.b16 %v5436, %v5435
    %v5481 = vpack.c.b16 %v5438, %v5437
    %v5482 = vpack.c.b16 %v5440, %v5439
    %v5483 = vpack.c.b16 %v5442, %v5441
    %v5484 = vpack.c.b16 %v5444, %v5443
    %v5485 = vpack.c.b16 %v5446, %v5445
    %v5486 = vpack.c.b16 %v5448, %v5447
    %v5487 = vpack.c.b16 %v5450, %v5449
    %v5488 = vpack.c.b16 %v5452, %v5451
    %v5489 = vpack.c.b16 %v5454, %v5453
    %v5490 = vpack.c.b16 %v5456, %v5455
    %v5491 = vpack.c.b16 %v5458, %v5457
    %v5492 = vpack.c.b16 %v5460, %v5459
    %5525 = vmatprep.subr.bf16.mxu0 0
    %5526 = vmatpush1.bf16.msra.mxu0 %v5461
    %5527 = vmatprep.subr.bf16.mxu0 0
    %5528 = vmatpush1.bf16.msra.mxu0 %v5462
    %5529 = vmatprep.subr.bf16.mxu0 0
    %5530 = vmatpush1.bf16.msra.mxu0 %v5463
    %5531 = vmatprep.subr.bf16.mxu0 0
    %5532 = vmatpush1.bf16.msra.mxu0 %v5464
    %5533 = vmatprep.subr.bf16.mxu0 0
    %5534 = vmatpush1.bf16.msra.mxu0 %v5465
    %5535 = vmatprep.subr.bf16.mxu0 0
    %5536 = vmatpush1.bf16.msra.mxu0 %v5466
    %5537 = vmatprep.subr.bf16.mxu0 0
    %5538 = vmatpush1.bf16.msra.mxu0 %v5467
    %5539 = vmatprep.subr.bf16.mxu0 0
    %5540 = vmatpush1.bf16.msra.mxu0 %v5468
    %5541 = vmatprep.subr.bf16.mxu0 0
    %5542 = vmatpush1.bf16.msra.mxu0 %v5469
    %5543 = vmatprep.subr.bf16.mxu0 0
    %5544 = vmatpush1.bf16.msra.mxu0 %v5470
    %5545 = vmatprep.subr.bf16.mxu0 0
    %5546 = vmatpush1.bf16.msra.mxu0 %v5471
    %5547 = vmatprep.subr.bf16.mxu0 0
    %5548 = vmatpush1.bf16.msra.mxu0 %v5472
    %5549 = vmatprep.subr.bf16.mxu0 0
    %5550 = vmatpush1.bf16.msra.mxu0 %v5473
    %5551 = vmatprep.subr.bf16.mxu0 0
    %5552 = vmatpush1.bf16.msra.mxu0 %v5474
    %5553 = vmatprep.subr.bf16.mxu0 0
    %5554 = vmatpush1.bf16.msra.mxu0 %v5475
    %5555 = vmatprep.subr.bf16.mxu0 0
    %5556 = vmatpush1.bf16.msra.mxu0 %v5476
    %5557 = vmatprep.mubr.bf16.mxu0 %v5254
    %5558 = vmatmul.mubr.bf16.gmra.mrb[0].mxu0 %v5253
    %v5559 = vpop.f32.mrb[0].mxu0
    %v5560 = vadd.f32 %v5331, %v5559
    %v5561 = vpop.f32.mrb[0].mxu0
    %v5562 = vpop.f32.mrb[0].mxu0
    %v5563 = vadd.f32 %v5331, %v5562
    %v5564 = vpop.f32.mrb[0].mxu0
    %5565 = vmatprep.mubr.bf16.mxu0 %v5258
    %5566 = vmatmul.mubr.bf16.gmra.mrb[0].mxu0 %v5257
    %v5567 = vpop.f32.mrb[0].mxu0
    %v5568 = vadd.f32 %v5331, %v5567
    %v5569 = vpop.f32.mrb[0].mxu0
    %v5570 = vpop.f32.mrb[0].mxu0
    %v5571 = vadd.f32 %v5331, %v5570
    %v5572 = vpop.f32.mrb[0].mxu0
    %5573 = vdwg.mxu0
    %5574 = vmatprep.subr.bf16.mxu0 0
    %5575 = vmatpush1.bf16.msra.mxu0 %v5477
    %5576 = vmatprep.subr.bf16.mxu0 0
    %5577 = vmatpush1.bf16.msra.mxu0 %v5478
    %5578 = vmatprep.subr.bf16.mxu0 0
    %5579 = vmatpush1.bf16.msra.mxu0 %v5479
    %5580 = vmatprep.subr.bf16.mxu0 0
    %5581 = vmatpush1.bf16.msra.mxu0 %v5480
    %5582 = vmatprep.subr.bf16.mxu0 0
    %5583 = vmatpush1.bf16.msra.mxu0 %v5481
    %5584 = vmatprep.subr.bf16.mxu0 0
    %5585 = vmatpush1.bf16.msra.mxu0 %v5482
    %5586 = vmatprep.subr.bf16.mxu0 0
    %5587 = vmatpush1.bf16.msra.mxu0 %v5483
    %5588 = vmatprep.subr.bf16.mxu0 0
    %5589 = vmatpush1.bf16.msra.mxu0 %v5484
    %5590 = vmatprep.subr.bf16.mxu0 0
    %5591 = vmatpush1.bf16.msra.mxu0 %v5485
    %5592 = vmatprep.subr.bf16.mxu0 0
    %5593 = vmatpush1.bf16.msra.mxu0 %v5486
    %5594 = vmatprep.subr.bf16.mxu0 0
    %5595 = vmatpush1.bf16.msra.mxu0 %v5487
    %5596 = vmatprep.subr.bf16.mxu0 0
    %5597 = vmatpush1.bf16.msra.mxu0 %v5488
    %5598 = vmatprep.subr.bf16.mxu0 0
    %5599 = vmatpush1.bf16.msra.mxu0 %v5489
    %5600 = vmatprep.subr.bf16.mxu0 0
    %5601 = vmatpush1.bf16.msra.mxu0 %v5490
    %5602 = vmatprep.subr.bf16.mxu0 0
    %5603 = vmatpush1.bf16.msra.mxu0 %v5491
    %5604 = vmatprep.subr.bf16.mxu0 0
    %5605 = vmatpush1.bf16.msra.mxu0 %v5492
    %5606 = vmatprep.mubr.bf16.mxu0 %v5256
    %5607 = vmatmul.mubr.bf16.gmra.mrb[0].mxu0 %v5255
    %v5608 = vpop.f32.mrb[0].mxu0
    %v5609 = vadd.f32 %v5560, %v5608
    %v5610 = vpop.f32.mrb[0].mxu0
    %v5611 = vpop.f32.mrb[0].mxu0
    %v5612 = vadd.f32 %v5563, %v5611
    %v5613 = vpop.f32.mrb[0].mxu0
    %5614 = vmatprep.mubr.bf16.mxu0 %v5260
    %5615 = vmatmul.mubr.bf16.gmra.mrb[0].mxu0 %v5259
    %v5616 = vpop.f32.mrb[0].mxu0
    %v5617 = vadd.f32 %v5568, %v5616
    %v5618 = vpop.f32.mrb[0].mxu0
    %v5619 = vpop.f32.mrb[0].mxu0
    %v5620 = vadd.f32 %v5571, %v5619
    %v5621 = vpop.f32.mrb[0].mxu0
    %5622 = vdwg.mxu0
    %v5623 = vadd.f32 %v4867, %v5609
    %v5624 = vadd.f32 %v4868, %v5612
    %v5625 = vadd.f32 %v4869, %v5617
    %v5626 = vadd.f32 %v4870, %v5620
    %v5627 = vpack.c.bf16 %v5624, %v5623
    %v5628 = vpack.c.bf16 %v5626, %v5625
    %v5629 = vld [vmem:[#allocation10] sm:$0xf]
    %v5630 = vld [vmem:[#allocation10 + $0x8] sm:$0xf]
    %v5631 = vld [vmem:[#allocation10 + $0x10] sm:$0xf]
    %v5632 = vld [vmem:[#allocation10 + $0x18] sm:$0xf]
    %v5633 = vld [vmem:[#allocation10 + $0x20] sm:$0xf]
    %v5634 = vld [vmem:[#allocation10 + $0x28] sm:$0xf]
    %v5635 = vld [vmem:[#allocation10 + $0x30] sm:$0xf]
    %v5636 = vld [vmem:[#allocation10 + $0x38] sm:$0xf]
    %v5637 = vld [vmem:[#allocation10 + $0x40] sm:$0xf]
    %v5638 = vld [vmem:[#allocation10 + $0x48] sm:$0xf]
    %v5639 = vld [vmem:[#allocation10 + $0x50] sm:$0xf]
    %v5640 = vld [vmem:[#allocation10 + $0x58] sm:$0xf]
    %v5641 = vld [vmem:[#allocation10 + $0x60] sm:$0xf]
    %v5642 = vld [vmem:[#allocation10 + $0x68] sm:$0xf]
    %v5643 = vld [vmem:[#allocation10 + $0x70] sm:$0xf]
    %v5644 = vld [vmem:[#allocation10 + $0x78] sm:$0xf]
    %v5645 = vld [vmem:[#allocation11 + $0x12] sm:$0x1]
    %v5647 = vlaneseq
    %v5648 = vshrl.u32 %v5647, 7
    %v5649 = vsub.s32 0, %v5648
    %v5650 = vrot.slane %v5645, %v5649
    %v5668 = vunpack.c.l.b16 %v5629
    %v5669 = vunpack.c.l.b16 %v5630
    %v5670 = vunpack.c.l.b16 %v5631
    %v5671 = vunpack.c.l.b16 %v5632
    %v5672 = vunpack.c.l.b16 %v5633
    %v5673 = vunpack.c.l.b16 %v5634
    %v5674 = vunpack.c.l.b16 %v5635
    %v5675 = vunpack.c.l.b16 %v5636
    %v5676 = vunpack.c.l.b16 %v5637
    %v5677 = vunpack.c.l.b16 %v5638
    %v5678 = vunpack.c.l.b16 %v5639
    %v5679 = vunpack.c.l.b16 %v5640
    %v5680 = vunpack.c.l.b16 %v5641
    %v5681 = vunpack.c.l.b16 %v5642
    %v5682 = vunpack.c.l.b16 %v5643
    %v5683 = vunpack.c.l.b16 %v5644
    %v5684 = vpack.c.b16 %v5669, %v5668
    %v5685 = vpack.c.b16 %v5671, %v5670
    %v5686 = vpack.c.b16 %v5673, %v5672
    %v5687 = vpack.c.b16 %v5675, %v5674
    %v5688 = vpack.c.b16 %v5677, %v5676
    %v5689 = vpack.c.b16 %v5679, %v5678
    %v5690 = vpack.c.b16 %v5681, %v5680
    %v5691 = vpack.c.b16 %v5683, %v5682
    %5700 = vmatprep.subr.bf16.mxu0 0
    %5701 = vmatpush1.bf16.msra.mxu0 %v5684
    %5702 = vmatprep.subr.bf16.mxu0 0
    %5703 = vmatpush1.bf16.msra.mxu0 %v5685
    %5704 = vmatprep.subr.bf16.mxu0 0
    %5705 = vmatpush1.bf16.msra.mxu0 %v5686
    %5706 = vmatprep.subr.bf16.mxu0 0
    %5707 = vmatpush1.bf16.msra.mxu0 %v5687
    %5708 = vmatprep.subr.bf16.mxu0 0
    %5709 = vmatpush1.bf16.msra.mxu0 %v5688
    %5710 = vmatprep.subr.bf16.mxu0 0
    %5711 = vmatpush1.bf16.msra.mxu0 %v5689
    %5712 = vmatprep.subr.bf16.mxu0 0
    %5713 = vmatpush1.bf16.msra.mxu0 %v5690
    %5714 = vmatprep.subr.bf16.mxu0 0
    %5715 = vmatpush1.bf16.msra.mxu0 %v5691
    %5716 = vmatprep.subr.bf16.mxu0 0
    %5717 = vmatpush1.bf16.msra.mxu0 0
    %5718 = vmatprep.subr.bf16.mxu0 0
    %5719 = vmatpush1.bf16.msra.mxu0 0
    %5720 = vmatprep.subr.bf16.mxu0 0
    %5721 = vmatpush1.bf16.msra.mxu0 0
    %5722 = vmatprep.subr.bf16.mxu0 0
    %5723 = vmatpush1.bf16.msra.mxu0 0
    %5724 = vmatprep.subr.bf16.mxu0 0
    %5725 = vmatpush1.bf16.msra.mxu0 0
    %5726 = vmatprep.subr.bf16.mxu0 0
    %5727 = vmatpush1.bf16.msra.mxu0 0
    %5728 = vmatprep.subr.bf16.mxu0 0
    %5729 = vmatpush1.bf16.msra.mxu0 0
    %5730 = vmatprep.subr.bf16.mxu0 0
    %5731 = vmatpush1.bf16.msra.mxu0 0
    %5732 = vmatprep.mubr.bf16.mxu0 0
    %5733 = vmatmul.mubr.bf16.gmra.mrb[0].mxu0 %v5627
    %v5734 = vpop.f32.mrb[0].mxu0
    %v5735 = vadd.f32 %v5650, %v5734
    %v5736 = vpop.f32.mrb[0].mxu0
    %v5737 = vpop.f32.mrb[0].mxu0
    %v5738 = vadd.f32 %v5650, %v5737
    %v5739 = vpop.f32.mrb[0].mxu0
    %5740 = vmatprep.mubr.bf16.mxu0 0
    %5741 = vmatmul.mubr.bf16.gmra.mrb[0].mxu0 %v5628
    %v5742 = vpop.f32.mrb[0].mxu0
    %v5743 = vadd.f32 %v5650, %v5742
    %v5744 = vpop.f32.mrb[0].mxu0
    %v5745 = vpop.f32.mrb[0].mxu0
    %v5746 = vadd.f32 %v5650, %v5745
    %v5747 = vpop.f32.mrb[0].mxu0
    %5748 = vdwg.mxu0
    %v5749 = vmul.f32 %v5735, %v5735
    %v5750 = vmul.f32 %v5738, %v5738
    %v5751 = vmul.f32 %v5743, %v5743
    %v5752 = vmul.f32 %v5746, %v5746
    %v5753 = vmul.f32 %v5735, %v5749
    %v5754 = vmul.f32 %v5738, %v5750
    %v5755 = vmul.f32 %v5743, %v5751
    %v5756 = vmul.f32 %v5746, %v5752
    %v5757 = vmul.f32 %v5753, 0.044715
    %v5758 = vmul.f32 %v5754, 0.044715
    %v5759 = vmul.f32 %v5755, 0.044715
    %v5760 = vmul.f32 %v5756, 0.044715
    %v5761 = vadd.f32 %v5735, %v5757
    %v5762 = vadd.f32 %v5738, %v5758
    %v5763 = vadd.f32 %v5743, %v5759
    %v5764 = vadd.f32 %v5746, %v5760
    %v5765 = vmul.f32 %v5761, 0.7978846
    %v5766 = vmul.f32 %v5762, 0.7978846
    %v5767 = vmul.f32 %v5763, 0.7978846
    %v5768 = vmul.f32 %v5764, 0.7978846
    %v5769 = vtanh.pop %v5765
    %v5770 = vtanh.pop %v5766
    %v5771 = vtanh.pop %v5767
    %v5772 = vtanh.pop %v5768
    %v5773 = vadd.f32 %v5769, 1.0
    %v5774 = vadd.f32 %v5770, 1.0
    %v5775 = vadd.f32 %v5771, 1.0
    %v5776 = vadd.f32 %v5772, 1.0
    %v5777 = vmul.f32 %v5773, 0.5
    %v5778 = vmul.f32 %v5774, 0.5
    %v5779 = vmul.f32 %v5775, 0.5
    %v5780 = vmul.f32 %v5776, 0.5
    %v5781 = vmul.f32 %v5735, %v5777
    %v5782 = vmul.f32 %v5738, %v5778
    %v5783 = vmul.f32 %v5743, %v5779
    %v5784 = vmul.f32 %v5746, %v5780
    %v5785 = vpack.c.bf16 %v5782, %v5781
    %v5786 = vpack.c.bf16 %v5784, %v5783
    %v5787 = vld [vmem:[#allocation10 + $0x4] sm:$0xf]
    %v5788 = vld [vmem:[#allocation10 + $0xc] sm:$0xf]
    %v5789 = vld [vmem:[#allocation10 + $0x14] sm:$0xf]
    %v5790 = vld [vmem:[#allocation10 + $0x1c] sm:$0xf]
    %v5791 = vld [vmem:[#allocation10 + $0x24] sm:$0xf]
    %v5792 = vld [vmem:[#allocation10 + $0x2c] sm:$0xf]
    %v5793 = vld [vmem:[#allocation10 + $0x34] sm:$0xf]
    %v5794 = vld [vmem:[#allocation10 + $0x3c] sm:$0xf]
    %v5795 = vld [vmem:[#allocation10 + $0x44] sm:$0xf]
    %v5796 = vld [vmem:[#allocation10 + $0x4c] sm:$0xf]
    %v5797 = vld [vmem:[#allocation10 + $0x54] sm:$0xf]
    %v5798 = vld [vmem:[#allocation10 + $0x5c] sm:$0xf]
    %v5799 = vld [vmem:[#allocation10 + $0x64] sm:$0xf]
    %v5800 = vld [vmem:[#allocation10 + $0x6c] sm:$0xf]
    %v5801 = vld [vmem:[#allocation10 + $0x74] sm:$0xf]
    %v5802 = vld [vmem:[#allocation10 + $0x7c] sm:$0xf]
    %v5803 = vld [vmem:[#allocation11 + $0x13] sm:$0x1]
    %v5805 = vlaneseq
    %v5806 = vshrl.u32 %v5805, 7
    %v5807 = vsub.s32 0, %v5806
    %v5808 = vrot.slane %v5803, %v5807
    %v5826 = vunpack.c.l.b16 %v5787
    %v5827 = vunpack.c.l.b16 %v5788
    %v5828 = vunpack.c.l.b16 %v5789
    %v5829 = vunpack.c.l.b16 %v5790
    %v5830 = vunpack.c.l.b16 %v5791
    %v5831 = vunpack.c.l.b16 %v5792
    %v5832 = vunpack.c.l.b16 %v5793
    %v5833 = vunpack.c.l.b16 %v5794
    %v5834 = vunpack.c.l.b16 %v5795
    %v5835 = vunpack.c.l.b16 %v5796
    %v5836 = vunpack.c.l.b16 %v5797
    %v5837 = vunpack.c.l.b16 %v5798
    %v5838 = vunpack.c.l.b16 %v5799
    %v5839 = vunpack.c.l.b16 %v5800
    %v5840 = vunpack.c.l.b16 %v5801
    %v5841 = vunpack.c.l.b16 %v5802
    %v5842 = vpack.c.b16 %v5827, %v5826
    %v5843 = vpack.c.b16 %v5829, %v5828
    %v5844 = vpack.c.b16 %v5831, %v5830
    %v5845 = vpack.c.b16 %v5833, %v5832
    %v5846 = vpack.c.b16 %v5835, %v5834
    %v5847 = vpack.c.b16 %v5837, %v5836
    %v5848 = vpack.c.b16 %v5839, %v5838
    %v5849 = vpack.c.b16 %v5841, %v5840
    %5858 = vmatprep.subr.bf16.mxu0 0
    %5859 = vmatpush1.bf16.msra.mxu0 %v5842
    %5860 = vmatprep.subr.bf16.mxu0 0
    %5861 = vmatpush1.bf16.msra.mxu0 %v5843
    %5862 = vmatprep.subr.bf16.mxu0 0
    %5863 = vmatpush1.bf16.msra.mxu0 %v5844
    %5864 = vmatprep.subr.bf16.mxu0 0
    %5865 = vmatpush1.bf16.msra.mxu0 %v5845
    %5866 = vmatprep.subr.bf16.mxu0 0
    %5867 = vmatpush1.bf16.msra.mxu0 %v5846
    %5868 = vmatprep.subr.bf16.mxu0 0
    %5869 = vmatpush1.bf16.msra.mxu0 %v5847
    %5870 = vmatprep.subr.bf16.mxu0 0
    %5871 = vmatpush1.bf16.msra.mxu0 %v5848
    %5872 = vmatprep.subr.bf16.mxu0 0
    %5873 = vmatpush1.bf16.msra.mxu0 %v5849
    %5874 = vmatprep.subr.bf16.mxu0 0
    %5875 = vmatpush1.bf16.msra.mxu0 0
    %5876 = vmatprep.subr.bf16.mxu0 0
    %5877 = vmatpush1.bf16.msra.mxu0 0
    %5878 = vmatprep.subr.bf16.mxu0 0
    %5879 = vmatpush1.bf16.msra.mxu0 0
    %5880 = vmatprep.subr.bf16.mxu0 0
    %5881 = vmatpush1.bf16.msra.mxu0 0
    %5882 = vmatprep.subr.bf16.mxu0 0
    %5883 = vmatpush1.bf16.msra.mxu0 0
    %5884 = vmatprep.subr.bf16.mxu0 0
    %5885 = vmatpush1.bf16.msra.mxu0 0
    %5886 = vmatprep.subr.bf16.mxu0 0
    %5887 = vmatpush1.bf16.msra.mxu0 0
    %5888 = vmatprep.subr.bf16.mxu0 0
    %5889 = vmatpush1.bf16.msra.mxu0 0
    %5890 = vmatprep.mubr.bf16.mxu0 0
    %5891 = vmatmul.mubr.bf16.gmra.mrb[0].mxu0 %v5785
    %v5892 = vpop.f32.mrb[0].mxu0
    %v5893 = vadd.f32 %v5808, %v5892
    %v5894 = vpop.f32.mrb[0].mxu0
    %v5895 = vpop.f32.mrb[0].mxu0
    %v5896 = vadd.f32 %v5808, %v5895
    %v5897 = vpop.f32.mrb[0].mxu0
    %5898 = vmatprep.mubr.bf16.mxu0 0
    %5899 = vmatmul.mubr.bf16.gmra.mrb[0].mxu0 %v5786
    %v5900 = vpop.f32.mrb[0].mxu0
    %v5901 = vadd.f32 %v5808, %v5900
    %v5902 = vpop.f32.mrb[0].mxu0
    %v5903 = vpop.f32.mrb[0].mxu0
    %v5904 = vadd.f32 %v5808, %v5903
    %v5905 = vpop.f32.mrb[0].mxu0
    %5906 = vdwg.mxu0
    %5907 = vst [vmem:[#allocation13] sm:$0xff] %v5893
    %5908 = vst [vmem:[#allocation13 + $0x8] sm:$0xff] %v5896
    %5909 = vst [vmem:[#allocation13 + $0x10] sm:$0xff] %v5901
    %5910 = vst [vmem:[#allocation13 + $0x18] sm:$0xff] %v5904
    // Predicated region
    $region50: #{tpu_custom_call.1} parent=1 // pred_check
      _
    $region51: #{tpu_custom_call.1} parent=1 // pred_check_branch
      %5912 = sbr.rel (0) target = $region53
    $region52: #{tpu_custom_call.1} parent=1 // pred_region
      %s5914 = ssub.s32 512, 512
      %5915 = vsyncadd [#allocation4], %s5914
      %s5916 = sshll.u32 [#allocation13], 4
      %s5917 = int_to_ptr.vmem [resolvable:$true] %s5916
      %5922 = dma.vmem_to_hbm [thread:$0]  %s5917, 512, %s6, [#allocation4], 128, 128, 8
    $region53: #{tpu_custom_call.1} parent=1 // pred_fallthru
      _
    // Predicated region
    $region54: #{tpu_custom_call.1} parent=1 // pred_check
      _
    $region55: #{tpu_custom_call.1} parent=1 // pred_check_branch
      %5924 = sbr.rel (0) target = $region57
    $region56: #{tpu_custom_call.1} parent=1 // pred_region
      %5925 = dma.done [#allocation4], 512
    $region57: #{tpu_custom_call.1} parent=1 // pred_fallthru
      _
    %5926 = vsyncpa [#allocation3], 1
    %5927 = vsyncpa [#allocation6], 1
    %5928 = vsyncpa [#allocation9], 1
    %5929 = vsyncpa [#allocation12], 1
    %5930 = vsyncpa [#allocation4], 1

</llo_original>
